<compile_context>
chip_gen: v7x
topology: tpu7x:2x2x1
jax: 0.10.0
libtpu: 0.0.40
codegen_flags: <defaults>
</compile_context>

<pallas_src>
import functools

import numpy as np
import jax
import jax.numpy as jnp
from jax.experimental import pallas as pl
from jax.experimental.pallas import tpu as pltpu

LANE = 128
VMEM_LIMIT = 48 * 1024 * 1024
IN_CH, OUT_CLASSES, STATIC_IN, STATIC_OUT = 1, 2, 1, 2


def _rup(x, m):
    return (x + m - 1) // m * m


def _pad_ch(c):
    """Lane padding for a channel dim: multiples of 128 stay, tiny dims pad to 64."""
    if c % 128 == 0:
        return c
    if c <= 64:
        return 64
    return _rup(c, 128)


def _tile_ch(cp):
    """Channel tile: prefer 256-wide (v6e/v7x MXU), else 128, else full (64)."""
    if cp % 256 == 0:
        return 256
    if cp % 128 == 0:
        return 128
    return cp


def _pick_th(h, w):
    """Rows per slab so that M = th*W is ~512 and the slab block stays small."""
    target = max(1, 512 // max(w, 1))
    for cand in range(min(h, target), 0, -1):
        if h % cand == 0:
            return cand
    return 1


# ----------------------------------------------------------------------------
# Pallas kernel: fused 3x3 convolution (9 taps accumulated in-kernel) with
# bias + optional residual(+BN scale/shift) + optional ReLU epilogue.
# lhs block: (1, 3[dx], (th+2)*W, tk) bf16 -- height halo rows inside the slab,
# width taps pre-folded into the dx axis.  Output accumulates in f32 directly
# in the VMEM-resident o_ref block (no scratch).
# ----------------------------------------------------------------------------
def _conv3x3_kernel(x_ref, w_ref, b_ref, *rest, th, W, apply_relu, has_res):
    if has_res:
        res_ref, rs_ref, rb_ref, o_ref = rest
    else:
        (o_ref,) = rest

    k = pl.program_id(2)
    M = th * W

    @pl.when(k == 0)
    def _():
        o_ref[...] = jnp.zeros_like(o_ref)

    acc = jnp.zeros((M, o_ref.shape[-1]), jnp.float32)
    for dy in range(3):
        for dx in range(3):
            lhs = x_ref[0, dx, dy * W:dy * W + M, :]          # (M, tk) bf16
            acc = acc + jnp.dot(lhs, w_ref[dy, dx],
                                preferred_element_type=jnp.float32)
    o_ref[0] += acc

    @pl.when(k == pl.num_programs(2) - 1)
    def _():
        r = o_ref[0] + b_ref[...]                              # (M,tn)+(1,tn)
        if has_res:
            r = r + res_ref[0] * rs_ref[...] + rb_ref[...]     # fused BN shortcut
        if apply_relu:
            r = jnp.maximum(r, 0.0)
        o_ref[0] = r


# ----------------------------------------------------------------------------
# Pallas kernel: plain tiled matmul (1x1 convs) with bias + optional ReLU.
# ----------------------------------------------------------------------------
def _matmul_kernel(x_ref, w_ref, b_ref, o_ref, *, apply_relu):
    k = pl.program_id(2)

    @pl.when(k == 0)
    def _():
        o_ref[...] = jnp.zeros_like(o_ref)

    o_ref[...] += jnp.dot(x_ref[...], w_ref[...],
                          preferred_element_type=jnp.float32)

    @pl.when(k == pl.num_programs(2) - 1)
    def _():
        r = o_ref[...] + b_ref[...]
        if apply_relu:
            r = jnp.maximum(r, 0.0)
        o_ref[...] = r


def conv3x3(x, w, b, *, relu=False, residual=None, res_scale=None,
            res_shift=None):
    """3x3 conv, stride 1, pad 1.  x: (N,H,W,Cin) f32, w: (3,3,Cin,Cout)."""
    N, H, W, Cin = x.shape
    Cout = w.shape[-1]
    Kp, Cp = _pad_ch(Cin), _pad_ch(Cout)
    tk, tn = _tile_ch(Kp), _tile_ch(Cp)
    th = _pick_th(H, W)
    n_t = H // th
    S = N * n_t
    M = th * W
    Lrow = (th + 2) * W

    # Build the width-tap-expanded, height-padded slab tensor in one fused
    # XLA pass (bf16).  xw[n, dx, y, x, c] = x_pad[n, y, x + dx, c].
    xb = x.astype(jnp.bfloat16)
    xp = jnp.pad(xb, ((0, 0), (1, 1), (1, 1), (0, Kp - Cin)))
    xw = jnp.stack([xp[:, :, dx:dx + W, :] for dx in range(3)], axis=1)
    if n_t == 1:
        slabs = xw.reshape(N, 3, Lrow, Kp)
    else:
        rows = jnp.arange(n_t)[:, None] * th + jnp.arange(th + 2)[None, :]
        slabs = xw[:, :, rows]                                # (N,3,n_t,th+2,W,Kp)
        slabs = slabs.transpose(0, 2, 1, 3, 4, 5).reshape(S, 3, Lrow, Kp)

    wp = jnp.pad(w.astype(jnp.bfloat16),
                 ((0, 0), (0, 0), (0, Kp - Cin), (0, Cp - Cout)))
    bp = jnp.pad(b.astype(jnp.float32), (0, Cp - Cout)).reshape(1, Cp)

    has_res = residual is not None
    inputs = [slabs, wp, bp]
    in_specs = [
        pl.BlockSpec((1, 3, Lrow, tk), lambda s, co, k: (s, 0, 0, k)),
        pl.BlockSpec((3, 3, tk, tn), lambda s, co, k: (0, 0, k, co)),
        pl.BlockSpec((1, tn), lambda s, co, k: (0, co)),
    ]
    if has_res:
        resp = jnp.pad(residual.astype(jnp.float32).reshape(S, M, Cout),
                       ((0, 0), (0, 0), (0, Cp - Cout)))
        rs = jnp.pad(res_scale.astype(jnp.float32), (0, Cp - Cout)).reshape(1, Cp)
        rb = jnp.pad(res_shift.astype(jnp.float32), (0, Cp - Cout)).reshape(1, Cp)
        inputs += [resp, rs, rb]
        in_specs += [
            pl.BlockSpec((1, M, tn), lambda s, co, k: (s, 0, co)),
            pl.BlockSpec((1, tn), lambda s, co, k: (0, co)),
            pl.BlockSpec((1, tn), lambda s, co, k: (0, co)),
        ]

    out = pl.pallas_call(
        functools.partial(_conv3x3_kernel, th=th, W=W,
                          apply_relu=relu, has_res=has_res),
        out_shape=jax.ShapeDtypeStruct((S, M, Cp), jnp.float32),
        grid_spec=pltpu.PrefetchScalarGridSpec(
            num_scalar_prefetch=0,
            grid=(S, Cp // tn, Kp // tk),
            in_specs=in_specs,
            out_specs=pl.BlockSpec((1, M, tn), lambda s, co, k: (s, 0, co)),
        ),
        compiler_params=pltpu.CompilerParams(
            dimension_semantics=("parallel", "parallel", "arbitrary"),
            vmem_limit_bytes=VMEM_LIMIT),
    )(*inputs)

    out = out.reshape(N, H, W, Cp)
    return out if Cp == Cout else out[..., :Cout]


def conv1x1(x, w, b, relu=False):
    N, H, W, Cin = x.shape
    Cout = w.shape[-1]
    Kp, Cp = _pad_ch(Cin), _pad_ch(Cout)
    tk, tn = _tile_ch(Kp), _tile_ch(Cp)
    R = N * H * W
    tm = 512 if R % 512 == 0 else R

    xr = jnp.pad(x.astype(jnp.bfloat16).reshape(R, Cin), ((0, 0), (0, Kp - Cin)))
    wp = jnp.pad(w.reshape(Cin, Cout).astype(jnp.bfloat16),
                 ((0, Kp - Cin), (0, Cp - Cout)))
    bp = jnp.pad(b.astype(jnp.float32), (0, Cp - Cout)).reshape(1, Cp)

    out = pl.pallas_call(
        functools.partial(_matmul_kernel, apply_relu=relu),
        out_shape=jax.ShapeDtypeStruct((R, Cp), jnp.float32),
        grid_spec=pltpu.PrefetchScalarGridSpec(
            num_scalar_prefetch=0,
            grid=(R // tm, Cp // tn, Kp // tk),
            in_specs=[
                pl.BlockSpec((tm, tk), lambda i, co, k: (i, k)),
                pl.BlockSpec((tk, tn), lambda i, co, k: (k, co)),
                pl.BlockSpec((1, tn), lambda i, co, k: (0, co)),
            ],
            out_specs=pl.BlockSpec((tm, tn), lambda i, co, k: (i, co)),
        ),
        compiler_params=pltpu.CompilerParams(
            dimension_semantics=("parallel", "parallel", "arbitrary"),
            vmem_limit_bytes=VMEM_LIMIT),
    )(xr, wp, bp)

    out = out.reshape(N, H, W, Cp)
    return out if Cp == Cout else out[..., :Cout]


# ----------------------------------------------------------------------------
# Plain-JAX glue (pooling / resampling / BN statistics).
# ----------------------------------------------------------------------------
def _bn_stats(x, eps=1e-5):
    """Training-mode BatchNorm2d (gamma=1, beta=0) -> per-channel scale/shift."""
    mean = jnp.mean(x, axis=(0, 1, 2))
    var = jnp.mean(jnp.square(x - mean), axis=(0, 1, 2))
    scale = jax.lax.rsqrt(var + eps)
    return scale, -mean * scale


def bn_relu(x, eps=1e-5):
    # Applied right before conv3x3 so XLA fuses it into the slab-build pass.
    scale, shift = _bn_stats(x, eps)
    return jnp.maximum(x * scale + shift, 0.0)


def maxpool2(x):
    N, H, W, C = x.shape
    return jnp.max(x.reshape(N, H // 2, 2, W // 2, 2, C), axis=(2, 4))


def upsample_bilinear_x2_ac(x):
    """nn.Upsample(scale_factor=2, mode='bilinear', align_corners=True)."""
    N, H, W, C = x.shape
    OH, OW = 2 * H, 2 * W

    def axis_coords(out_n, in_n):
        if in_n == 1:
            z = jnp.zeros((out_n,), jnp.int32)
            return z, z, jnp.zeros((out_n,), jnp.float32)
        src = jnp.arange(out_n, dtype=jnp.float32) * (in_n - 1) / (out_n - 1)
        lo = jnp.floor(src).astype(jnp.int32)
        hi = jnp.minimum(lo + 1, in_n - 1)
        return lo, hi, src - lo.astype(jnp.float32)

    hlo, hhi, hf = axis_coords(OH, H)
    wlo, whi, wf = axis_coords(OW, W)
    top = (x[:, hlo] * (1.0 - hf)[None, :, None, None]
           + x[:, hhi] * hf[None, :, None, None])
    out = (top[:, :, wlo] * (1.0 - wf)[None, None, :, None]
           + top[:, :, whi] * wf[None, None, :, None])
    return out


# ----------------------------------------------------------------------------
# Deterministic parameter construction (PyTorch-style kaiming-uniform bounds).
# Weight layout is HWIO (kh, kw, Cin, Cout).
# ----------------------------------------------------------------------------
class KeyGen:
    def __init__(self, key):
        self.key = key

    def __call__(self):
        self.key, k = jax.random.split(self.key)
        return k


def conv_params(kg, cin, cout, k=3, bias=True):
    bound = 1.0 / np.sqrt(cin * k * k)
    w = jax.random.uniform(kg(), (k, k, cin, cout), jnp.float32, -bound, bound)
    b = (jax.random.uniform(kg(), (cout,), jnp.float32, -bound, bound)
         if bias else jnp.zeros((cout,), jnp.float32))
    return {"w": w, "b": b}


def make_double_conv(kg, cin, cout):
    return {"c1": conv_params(kg, cin, cout, 3),
            "c2": conv_params(kg, cout, cout, 3)}


def make_res_block(kg, cin, cout):
    return {"ch": conv_params(kg, cin, cout, 1, bias=False),
            "dc": make_double_conv(kg, cin, cout)}


def make_params(key):
    kg = KeyGen(key)
    unet = {
        "d1": make_res_block(kg, IN_CH, 64),
        "d2": make_res_block(kg, 64, 128),
        "d3": make_res_block(kg, 128, 256),
        "d4": make_res_block(kg, 256, 512),
        "bridge": make_double_conv(kg, 512, 1024),
        "u4": make_res_block(kg, 512 + 1024, 512),
        "u3": make_res_block(kg, 256 + 512, 256),
        "u2": make_res_block(kg, 128 + 256, 128),
        "u1": make_res_block(kg, 64 + 128, 64),
        "last": conv_params(kg, 64, OUT_CLASSES, 1, bias=True),
    }
    cnn = {"c1": conv_params(kg, STATIC_IN, 64, 3),
           "c2": conv_params(kg, 64, 64, 3),
           "c3": conv_params(kg, 64, STATIC_OUT, 3)}
    fuse = conv_params(kg, OUT_CLASSES + STATIC_OUT, OUT_CLASSES, 3)
    return {"unet": unet, "cnn": cnn, "conv": fuse}


# ----------------------------------------------------------------------------
# Model forward (mirrors the PyTorch module structure).
# ----------------------------------------------------------------------------
def double_conv_fwd(p, x, residual=None, res_scale=None, res_shift=None):
    h = bn_relu(x)
    h = conv3x3(h, p["c1"]["w"], p["c1"]["b"])
    h = bn_relu(h)
    # Residual shortcut (with its BatchNorm) is fused into the epilogue of c2.
    return conv3x3(h, p["c2"]["w"], p["c2"]["b"],
                   residual=residual, res_scale=res_scale, res_shift=res_shift)


def res_block_fwd(p, x):
    y = conv1x1(x, p["ch"]["w"], p["ch"]["b"])
    s, t = _bn_stats(y)
    out = double_conv_fwd(p["dc"], x, residual=y, res_scale=s, res_shift=t)
    return maxpool2(out), out


def res_up_block_fwd(p, down, skip):
    x = jnp.concatenate([upsample_bilinear_x2_ac(down), skip], axis=-1)
    y = conv1x1(x, p["ch"]["w"], p["ch"]["b"])
    s, t = _bn_stats(y)
    return double_conv_fwd(p["dc"], x, residual=y, res_scale=s, res_shift=t)


def deep_res_unet_fwd(p, x):
    x, s1 = res_block_fwd(p["d1"], x)
    x, s2 = res_block_fwd(p["d2"], x)
    x, s3 = res_block_fwd(p["d3"], x)
    x, s4 = res_block_fwd(p["d4"], x)
    x = double_conv_fwd(p["bridge"], x)
    x = res_up_block_fwd(p["u4"], x, s4)
    x = res_up_block_fwd(p["u3"], x, s3)
    x = res_up_block_fwd(p["u2"], x, s2)
    x = res_up_block_fwd(p["u1"], x, s1)
    return conv1x1(x, p["last"]["w"], p["last"]["b"])


def cnn_fwd(p, x):
    x = conv3x3(x, p["c1"]["w"], p["c1"]["b"], relu=True)
    x = conv3x3(x, p["c2"]["w"], p["c2"]["b"], relu=True)
    x = conv3x3(x, p["c3"]["w"], p["c3"]["b"], relu=True)
    return x


def fusion_forward(params, x_nchw):
    # x_nchw: (N, IN_CH + STATIC_IN, H, W) -- PyTorch layout.
    x = jnp.transpose(x_nchw, (0, 2, 3, 1)).astype(jnp.float32)   # -> NHWC
    x1 = deep_res_unet_fwd(params["unet"], x[..., :IN_CH])
    x2 = cnn_fwd(params["cnn"], x[..., IN_CH:])
    h = jnp.concatenate([x1, x2], axis=-1)
    h = conv3x3(h, params["conv"]["w"], params["conv"]["b"], relu=True)
    return jnp.transpose(h, (0, 3, 1, 2))                          # -> NCHW


if __name__ == "__main__":
    key = jax.random.PRNGKey(0)
    pkey, xkey = jax.random.split(key)
    params = make_params(pkey)
    x = jax.random.normal(xkey, (2, IN_CH + STATIC_IN, 16, 16), jnp.float32)

    fwd = jax.jit(fusion_forward)
    out = jax.block_until_ready(fwd(params, x))

    assert out.shape == (2, OUT_CLASSES, 16, 16), out.shape
    assert bool(jnp.all(jnp.isfinite(out)))
    assert bool(jnp.all(out >= 0.0))   # final ReLU
    print("KERNEL_OK")
</pallas_src>

<mosaic_0001>
module attributes {stable_mosaic.version = 11 : i64} {
  func.func @_conv3x3_kernel(%arg0: i32, %arg1: i32, %arg2: i32, %arg3: memref<1x3x288x64xbf16, #tpu.memory_space<vmem>>, %arg4: memref<3x3x64x64xbf16, #tpu.memory_space<vmem>>, %arg5: memref<1x64xf32, #tpu.memory_space<vmem>>, %arg6: memref<1x256x64xf32, #tpu.memory_space<vmem>>) attributes {dimension_semantics = [#tpu.dimension_semantics<parallel>, #tpu.dimension_semantics<parallel>, #tpu.dimension_semantics<arbitrary>], iteration_bounds = array<i64: 2, 1, 1>, scalar_prefetch = 0 : i64, scratch_operands = 0 : i64, tpu.core_type = #tpu.core_type<tc>, window_params = [{transform_indices = @transform_0, window_bounds = array<i64: 1, 3, 288, 64>}, {transform_indices = @transform_1, window_bounds = array<i64: 3, 3, 64, 64>}, {transform_indices = @transform_2, window_bounds = array<i64: 1, 64>}, {transform_indices = @transform_3, window_bounds = array<i64: 1, 256, 64>}]} {
    %c0_i32 = arith.constant 0 : i32
    %0 = arith.cmpi eq, %arg2, %c0_i32 : i32
    %1 = arith.extui %0 : i1 to i32
    %c0_i32_0 = arith.constant 0 : i32
    %2 = arith.cmpi ne, %1, %c0_i32_0 : i32
    scf.if %2 {
      %cst_85 = arith.constant 0.000000e+00 : f32
      %67 = vector.broadcast %cst_85 : f32 to vector<1x256x64xf32>
      %c0_86 = arith.constant 0 : index
      %c0_87 = arith.constant 0 : index
      %c0_88 = arith.constant 0 : index
      %68 = vector.load %arg6[%c0_86, %c0_87, %c0_88] : memref<1x256x64xf32, #tpu.memory_space<vmem>>, vector<1x256x64xf32>
      tpu.vector_store %arg6[%c0_86, %c0_87, %c0_88], %67 {strides = array<i32>} : memref<1x256x64xf32, #tpu.memory_space<vmem>>, vector<1x256x64xf32>,
    } else {
    }
    %cst = arith.constant 0.000000e+00 : f32
    %3 = vector.broadcast %cst : f32 to vector<256x64xf32>
    %c0 = arith.constant 0 : index
    %c0_1 = arith.constant 0 : index
    %c0_2 = arith.constant 0 : index
    %c0_3 = arith.constant 0 : index
    %4 = vector.load %arg3[%c0, %c0_1, %c0_2, %c0_3] : memref<1x3x288x64xbf16, #tpu.memory_space<vmem>>, vector<1x1x256x64xbf16>
    %5 = vector.shape_cast %4 : vector<1x1x256x64xbf16> to vector<256x64xbf16>
    %c0_4 = arith.constant 0 : index
    %c0_5 = arith.constant 0 : index
    %c0_6 = arith.constant 0 : index
    %c0_7 = arith.constant 0 : index
    %6 = vector.load %arg4[%c0_4, %c0_5, %c0_6, %c0_7] : memref<3x3x64x64xbf16, #tpu.memory_space<vmem>>, vector<1x1x64x64xbf16>
    %7 = vector.shape_cast %6 : vector<1x1x64x64xbf16> to vector<64x64xbf16>
    %cst_8 = arith.constant dense<0.000000e+00> : vector<256x64xf32>
    %8 = tpu.matmul %5, %7, %cst_8 {dimension_numbers = #tpu.dot_dimension_numbers<[1], [0], [0], [1], [0, 0, 1, 1], [], []>} : vector<256x64xbf16>, vector<64x64xbf16>, vector<256x64xf32> -> vector<256x64xf32>
    %9 = arith.addf %3, %8 : vector<256x64xf32>
    %c0_9 = arith.constant 0 : index
    %c1 = arith.constant 1 : index
    %c0_10 = arith.constant 0 : index
    %c0_11 = arith.constant 0 : index
    %10 = vector.load %arg3[%c0_9, %c1, %c0_10, %c0_11] : memref<1x3x288x64xbf16, #tpu.memory_space<vmem>>, vector<1x1x256x64xbf16>
    %11 = vector.shape_cast %10 : vector<1x1x256x64xbf16> to vector<256x64xbf16>
    %c0_12 = arith.constant 0 : index
    %c1_13 = arith.constant 1 : index
    %c0_14 = arith.constant 0 : index
    %c0_15 = arith.constant 0 : index
    %12 = vector.load %arg4[%c0_12, %c1_13, %c0_14, %c0_15] : memref<3x3x64x64xbf16, #tpu.memory_space<vmem>>, vector<1x1x64x64xbf16>
    %13 = vector.shape_cast %12 : vector<1x1x64x64xbf16> to vector<64x64xbf16>
    %cst_16 = arith.constant dense<0.000000e+00> : vector<256x64xf32>
    %14 = tpu.matmul %11, %13, %cst_16 {dimension_numbers = #tpu.dot_dimension_numbers<[1], [0], [0], [1], [0, 0, 1, 1], [], []>} : vector<256x64xbf16>, vector<64x64xbf16>, vector<256x64xf32> -> vector<256x64xf32>
    %15 = arith.addf %9, %14 : vector<256x64xf32>
    %c0_17 = arith.constant 0 : index
    %c2 = arith.constant 2 : index
    %c0_18 = arith.constant 0 : index
    %c0_19 = arith.constant 0 : index
    %16 = vector.load %arg3[%c0_17, %c2, %c0_18, %c0_19] : memref<1x3x288x64xbf16, #tpu.memory_space<vmem>>, vector<1x1x256x64xbf16>
    %17 = vector.shape_cast %16 : vector<1x1x256x64xbf16> to vector<256x64xbf16>
    %c0_20 = arith.constant 0 : index
    %c2_21 = arith.constant 2 : index
    %c0_22 = arith.constant 0 : index
    %c0_23 = arith.constant 0 : index
    %18 = vector.load %arg4[%c0_20, %c2_21, %c0_22, %c0_23] : memref<3x3x64x64xbf16, #tpu.memory_space<vmem>>, vector<1x1x64x64xbf16>
    %19 = vector.shape_cast %18 : vector<1x1x64x64xbf16> to vector<64x64xbf16>
    %cst_24 = arith.constant dense<0.000000e+00> : vector<256x64xf32>
    %20 = tpu.matmul %17, %19, %cst_24 {dimension_numbers = #tpu.dot_dimension_numbers<[1], [0], [0], [1], [0, 0, 1, 1], [], []>} : vector<256x64xbf16>, vector<64x64xbf16>, vector<256x64xf32> -> vector<256x64xf32>
    %21 = arith.addf %15, %20 : vector<256x64xf32>
    %c0_25 = arith.constant 0 : index
    %c0_26 = arith.constant 0 : index
    %c16 = arith.constant 16 : index
    %c0_27 = arith.constant 0 : index
    %22 = vector.load %arg3[%c0_25, %c0_26, %c16, %c0_27] : memref<1x3x288x64xbf16, #tpu.memory_space<vmem>>, vector<1x1x256x64xbf16>
    %23 = vector.shape_cast %22 : vector<1x1x256x64xbf16> to vector<256x64xbf16>
    %c1_28 = arith.constant 1 : index
    %c0_29 = arith.constant 0 : index
    %c0_30 = arith.constant 0 : index
    %c0_31 = arith.constant 0 : index
    %24 = vector.load %arg4[%c1_28, %c0_29, %c0_30, %c0_31] : memref<3x3x64x64xbf16, #tpu.memory_space<vmem>>, vector<1x1x64x64xbf16>
    %25 = vector.shape_cast %24 : vector<1x1x64x64xbf16> to vector<64x64xbf16>
    %cst_32 = arith.constant dense<0.000000e+00> : vector<256x64xf32>
    %26 = tpu.matmul %23, %25, %cst_32 {dimension_numbers = #tpu.dot_dimension_numbers<[1], [0], [0], [1], [0, 0, 1, 1], [], []>} : vector<256x64xbf16>, vector<64x64xbf16>, vector<256x64xf32> -> vector<256x64xf32>
    %27 = arith.addf %21, %26 : vector<256x64xf32>
    %c0_33 = arith.constant 0 : index
    %c1_34 = arith.constant 1 : index
    %c16_35 = arith.constant 16 : index
    %c0_36 = arith.constant 0 : index
    %28 = vector.load %arg3[%c0_33, %c1_34, %c16_35, %c0_36] : memref<1x3x288x64xbf16, #tpu.memory_space<vmem>>, vector<1x1x256x64xbf16>
    %29 = vector.shape_cast %28 : vector<1x1x256x64xbf16> to vector<256x64xbf16>
    %c1_37 = arith.constant 1 : index
    %c1_38 = arith.constant 1 : index
    %c0_39 = arith.constant 0 : index
    %c0_40 = arith.constant 0 : index
    %30 = vector.load %arg4[%c1_37, %c1_38, %c0_39, %c0_40] : memref<3x3x64x64xbf16, #tpu.memory_space<vmem>>, vector<1x1x64x64xbf16>
    %31 = vector.shape_cast %30 : vector<1x1x64x64xbf16> to vector<64x64xbf16>
    %cst_41 = arith.constant dense<0.000000e+00> : vector<256x64xf32>
    %32 = tpu.matmul %29, %31, %cst_41 {dimension_numbers = #tpu.dot_dimension_numbers<[1], [0], [0], [1], [0, 0, 1, 1], [], []>} : vector<256x64xbf16>, vector<64x64xbf16>, vector<256x64xf32> -> vector<256x64xf32>
    %33 = arith.addf %27, %32 : vector<256x64xf32>
    %c0_42 = arith.constant 0 : index
    %c2_43 = arith.constant 2 : index
    %c16_44 = arith.constant 16 : index
    %c0_45 = arith.constant 0 : index
    %34 = vector.load %arg3[%c0_42, %c2_43, %c16_44, %c0_45] : memref<1x3x288x64xbf16, #tpu.memory_space<vmem>>, vector<1x1x256x64xbf16>
    %35 = vector.shape_cast %34 : vector<1x1x256x64xbf16> to vector<256x64xbf16>
    %c1_46 = arith.constant 1 : index
    %c2_47 = arith.constant 2 : index
    %c0_48 = arith.constant 0 : index
    %c0_49 = arith.constant 0 : index
    %36 = vector.load %arg4[%c1_46, %c2_47, %c0_48, %c0_49] : memref<3x3x64x64xbf16, #tpu.memory_space<vmem>>, vector<1x1x64x64xbf16>
    %37 = vector.shape_cast %36 : vector<1x1x64x64xbf16> to vector<64x64xbf16>
    %cst_50 = arith.constant dense<0.000000e+00> : vector<256x64xf32>
    %38 = tpu.matmul %35, %37, %cst_50 {dimension_numbers = #tpu.dot_dimension_numbers<[1], [0], [0], [1], [0, 0, 1, 1], [], []>} : vector<256x64xbf16>, vector<64x64xbf16>, vector<256x64xf32> -> vector<256x64xf32>
    %39 = arith.addf %33, %38 : vector<256x64xf32>
    %c0_51 = arith.constant 0 : index
    %c0_52 = arith.constant 0 : index
    %c32 = arith.constant 32 : index
    %c0_53 = arith.constant 0 : index
    %40 = vector.load %arg3[%c0_51, %c0_52, %c32, %c0_53] : memref<1x3x288x64xbf16, #tpu.memory_space<vmem>>, vector<1x1x256x64xbf16>
    %41 = vector.shape_cast %40 : vector<1x1x256x64xbf16> to vector<256x64xbf16>
    %c2_54 = arith.constant 2 : index
    %c0_55 = arith.constant 0 : index
    %c0_56 = arith.constant 0 : index
    %c0_57 = arith.constant 0 : index
    %42 = vector.load %arg4[%c2_54, %c0_55, %c0_56, %c0_57] : memref<3x3x64x64xbf16, #tpu.memory_space<vmem>>, vector<1x1x64x64xbf16>
    %43 = vector.shape_cast %42 : vector<1x1x64x64xbf16> to vector<64x64xbf16>
    %cst_58 = arith.constant dense<0.000000e+00> : vector<256x64xf32>
    %44 = tpu.matmul %41, %43, %cst_58 {dimension_numbers = #tpu.dot_dimension_numbers<[1], [0], [0], [1], [0, 0, 1, 1], [], []>} : vector<256x64xbf16>, vector<64x64xbf16>, vector<256x64xf32> -> vector<256x64xf32>
    %45 = arith.addf %39, %44 : vector<256x64xf32>
    %c0_59 = arith.constant 0 : index
    %c1_60 = arith.constant 1 : index
    %c32_61 = arith.constant 32 : index
    %c0_62 = arith.constant 0 : index
    %46 = vector.load %arg3[%c0_59, %c1_60, %c32_61, %c0_62] : memref<1x3x288x64xbf16, #tpu.memory_space<vmem>>, vector<1x1x256x64xbf16>
    %47 = vector.shape_cast %46 : vector<1x1x256x64xbf16> to vector<256x64xbf16>
    %c2_63 = arith.constant 2 : index
    %c1_64 = arith.constant 1 : index
    %c0_65 = arith.constant 0 : index
    %c0_66 = arith.constant 0 : index
    %48 = vector.load %arg4[%c2_63, %c1_64, %c0_65, %c0_66] : memref<3x3x64x64xbf16, #tpu.memory_space<vmem>>, vector<1x1x64x64xbf16>
    %49 = vector.shape_cast %48 : vector<1x1x64x64xbf16> to vector<64x64xbf16>
    %cst_67 = arith.constant dense<0.000000e+00> : vector<256x64xf32>
    %50 = tpu.matmul %47, %49, %cst_67 {dimension_numbers = #tpu.dot_dimension_numbers<[1], [0], [0], [1], [0, 0, 1, 1], [], []>} : vector<256x64xbf16>, vector<64x64xbf16>, vector<256x64xf32> -> vector<256x64xf32>
    %51 = arith.addf %45, %50 : vector<256x64xf32>
    %c0_68 = arith.constant 0 : index
    %c2_69 = arith.constant 2 : index
    %c32_70 = arith.constant 32 : index
    %c0_71 = arith.constant 0 : index
    %52 = vector.load %arg3[%c0_68, %c2_69, %c32_70, %c0_71] : memref<1x3x288x64xbf16, #tpu.memory_space<vmem>>, vector<1x1x256x64xbf16>
    %53 = vector.shape_cast %52 : vector<1x1x256x64xbf16> to vector<256x64xbf16>
    %c2_72 = arith.constant 2 : index
    %c2_73 = arith.constant 2 : index
    %c0_74 = arith.constant 0 : index
    %c0_75 = arith.constant 0 : index
    %54 = vector.load %arg4[%c2_72, %c2_73, %c0_74, %c0_75] : memref<3x3x64x64xbf16, #tpu.memory_space<vmem>>, vector<1x1x64x64xbf16>
    %55 = vector.shape_cast %54 : vector<1x1x64x64xbf16> to vector<64x64xbf16>
    %cst_76 = arith.constant dense<0.000000e+00> : vector<256x64xf32>
    %56 = tpu.matmul %53, %55, %cst_76 {dimension_numbers = #tpu.dot_dimension_numbers<[1], [0], [0], [1], [0, 0, 1, 1], [], []>} : vector<256x64xbf16>, vector<64x64xbf16>, vector<256x64xf32> -> vector<256x64xf32>
    %57 = arith.addf %51, %56 : vector<256x64xf32>
    %c0_77 = arith.constant 0 : index
    %c0_78 = arith.constant 0 : index
    %c0_79 = arith.constant 0 : index
    %58 = vector.load %arg6[%c0_77, %c0_78, %c0_79] : memref<1x256x64xf32, #tpu.memory_space<vmem>>, vector<1x256x64xf32>
    %59 = vector.shape_cast %58 : vector<1x256x64xf32> to vector<256x64xf32>
    %60 = arith.addf %59, %57 : vector<256x64xf32>
    %c0_80 = arith.constant 0 : index
    %c0_81 = arith.constant 0 : index
    %c0_82 = arith.constant 0 : index
    %61 = vector.load %arg6[%c0_80, %c0_81, %c0_82] : memref<1x256x64xf32, #tpu.memory_space<vmem>>, vector<1x256x64xf32>
    %62 = vector.shape_cast %61 : vector<1x256x64xf32> to vector<256x64xf32>
    %63 = vector.shape_cast %60 : vector<256x64xf32> to vector<1x256x64xf32>
    tpu.vector_store %arg6[%c0_80, %c0_81, %c0_82], %63 {strides = array<i32>} : memref<1x256x64xf32, #tpu.memory_space<vmem>>, vector<1x256x64xf32>,
    %c0_i32_83 = arith.constant 0 : i32
    %64 = arith.cmpi eq, %arg2, %c0_i32_83 : i32
    %65 = arith.extui %64 : i1 to i32
    %c0_i32_84 = arith.constant 0 : i32
    %66 = arith.cmpi ne, %65, %c0_i32_84 : i32
    scf.if %66 {
      %c0_85 = arith.constant 0 : index
      %c0_86 = arith.constant 0 : index
      %c0_87 = arith.constant 0 : index
      %67 = vector.load %arg6[%c0_85, %c0_86, %c0_87] : memref<1x256x64xf32, #tpu.memory_space<vmem>>, vector<1x256x64xf32>
      %68 = vector.shape_cast %67 : vector<1x256x64xf32> to vector<256x64xf32>
      %c0_88 = arith.constant 0 : index
      %c0_89 = arith.constant 0 : index
      %69 = vector.load %arg5[%c0_88, %c0_89] : memref<1x64xf32, #tpu.memory_space<vmem>>, vector<1x64xf32>
      %70 = vector.broadcast %69 : vector<1x64xf32> to vector<256x64xf32>
      %71 = arith.addf %68, %70 : vector<256x64xf32>
      %c0_90 = arith.constant 0 : index
      %c0_91 = arith.constant 0 : index
      %c0_92 = arith.constant 0 : index
      %72 = vector.load %arg6[%c0_90, %c0_91, %c0_92] : memref<1x256x64xf32, #tpu.memory_space<vmem>>, vector<1x256x64xf32>
      %73 = vector.shape_cast %72 : vector<1x256x64xf32> to vector<256x64xf32>
      %74 = vector.shape_cast %71 : vector<256x64xf32> to vector<1x256x64xf32>
      tpu.vector_store %arg6[%c0_90, %c0_91, %c0_92], %74 {strides = array<i32>} : memref<1x256x64xf32, #tpu.memory_space<vmem>>, vector<1x256x64xf32>,
    } else {
    }
    return
  }
  func.func @transform_0(%arg0: i32, %arg1: i32, %arg2: i32) -> (i32, i32, i32, i32) {
    %c0_i32 = arith.constant 0 : i32
    %c0_i32_0 = arith.constant 0 : i32
    %c0_i32_1 = arith.constant 0 : i32
    return %arg0, %c0_i32, %c0_i32_0, %arg2 : i32, i32, i32, i32
  }
  func.func @transform_1(%arg0: i32, %arg1: i32, %arg2: i32) -> (i32, i32, i32, i32) {
    %c0_i32 = arith.constant 0 : i32
    %c0_i32_0 = arith.constant 0 : i32
    %c0_i32_1 = arith.constant 0 : i32
    return %c0_i32, %c0_i32_0, %arg2, %arg1 : i32, i32, i32, i32
  }
  func.func @transform_2(%arg0: i32, %arg1: i32, %arg2: i32) -> (i32, i32) {
    %c0_i32 = arith.constant 0 : i32
    %c0_i32_0 = arith.constant 0 : i32
    return %c0_i32, %arg1 : i32, i32
  }
  func.func @transform_3(%arg0: i32, %arg1: i32, %arg2: i32) -> (i32, i32, i32) {
    %c0_i32 = arith.constant 0 : i32
    %c0_i32_0 = arith.constant 0 : i32
    return %arg0, %c0_i32, %arg1 : i32, i32, i32
  }
}

module attributes {stable_mosaic.version = 11 : i64} {
  func.func @_matmul_kernel(%arg0: i32, %arg1: i32, %arg2: i32, %arg3: memref<512x64xbf16, #tpu.memory_space<vmem>>, %arg4: memref<64x64xbf16, #tpu.memory_space<vmem>>, %arg5: memref<1x64xf32, #tpu.memory_space<vmem>>, %arg6: memref<512x64xf32, #tpu.memory_space<vmem>>) attributes {dimension_semantics = [#tpu.dimension_semantics<parallel>, #tpu.dimension_semantics<parallel>, #tpu.dimension_semantics<arbitrary>], iteration_bounds = array<i64: 1, 1, 1>, scalar_prefetch = 0 : i64, scratch_operands = 0 : i64, tpu.core_type = #tpu.core_type<tc>, window_params = [{transform_indices = @transform_0, window_bounds = array<i64: 512, 64>}, {transform_indices = @transform_1, window_bounds = array<i64: 64, 64>}, {transform_indices = @transform_2, window_bounds = array<i64: 1, 64>}, {transform_indices = @transform_3, window_bounds = array<i64: 512, 64>}]} {
    %c0_i32 = arith.constant 0 : i32
    %0 = arith.cmpi eq, %arg2, %c0_i32 : i32
    %1 = arith.extui %0 : i1 to i32
    %c0_i32_0 = arith.constant 0 : i32
    %2 = arith.cmpi ne, %1, %c0_i32_0 : i32
    scf.if %2 {
      %cst_10 = arith.constant 0.000000e+00 : f32
      %12 = vector.broadcast %cst_10 : f32 to vector<512x64xf32>
      %c0_11 = arith.constant 0 : index
      %c0_12 = arith.constant 0 : index
      %13 = vector.load %arg6[%c0_11, %c0_12] : memref<512x64xf32, #tpu.memory_space<vmem>>, vector<512x64xf32>
      tpu.vector_store %arg6[%c0_11, %c0_12], %12 {strides = array<i32>} : memref<512x64xf32, #tpu.memory_space<vmem>>, vector<512x64xf32>,
    } else {
    }
    %c0 = arith.constant 0 : index
    %c0_1 = arith.constant 0 : index
    %3 = vector.load %arg6[%c0, %c0_1] : memref<512x64xf32, #tpu.memory_space<vmem>>, vector<512x64xf32>
    %c0_2 = arith.constant 0 : index
    %c0_3 = arith.constant 0 : index
    %4 = vector.load %arg3[%c0_2, %c0_3] : memref<512x64xbf16, #tpu.memory_space<vmem>>, vector<512x64xbf16>
    %c0_4 = arith.constant 0 : index
    %c0_5 = arith.constant 0 : index
    %5 = vector.load %arg4[%c0_4, %c0_5] : memref<64x64xbf16, #tpu.memory_space<vmem>>, vector<64x64xbf16>
    %cst = arith.constant dense<0.000000e+00> : vector<512x64xf32>
    %6 = tpu.matmul %4, %5, %cst {dimension_numbers = #tpu.dot_dimension_numbers<[1], [0], [0], [1], [0, 0, 1, 1], [], []>} : vector<512x64xbf16>, vector<64x64xbf16>, vector<512x64xf32> -> vector<512x64xf32>
    %7 = arith.addf %3, %6 : vector<512x64xf32>
    %c0_6 = arith.constant 0 : index
    %c0_7 = arith.constant 0 : index
    %8 = vector.load %arg6[%c0_6, %c0_7] : memref<512x64xf32, #tpu.memory_space<vmem>>, vector<512x64xf32>
    tpu.vector_store %arg6[%c0_6, %c0_7], %7 {strides = array<i32>} : memref<512x64xf32, #tpu.memory_space<vmem>>, vector<512x64xf32>,
    %c0_i32_8 = arith.constant 0 : i32
    %9 = arith.cmpi eq, %arg2, %c0_i32_8 : i32
    %10 = arith.extui %9 : i1 to i32
    %c0_i32_9 = arith.constant 0 : i32
    %11 = arith.cmpi ne, %10, %c0_i32_9 : i32
    scf.if %11 {
      %c0_10 = arith.constant 0 : index
      %c0_11 = arith.constant 0 : index
      %12 = vector.load %arg6[%c0_10, %c0_11] : memref<512x64xf32, #tpu.memory_space<vmem>>, vector<512x64xf32>
      %c0_12 = arith.constant 0 : index
      %c0_13 = arith.constant 0 : index
      %13 = vector.load %arg5[%c0_12, %c0_13] : memref<1x64xf32, #tpu.memory_space<vmem>>, vector<1x64xf32>
      %14 = vector.broadcast %13 : vector<1x64xf32> to vector<512x64xf32>
      %15 = arith.addf %12, %14 : vector<512x64xf32>
      %c0_14 = arith.constant 0 : index
      %c0_15 = arith.constant 0 : index
      %16 = vector.load %arg6[%c0_14, %c0_15] : memref<512x64xf32, #tpu.memory_space<vmem>>, vector<512x64xf32>
      tpu.vector_store %arg6[%c0_14, %c0_15], %15 {strides = array<i32>} : memref<512x64xf32, #tpu.memory_space<vmem>>, vector<512x64xf32>,
    } else {
    }
    return
  }
  func.func @transform_0(%arg0: i32, %arg1: i32, %arg2: i32) -> (i32, i32) {
    %c0_i32 = arith.constant 0 : i32
    return %arg0, %arg2 : i32, i32
  }
  func.func @transform_1(%arg0: i32, %arg1: i32, %arg2: i32) -> (i32, i32) {
    %c0_i32 = arith.constant 0 : i32
    return %arg2, %arg1 : i32, i32
  }
  func.func @transform_2(%arg0: i32, %arg1: i32, %arg2: i32) -> (i32, i32) {
    %c0_i32 = arith.constant 0 : i32
    %c0_i32_0 = arith.constant 0 : i32
    return %c0_i32, %arg1 : i32, i32
  }
  func.func @transform_3(%arg0: i32, %arg1: i32, %arg2: i32) -> (i32, i32) {
    %c0_i32 = arith.constant 0 : i32
    return %arg0, %arg1 : i32, i32
  }
}

module attributes {stable_mosaic.version = 11 : i64} {
  func.func @_conv3x3_kernel(%arg0: i32, %arg1: i32, %arg2: i32, %arg3: memref<1x3x288x64xbf16, #tpu.memory_space<vmem>>, %arg4: memref<3x3x64x64xbf16, #tpu.memory_space<vmem>>, %arg5: memref<1x64xf32, #tpu.memory_space<vmem>>, %arg6: memref<1x256x64xf32, #tpu.memory_space<vmem>>, %arg7: memref<1x64xf32, #tpu.memory_space<vmem>>, %arg8: memref<1x64xf32, #tpu.memory_space<vmem>>, %arg9: memref<1x256x64xf32, #tpu.memory_space<vmem>>) attributes {dimension_semantics = [#tpu.dimension_semantics<parallel>, #tpu.dimension_semantics<parallel>, #tpu.dimension_semantics<arbitrary>], iteration_bounds = array<i64: 2, 1, 1>, scalar_prefetch = 0 : i64, scratch_operands = 0 : i64, tpu.core_type = #tpu.core_type<tc>, window_params = [{transform_indices = @transform_0, window_bounds = array<i64: 1, 3, 288, 64>}, {transform_indices = @transform_1, window_bounds = array<i64: 3, 3, 64, 64>}, {transform_indices = @transform_2, window_bounds = array<i64: 1, 64>}, {transform_indices = @transform_3, window_bounds = array<i64: 1, 256, 64>}, {transform_indices = @transform_4, window_bounds = array<i64: 1, 64>}, {transform_indices = @transform_5, window_bounds = array<i64: 1, 64>}, {transform_indices = @transform_6, window_bounds = array<i64: 1, 256, 64>}]} {
    %c0_i32 = arith.constant 0 : i32
    %0 = arith.cmpi eq, %arg2, %c0_i32 : i32
    %1 = arith.extui %0 : i1 to i32
    %c0_i32_0 = arith.constant 0 : i32
    %2 = arith.cmpi ne, %1, %c0_i32_0 : i32
    scf.if %2 {
      %cst_85 = arith.constant 0.000000e+00 : f32
      %67 = vector.broadcast %cst_85 : f32 to vector<1x256x64xf32>
      %c0_86 = arith.constant 0 : index
      %c0_87 = arith.constant 0 : index
      %c0_88 = arith.constant 0 : index
      %68 = vector.load %arg9[%c0_86, %c0_87, %c0_88] : memref<1x256x64xf32, #tpu.memory_space<vmem>>, vector<1x256x64xf32>
      tpu.vector_store %arg9[%c0_86, %c0_87, %c0_88], %67 {strides = array<i32>} : memref<1x256x64xf32, #tpu.memory_space<vmem>>, vector<1x256x64xf32>,
    } else {
    }
    %cst = arith.constant 0.000000e+00 : f32
    %3 = vector.broadcast %cst : f32 to vector<256x64xf32>
    %c0 = arith.constant 0 : index
    %c0_1 = arith.constant 0 : index
    %c0_2 = arith.constant 0 : index
    %c0_3 = arith.constant 0 : index
    %4 = vector.load %arg3[%c0, %c0_1, %c0_2, %c0_3] : memref<1x3x288x64xbf16, #tpu.memory_space<vmem>>, vector<1x1x256x64xbf16>
    %5 = vector.shape_cast %4 : vector<1x1x256x64xbf16> to vector<256x64xbf16>
    %c0_4 = arith.constant 0 : index
    %c0_5 = arith.constant 0 : index
    %c0_6 = arith.constant 0 : index
    %c0_7 = arith.constant 0 : index
    %6 = vector.load %arg4[%c0_4, %c0_5, %c0_6, %c0_7] : memref<3x3x64x64xbf16, #tpu.memory_space<vmem>>, vector<1x1x64x64xbf16>
    %7 = vector.shape_cast %6 : vector<1x1x64x64xbf16> to vector<64x64xbf16>
    %cst_8 = arith.constant dense<0.000000e+00> : vector<256x64xf32>
    %8 = tpu.matmul %5, %7, %cst_8 {dimension_numbers = #tpu.dot_dimension_numbers<[1], [0], [0], [1], [0, 0, 1, 1], [], []>} : vector<256x64xbf16>, vector<64x64xbf16>, vector<256x64xf32> -> vector<256x64xf32>
    %9 = arith.addf %3, %8 : vector<256x64xf32>
    %c0_9 = arith.constant 0 : index
    %c1 = arith.constant 1 : index
    %c0_10 = arith.constant 0 : index
    %c0_11 = arith.constant 0 : index
    %10 = vector.load %arg3[%c0_9, %c1, %c0_10, %c0_11] : memref<1x3x288x64xbf16, #tpu.memory_space<vmem>>, vector<1x1x256x64xbf16>
    %11 = vector.shape_cast %10 : vector<1x1x256x64xbf16> to vector<256x64xbf16>
    %c0_12 = arith.constant 0 : index
    %c1_13 = arith.constant 1 : index
    %c0_14 = arith.constant 0 : index
    %c0_15 = arith.constant 0 : index
    %12 = vector.load %arg4[%c0_12, %c1_13, %c0_14, %c0_15] : memref<3x3x64x64xbf16, #tpu.memory_space<vmem>>, vector<1x1x64x64xbf16>
    %13 = vector.shape_cast %12 : vector<1x1x64x64xbf16> to vector<64x64xbf16>
    %cst_16 = arith.constant dense<0.000000e+00> : vector<256x64xf32>
    %14 = tpu.matmul %11, %13, %cst_16 {dimension_numbers = #tpu.dot_dimension_numbers<[1], [0], [0], [1], [0, 0, 1, 1], [], []>} : vector<256x64xbf16>, vector<64x64xbf16>, vector<256x64xf32> -> vector<256x64xf32>
    %15 = arith.addf %9, %14 : vector<256x64xf32>
    %c0_17 = arith.constant 0 : index
    %c2 = arith.constant 2 : index
    %c0_18 = arith.constant 0 : index
    %c0_19 = arith.constant 0 : index
    %16 = vector.load %arg3[%c0_17, %c2, %c0_18, %c0_19] : memref<1x3x288x64xbf16, #tpu.memory_space<vmem>>, vector<1x1x256x64xbf16>
    %17 = vector.shape_cast %16 : vector<1x1x256x64xbf16> to vector<256x64xbf16>
    %c0_20 = arith.constant 0 : index
    %c2_21 = arith.constant 2 : index
    %c0_22 = arith.constant 0 : index
    %c0_23 = arith.constant 0 : index
    %18 = vector.load %arg4[%c0_20, %c2_21, %c0_22, %c0_23] : memref<3x3x64x64xbf16, #tpu.memory_space<vmem>>, vector<1x1x64x64xbf16>
    %19 = vector.shape_cast %18 : vector<1x1x64x64xbf16> to vector<64x64xbf16>
    %cst_24 = arith.constant dense<0.000000e+00> : vector<256x64xf32>
    %20 = tpu.matmul %17, %19, %cst_24 {dimension_numbers = #tpu.dot_dimension_numbers<[1], [0], [0], [1], [0, 0, 1, 1], [], []>} : vector<256x64xbf16>, vector<64x64xbf16>, vector<256x64xf32> -> vector<256x64xf32>
    %21 = arith.addf %15, %20 : vector<256x64xf32>
    %c0_25 = arith.constant 0 : index
    %c0_26 = arith.constant 0 : index
    %c16 = arith.constant 16 : index
    %c0_27 = arith.constant 0 : index
    %22 = vector.load %arg3[%c0_25, %c0_26, %c16, %c0_27] : memref<1x3x288x64xbf16, #tpu.memory_space<vmem>>, vector<1x1x256x64xbf16>
    %23 = vector.shape_cast %22 : vector<1x1x256x64xbf16> to vector<256x64xbf16>
    %c1_28 = arith.constant 1 : index
    %c0_29 = arith.constant 0 : index
    %c0_30 = arith.constant 0 : index
    %c0_31 = arith.constant 0 : index
    %24 = vector.load %arg4[%c1_28, %c0_29, %c0_30, %c0_31] : memref<3x3x64x64xbf16, #tpu.memory_space<vmem>>, vector<1x1x64x64xbf16>
    %25 = vector.shape_cast %24 : vector<1x1x64x64xbf16> to vector<64x64xbf16>
    %cst_32 = arith.constant dense<0.000000e+00> : vector<256x64xf32>
    %26 = tpu.matmul %23, %25, %cst_32 {dimension_numbers = #tpu.dot_dimension_numbers<[1], [0], [0], [1], [0, 0, 1, 1], [], []>} : vector<256x64xbf16>, vector<64x64xbf16>, vector<256x64xf32> -> vector<256x64xf32>
    %27 = arith.addf %21, %26 : vector<256x64xf32>
    %c0_33 = arith.constant 0 : index
    %c1_34 = arith.constant 1 : index
    %c16_35 = arith.constant 16 : index
    %c0_36 = arith.constant 0 : index
    %28 = vector.load %arg3[%c0_33, %c1_34, %c16_35, %c0_36] : memref<1x3x288x64xbf16, #tpu.memory_space<vmem>>, vector<1x1x256x64xbf16>
    %29 = vector.shape_cast %28 : vector<1x1x256x64xbf16> to vector<256x64xbf16>
    %c1_37 = arith.constant 1 : index
    %c1_38 = arith.constant 1 : index
    %c0_39 = arith.constant 0 : index
    %c0_40 = arith.constant 0 : index
    %30 = vector.load %arg4[%c1_37, %c1_38, %c0_39, %c0_40] : memref<3x3x64x64xbf16, #tpu.memory_space<vmem>>, vector<1x1x64x64xbf16>
    %31 = vector.shape_cast %30 : vector<1x1x64x64xbf16> to vector<64x64xbf16>
    %cst_41 = arith.constant dense<0.000000e+00> : vector<256x64xf32>
    %32 = tpu.matmul %29, %31, %cst_41 {dimension_numbers = #tpu.dot_dimension_numbers<[1], [0], [0], [1], [0, 0, 1, 1], [], []>} : vector<256x64xbf16>, vector<64x64xbf16>, vector<256x64xf32> -> vector<256x64xf32>
    %33 = arith.addf %27, %32 : vector<256x64xf32>
    %c0_42 = arith.constant 0 : index
    %c2_43 = arith.constant 2 : index
    %c16_44 = arith.constant 16 : index
    %c0_45 = arith.constant 0 : index
    %34 = vector.load %arg3[%c0_42, %c2_43, %c16_44, %c0_45] : memref<1x3x288x64xbf16, #tpu.memory_space<vmem>>, vector<1x1x256x64xbf16>
    %35 = vector.shape_cast %34 : vector<1x1x256x64xbf16> to vector<256x64xbf16>
    %c1_46 = arith.constant 1 : index
    %c2_47 = arith.constant 2 : index
    %c0_48 = arith.constant 0 : index
    %c0_49 = arith.constant 0 : index
    %36 = vector.load %arg4[%c1_46, %c2_47, %c0_48, %c0_49] : memref<3x3x64x64xbf16, #tpu.memory_space<vmem>>, vector<1x1x64x64xbf16>
    %37 = vector.shape_cast %36 : vector<1x1x64x64xbf16> to vector<64x64xbf16>
    %cst_50 = arith.constant dense<0.000000e+00> : vector<256x64xf32>
    %38 = tpu.matmul %35, %37, %cst_50 {dimension_numbers = #tpu.dot_dimension_numbers<[1], [0], [0], [1], [0, 0, 1, 1], [], []>} : vector<256x64xbf16>, vector<64x64xbf16>, vector<256x64xf32> -> vector<256x64xf32>
    %39 = arith.addf %33, %38 : vector<256x64xf32>
    %c0_51 = arith.constant 0 : index
    %c0_52 = arith.constant 0 : index
    %c32 = arith.constant 32 : index
    %c0_53 = arith.constant 0 : index
    %40 = vector.load %arg3[%c0_51, %c0_52, %c32, %c0_53] : memref<1x3x288x64xbf16, #tpu.memory_space<vmem>>, vector<1x1x256x64xbf16>
    %41 = vector.shape_cast %40 : vector<1x1x256x64xbf16> to vector<256x64xbf16>
    %c2_54 = arith.constant 2 : index
    %c0_55 = arith.constant 0 : index
    %c0_56 = arith.constant 0 : index
    %c0_57 = arith.constant 0 : index
    %42 = vector.load %arg4[%c2_54, %c0_55, %c0_56, %c0_57] : memref<3x3x64x64xbf16, #tpu.memory_space<vmem>>, vector<1x1x64x64xbf16>
    %43 = vector.shape_cast %42 : vector<1x1x64x64xbf16> to vector<64x64xbf16>
    %cst_58 = arith.constant dense<0.000000e+00> : vector<256x64xf32>
    %44 = tpu.matmul %41, %43, %cst_58 {dimension_numbers = #tpu.dot_dimension_numbers<[1], [0], [0], [1], [0, 0, 1, 1], [], []>} : vector<256x64xbf16>, vector<64x64xbf16>, vector<256x64xf32> -> vector<256x64xf32>
    %45 = arith.addf %39, %44 : vector<256x64xf32>
    %c0_59 = arith.constant 0 : index
    %c1_60 = arith.constant 1 : index
    %c32_61 = arith.constant 32 : index
    %c0_62 = arith.constant 0 : index
    %46 = vector.load %arg3[%c0_59, %c1_60, %c32_61, %c0_62] : memref<1x3x288x64xbf16, #tpu.memory_space<vmem>>, vector<1x1x256x64xbf16>
    %47 = vector.shape_cast %46 : vector<1x1x256x64xbf16> to vector<256x64xbf16>
    %c2_63 = arith.constant 2 : index
    %c1_64 = arith.constant 1 : index
    %c0_65 = arith.constant 0 : index
    %c0_66 = arith.constant 0 : index
    %48 = vector.load %arg4[%c2_63, %c1_64, %c0_65, %c0_66] : memref<3x3x64x64xbf16, #tpu.memory_space<vmem>>, vector<1x1x64x64xbf16>
    %49 = vector.shape_cast %48 : vector<1x1x64x64xbf16> to vector<64x64xbf16>
    %cst_67 = arith.constant dense<0.000000e+00> : vector<256x64xf32>
    %50 = tpu.matmul %47, %49, %cst_67 {dimension_numbers = #tpu.dot_dimension_numbers<[1], [0], [0], [1], [0, 0, 1, 1], [], []>} : vector<256x64xbf16>, vector<64x64xbf16>, vector<256x64xf32> -> vector<256x64xf32>
    %51 = arith.addf %45, %50 : vector<256x64xf32>
    %c0_68 = arith.constant 0 : index
    %c2_69 = arith.constant 2 : index
    %c32_70 = arith.constant 32 : index
    %c0_71 = arith.constant 0 : index
    %52 = vector.load %arg3[%c0_68, %c2_69, %c32_70, %c0_71] : memref<1x3x288x64xbf16, #tpu.memory_space<vmem>>, vector<1x1x256x64xbf16>
    %53 = vector.shape_cast %52 : vector<1x1x256x64xbf16> to vector<256x64xbf16>
    %c2_72 = arith.constant 2 : index
    %c2_73 = arith.constant 2 : index
    %c0_74 = arith.constant 0 : index
    %c0_75 = arith.constant 0 : index
    %54 = vector.load %arg4[%c2_72, %c2_73, %c0_74, %c0_75] : memref<3x3x64x64xbf16, #tpu.memory_space<vmem>>, vector<1x1x64x64xbf16>
    %55 = vector.shape_cast %54 : vector<1x1x64x64xbf16> to vector<64x64xbf16>
    %cst_76 = arith.constant dense<0.000000e+00> : vector<256x64xf32>
    %56 = tpu.matmul %53, %55, %cst_76 {dimension_numbers = #tpu.dot_dimension_numbers<[1], [0], [0], [1], [0, 0, 1, 1], [], []>} : vector<256x64xbf16>, vector<64x64xbf16>, vector<256x64xf32> -> vector<256x64xf32>
    %57 = arith.addf %51, %56 : vector<256x64xf32>
    %c0_77 = arith.constant 0 : index
    %c0_78 = arith.constant 0 : index
    %c0_79 = arith.constant 0 : index
    %58 = vector.load %arg9[%c0_77, %c0_78, %c0_79] : memref<1x256x64xf32, #tpu.memory_space<vmem>>, vector<1x256x64xf32>
    %59 = vector.shape_cast %58 : vector<1x256x64xf32> to vector<256x64xf32>
    %60 = arith.addf %59, %57 : vector<256x64xf32>
    %c0_80 = arith.constant 0 : index
    %c0_81 = arith.constant 0 : index
    %c0_82 = arith.constant 0 : index
    %61 = vector.load %arg9[%c0_80, %c0_81, %c0_82] : memref<1x256x64xf32, #tpu.memory_space<vmem>>, vector<1x256x64xf32>
    %62 = vector.shape_cast %61 : vector<1x256x64xf32> to vector<256x64xf32>
    %63 = vector.shape_cast %60 : vector<256x64xf32> to vector<1x256x64xf32>
    tpu.vector_store %arg9[%c0_80, %c0_81, %c0_82], %63 {strides = array<i32>} : memref<1x256x64xf32, #tpu.memory_space<vmem>>, vector<1x256x64xf32>,
    %c0_i32_83 = arith.constant 0 : i32
    %64 = arith.cmpi eq, %arg2, %c0_i32_83 : i32
    %65 = arith.extui %64 : i1 to i32
    %c0_i32_84 = arith.constant 0 : i32
    %66 = arith.cmpi ne, %65, %c0_i32_84 : i32
    scf.if %66 {
      %c0_85 = arith.constant 0 : index
      %c0_86 = arith.constant 0 : index
      %c0_87 = arith.constant 0 : index
      %67 = vector.load %arg9[%c0_85, %c0_86, %c0_87] : memref<1x256x64xf32, #tpu.memory_space<vmem>>, vector<1x256x64xf32>
      %68 = vector.shape_cast %67 : vector<1x256x64xf32> to vector<256x64xf32>
      %c0_88 = arith.constant 0 : index
      %c0_89 = arith.constant 0 : index
      %69 = vector.load %arg5[%c0_88, %c0_89] : memref<1x64xf32, #tpu.memory_space<vmem>>, vector<1x64xf32>
      %70 = vector.broadcast %69 : vector<1x64xf32> to vector<256x64xf32>
      %71 = arith.addf %68, %70 : vector<256x64xf32>
      %c0_90 = arith.constant 0 : index
      %c0_91 = arith.constant 0 : index
      %c0_92 = arith.constant 0 : index
      %72 = vector.load %arg6[%c0_90, %c0_91, %c0_92] : memref<1x256x64xf32, #tpu.memory_space<vmem>>, vector<1x256x64xf32>
      %73 = vector.shape_cast %72 : vector<1x256x64xf32> to vector<256x64xf32>
      %c0_93 = arith.constant 0 : index
      %c0_94 = arith.constant 0 : index
      %74 = vector.load %arg7[%c0_93, %c0_94] : memref<1x64xf32, #tpu.memory_space<vmem>>, vector<1x64xf32>
      %75 = vector.broadcast %74 : vector<1x64xf32> to vector<256x64xf32>
      %76 = arith.mulf %73, %75 : vector<256x64xf32>
      %77 = arith.addf %71, %76 : vector<256x64xf32>
      %c0_95 = arith.constant 0 : index
      %c0_96 = arith.constant 0 : index
      %78 = vector.load %arg8[%c0_95, %c0_96] : memref<1x64xf32, #tpu.memory_space<vmem>>, vector<1x64xf32>
      %79 = vector.broadcast %78 : vector<1x64xf32> to vector<256x64xf32>
      %80 = arith.addf %77, %79 : vector<256x64xf32>
      %c0_97 = arith.constant 0 : index
      %c0_98 = arith.constant 0 : index
      %c0_99 = arith.constant 0 : index
      %81 = vector.load %arg9[%c0_97, %c0_98, %c0_99] : memref<1x256x64xf32, #tpu.memory_space<vmem>>, vector<1x256x64xf32>
      %82 = vector.shape_cast %81 : vector<1x256x64xf32> to vector<256x64xf32>
      %83 = vector.shape_cast %80 : vector<256x64xf32> to vector<1x256x64xf32>
      tpu.vector_store %arg9[%c0_97, %c0_98, %c0_99], %83 {strides = array<i32>} : memref<1x256x64xf32, #tpu.memory_space<vmem>>, vector<1x256x64xf32>,
    } else {
    }
    return
  }
  func.func @transform_0(%arg0: i32, %arg1: i32, %arg2: i32) -> (i32, i32, i32, i32) {
    %c0_i32 = arith.constant 0 : i32
    %c0_i32_0 = arith.constant 0 : i32
    %c0_i32_1 = arith.constant 0 : i32
    return %arg0, %c0_i32, %c0_i32_0, %arg2 : i32, i32, i32, i32
  }
  func.func @transform_1(%arg0: i32, %arg1: i32, %arg2: i32) -> (i32, i32, i32, i32) {
    %c0_i32 = arith.constant 0 : i32
    %c0_i32_0 = arith.constant 0 : i32
    %c0_i32_1 = arith.constant 0 : i32
    return %c0_i32, %c0_i32_0, %arg2, %arg1 : i32, i32, i32, i32
  }
  func.func @transform_2(%arg0: i32, %arg1: i32, %arg2: i32) -> (i32, i32) {
    %c0_i32 = arith.constant 0 : i32
    %c0_i32_0 = arith.constant 0 : i32
    return %c0_i32, %arg1 : i32, i32
  }
  func.func @transform_3(%arg0: i32, %arg1: i32, %arg2: i32) -> (i32, i32, i32) {
    %c0_i32 = arith.constant 0 : i32
    %c0_i32_0 = arith.constant 0 : i32
    return %arg0, %c0_i32, %arg1 : i32, i32, i32
  }
  func.func @transform_4(%arg0: i32, %arg1: i32, %arg2: i32) -> (i32, i32) {
    %c0_i32 = arith.constant 0 : i32
    %c0_i32_0 = arith.constant 0 : i32
    return %c0_i32, %arg1 : i32, i32
  }
  func.func @transform_5(%arg0: i32, %arg1: i32, %arg2: i32) -> (i32, i32) {
    %c0_i32 = arith.constant 0 : i32
    %c0_i32_0 = arith.constant 0 : i32
    return %c0_i32, %arg1 : i32, i32
  }
  func.func @transform_6(%arg0: i32, %arg1: i32, %arg2: i32) -> (i32, i32, i32) {
    %c0_i32 = arith.constant 0 : i32
    %c0_i32_0 = arith.constant 0 : i32
    return %arg0, %c0_i32, %arg1 : i32, i32, i32
  }
}

module attributes {stable_mosaic.version = 11 : i64} {
  func.func @_matmul_kernel(%arg0: i32, %arg1: i32, %arg2: i32, %arg3: memref<128x64xbf16, #tpu.memory_space<vmem>>, %arg4: memref<64x128xbf16, #tpu.memory_space<vmem>>, %arg5: memref<1x128xf32, #tpu.memory_space<vmem>>, %arg6: memref<128x128xf32, #tpu.memory_space<vmem>>) attributes {dimension_semantics = [#tpu.dimension_semantics<parallel>, #tpu.dimension_semantics<parallel>, #tpu.dimension_semantics<arbitrary>], iteration_bounds = array<i64: 1, 1, 1>, scalar_prefetch = 0 : i64, scratch_operands = 0 : i64, tpu.core_type = #tpu.core_type<tc>, window_params = [{transform_indices = @transform_0, window_bounds = array<i64: 128, 64>}, {transform_indices = @transform_1, window_bounds = array<i64: 64, 128>}, {transform_indices = @transform_2, window_bounds = array<i64: 1, 128>}, {transform_indices = @transform_3, window_bounds = array<i64: 128, 128>}]} {
    %c0_i32 = arith.constant 0 : i32
    %0 = arith.cmpi eq, %arg2, %c0_i32 : i32
    %1 = arith.extui %0 : i1 to i32
    %c0_i32_0 = arith.constant 0 : i32
    %2 = arith.cmpi ne, %1, %c0_i32_0 : i32
    scf.if %2 {
      %cst_10 = arith.constant 0.000000e+00 : f32
      %12 = vector.broadcast %cst_10 : f32 to vector<128x128xf32>
      %c0_11 = arith.constant 0 : index
      %c0_12 = arith.constant 0 : index
      %13 = vector.load %arg6[%c0_11, %c0_12] : memref<128x128xf32, #tpu.memory_space<vmem>>, vector<128x128xf32>
      tpu.vector_store %arg6[%c0_11, %c0_12], %12 {strides = array<i32>} : memref<128x128xf32, #tpu.memory_space<vmem>>, vector<128x128xf32>,
    } else {
    }
    %c0 = arith.constant 0 : index
    %c0_1 = arith.constant 0 : index
    %3 = vector.load %arg6[%c0, %c0_1] : memref<128x128xf32, #tpu.memory_space<vmem>>, vector<128x128xf32>
    %c0_2 = arith.constant 0 : index
    %c0_3 = arith.constant 0 : index
    %4 = vector.load %arg3[%c0_2, %c0_3] : memref<128x64xbf16, #tpu.memory_space<vmem>>, vector<128x64xbf16>
    %c0_4 = arith.constant 0 : index
    %c0_5 = arith.constant 0 : index
    %5 = vector.load %arg4[%c0_4, %c0_5] : memref<64x128xbf16, #tpu.memory_space<vmem>>, vector<64x128xbf16>
    %cst = arith.constant dense<0.000000e+00> : vector<128x128xf32>
    %6 = tpu.matmul %4, %5, %cst {dimension_numbers = #tpu.dot_dimension_numbers<[1], [0], [0], [1], [0, 0, 1, 1], [], []>} : vector<128x64xbf16>, vector<64x128xbf16>, vector<128x128xf32> -> vector<128x128xf32>
    %7 = arith.addf %3, %6 : vector<128x128xf32>
    %c0_6 = arith.constant 0 : index
    %c0_7 = arith.constant 0 : index
    %8 = vector.load %arg6[%c0_6, %c0_7] : memref<128x128xf32, #tpu.memory_space<vmem>>, vector<128x128xf32>
    tpu.vector_store %arg6[%c0_6, %c0_7], %7 {strides = array<i32>} : memref<128x128xf32, #tpu.memory_space<vmem>>, vector<128x128xf32>,
    %c0_i32_8 = arith.constant 0 : i32
    %9 = arith.cmpi eq, %arg2, %c0_i32_8 : i32
    %10 = arith.extui %9 : i1 to i32
    %c0_i32_9 = arith.constant 0 : i32
    %11 = arith.cmpi ne, %10, %c0_i32_9 : i32
    scf.if %11 {
      %c0_10 = arith.constant 0 : index
      %c0_11 = arith.constant 0 : index
      %12 = vector.load %arg6[%c0_10, %c0_11] : memref<128x128xf32, #tpu.memory_space<vmem>>, vector<128x128xf32>
      %c0_12 = arith.constant 0 : index
      %c0_13 = arith.constant 0 : index
      %13 = vector.load %arg5[%c0_12, %c0_13] : memref<1x128xf32, #tpu.memory_space<vmem>>, vector<1x128xf32>
      %14 = vector.broadcast %13 : vector<1x128xf32> to vector<128x128xf32>
      %15 = arith.addf %12, %14 : vector<128x128xf32>
      %c0_14 = arith.constant 0 : index
      %c0_15 = arith.constant 0 : index
      %16 = vector.load %arg6[%c0_14, %c0_15] : memref<128x128xf32, #tpu.memory_space<vmem>>, vector<128x128xf32>
      tpu.vector_store %arg6[%c0_14, %c0_15], %15 {strides = array<i32>} : memref<128x128xf32, #tpu.memory_space<vmem>>, vector<128x128xf32>,
    } else {
    }
    return
  }
  func.func @transform_0(%arg0: i32, %arg1: i32, %arg2: i32) -> (i32, i32) {
    %c0_i32 = arith.constant 0 : i32
    return %arg0, %arg2 : i32, i32
  }
  func.func @transform_1(%arg0: i32, %arg1: i32, %arg2: i32) -> (i32, i32) {
    %c0_i32 = arith.constant 0 : i32
    return %arg2, %arg1 : i32, i32
  }
  func.func @transform_2(%arg0: i32, %arg1: i32, %arg2: i32) -> (i32, i32) {
    %c0_i32 = arith.constant 0 : i32
    %c0_i32_0 = arith.constant 0 : i32
    return %c0_i32, %arg1 : i32, i32
  }
  func.func @transform_3(%arg0: i32, %arg1: i32, %arg2: i32) -> (i32, i32) {
    %c0_i32 = arith.constant 0 : i32
    return %arg0, %arg1 : i32, i32
  }
}

module attributes {stable_mosaic.version = 11 : i64} {
  func.func @_conv3x3_kernel(%arg0: i32, %arg1: i32, %arg2: i32, %arg3: memref<1x3x80x64xbf16, #tpu.memory_space<vmem>>, %arg4: memref<3x3x64x128xbf16, #tpu.memory_space<vmem>>, %arg5: memref<1x128xf32, #tpu.memory_space<vmem>>, %arg6: memref<1x64x128xf32, #tpu.memory_space<vmem>>) attributes {dimension_semantics = [#tpu.dimension_semantics<parallel>, #tpu.dimension_semantics<parallel>, #tpu.dimension_semantics<arbitrary>], iteration_bounds = array<i64: 2, 1, 1>, scalar_prefetch = 0 : i64, scratch_operands = 0 : i64, tpu.core_type = #tpu.core_type<tc>, window_params = [{transform_indices = @transform_0, window_bounds = array<i64: 1, 3, 80, 64>}, {transform_indices = @transform_1, window_bounds = array<i64: 3, 3, 64, 128>}, {transform_indices = @transform_2, window_bounds = array<i64: 1, 128>}, {transform_indices = @transform_3, window_bounds = array<i64: 1, 64, 128>}]} {
    %c0_i32 = arith.constant 0 : i32
    %0 = arith.cmpi eq, %arg2, %c0_i32 : i32
    %1 = arith.extui %0 : i1 to i32
    %c0_i32_0 = arith.constant 0 : i32
    %2 = arith.cmpi ne, %1, %c0_i32_0 : i32
    scf.if %2 {
      %cst_85 = arith.constant 0.000000e+00 : f32
      %67 = vector.broadcast %cst_85 : f32 to vector<1x64x128xf32>
      %c0_86 = arith.constant 0 : index
      %c0_87 = arith.constant 0 : index
      %c0_88 = arith.constant 0 : index
      %68 = vector.load %arg6[%c0_86, %c0_87, %c0_88] : memref<1x64x128xf32, #tpu.memory_space<vmem>>, vector<1x64x128xf32>
      tpu.vector_store %arg6[%c0_86, %c0_87, %c0_88], %67 {strides = array<i32>} : memref<1x64x128xf32, #tpu.memory_space<vmem>>, vector<1x64x128xf32>,
    } else {
    }
    %cst = arith.constant 0.000000e+00 : f32
    %3 = vector.broadcast %cst : f32 to vector<64x128xf32>
    %c0 = arith.constant 0 : index
    %c0_1 = arith.constant 0 : index
    %c0_2 = arith.constant 0 : index
    %c0_3 = arith.constant 0 : index
    %4 = vector.load %arg3[%c0, %c0_1, %c0_2, %c0_3] : memref<1x3x80x64xbf16, #tpu.memory_space<vmem>>, vector<1x1x64x64xbf16>
    %5 = vector.shape_cast %4 : vector<1x1x64x64xbf16> to vector<64x64xbf16>
    %c0_4 = arith.constant 0 : index
    %c0_5 = arith.constant 0 : index
    %c0_6 = arith.constant 0 : index
    %c0_7 = arith.constant 0 : index
    %6 = vector.load %arg4[%c0_4, %c0_5, %c0_6, %c0_7] : memref<3x3x64x128xbf16, #tpu.memory_space<vmem>>, vector<1x1x64x128xbf16>
    %7 = vector.shape_cast %6 : vector<1x1x64x128xbf16> to vector<64x128xbf16>
    %cst_8 = arith.constant dense<0.000000e+00> : vector<64x128xf32>
    %8 = tpu.matmul %5, %7, %cst_8 {dimension_numbers = #tpu.dot_dimension_numbers<[1], [0], [0], [1], [0, 0, 1, 1], [], []>} : vector<64x64xbf16>, vector<64x128xbf16>, vector<64x128xf32> -> vector<64x128xf32>
    %9 = arith.addf %3, %8 : vector<64x128xf32>
    %c0_9 = arith.constant 0 : index
    %c1 = arith.constant 1 : index
    %c0_10 = arith.constant 0 : index
    %c0_11 = arith.constant 0 : index
    %10 = vector.load %arg3[%c0_9, %c1, %c0_10, %c0_11] : memref<1x3x80x64xbf16, #tpu.memory_space<vmem>>, vector<1x1x64x64xbf16>
    %11 = vector.shape_cast %10 : vector<1x1x64x64xbf16> to vector<64x64xbf16>
    %c0_12 = arith.constant 0 : index
    %c1_13 = arith.constant 1 : index
    %c0_14 = arith.constant 0 : index
    %c0_15 = arith.constant 0 : index
    %12 = vector.load %arg4[%c0_12, %c1_13, %c0_14, %c0_15] : memref<3x3x64x128xbf16, #tpu.memory_space<vmem>>, vector<1x1x64x128xbf16>
    %13 = vector.shape_cast %12 : vector<1x1x64x128xbf16> to vector<64x128xbf16>
    %cst_16 = arith.constant dense<0.000000e+00> : vector<64x128xf32>
    %14 = tpu.matmul %11, %13, %cst_16 {dimension_numbers = #tpu.dot_dimension_numbers<[1], [0], [0], [1], [0, 0, 1, 1], [], []>} : vector<64x64xbf16>, vector<64x128xbf16>, vector<64x128xf32> -> vector<64x128xf32>
    %15 = arith.addf %9, %14 : vector<64x128xf32>
    %c0_17 = arith.constant 0 : index
    %c2 = arith.constant 2 : index
    %c0_18 = arith.constant 0 : index
    %c0_19 = arith.constant 0 : index
    %16 = vector.load %arg3[%c0_17, %c2, %c0_18, %c0_19] : memref<1x3x80x64xbf16, #tpu.memory_space<vmem>>, vector<1x1x64x64xbf16>
    %17 = vector.shape_cast %16 : vector<1x1x64x64xbf16> to vector<64x64xbf16>
    %c0_20 = arith.constant 0 : index
    %c2_21 = arith.constant 2 : index
    %c0_22 = arith.constant 0 : index
    %c0_23 = arith.constant 0 : index
    %18 = vector.load %arg4[%c0_20, %c2_21, %c0_22, %c0_23] : memref<3x3x64x128xbf16, #tpu.memory_space<vmem>>, vector<1x1x64x128xbf16>
    %19 = vector.shape_cast %18 : vector<1x1x64x128xbf16> to vector<64x128xbf16>
    %cst_24 = arith.constant dense<0.000000e+00> : vector<64x128xf32>
    %20 = tpu.matmul %17, %19, %cst_24 {dimension_numbers = #tpu.dot_dimension_numbers<[1], [0], [0], [1], [0, 0, 1, 1], [], []>} : vector<64x64xbf16>, vector<64x128xbf16>, vector<64x128xf32> -> vector<64x128xf32>
    %21 = arith.addf %15, %20 : vector<64x128xf32>
    %c0_25 = arith.constant 0 : index
    %c0_26 = arith.constant 0 : index
    %c8 = arith.constant 8 : index
    %c0_27 = arith.constant 0 : index
    %22 = vector.load %arg3[%c0_25, %c0_26, %c8, %c0_27] : memref<1x3x80x64xbf16, #tpu.memory_space<vmem>>, vector<1x1x64x64xbf16>
    %23 = vector.shape_cast %22 : vector<1x1x64x64xbf16> to vector<64x64xbf16>
    %c1_28 = arith.constant 1 : index
    %c0_29 = arith.constant 0 : index
    %c0_30 = arith.constant 0 : index
    %c0_31 = arith.constant 0 : index
    %24 = vector.load %arg4[%c1_28, %c0_29, %c0_30, %c0_31] : memref<3x3x64x128xbf16, #tpu.memory_space<vmem>>, vector<1x1x64x128xbf16>
    %25 = vector.shape_cast %24 : vector<1x1x64x128xbf16> to vector<64x128xbf16>
    %cst_32 = arith.constant dense<0.000000e+00> : vector<64x128xf32>
    %26 = tpu.matmul %23, %25, %cst_32 {dimension_numbers = #tpu.dot_dimension_numbers<[1], [0], [0], [1], [0, 0, 1, 1], [], []>} : vector<64x64xbf16>, vector<64x128xbf16>, vector<64x128xf32> -> vector<64x128xf32>
    %27 = arith.addf %21, %26 : vector<64x128xf32>
    %c0_33 = arith.constant 0 : index
    %c1_34 = arith.constant 1 : index
    %c8_35 = arith.constant 8 : index
    %c0_36 = arith.constant 0 : index
    %28 = vector.load %arg3[%c0_33, %c1_34, %c8_35, %c0_36] : memref<1x3x80x64xbf16, #tpu.memory_space<vmem>>, vector<1x1x64x64xbf16>
    %29 = vector.shape_cast %28 : vector<1x1x64x64xbf16> to vector<64x64xbf16>
    %c1_37 = arith.constant 1 : index
    %c1_38 = arith.constant 1 : index
    %c0_39 = arith.constant 0 : index
    %c0_40 = arith.constant 0 : index
    %30 = vector.load %arg4[%c1_37, %c1_38, %c0_39, %c0_40] : memref<3x3x64x128xbf16, #tpu.memory_space<vmem>>, vector<1x1x64x128xbf16>
    %31 = vector.shape_cast %30 : vector<1x1x64x128xbf16> to vector<64x128xbf16>
    %cst_41 = arith.constant dense<0.000000e+00> : vector<64x128xf32>
    %32 = tpu.matmul %29, %31, %cst_41 {dimension_numbers = #tpu.dot_dimension_numbers<[1], [0], [0], [1], [0, 0, 1, 1], [], []>} : vector<64x64xbf16>, vector<64x128xbf16>, vector<64x128xf32> -> vector<64x128xf32>
    %33 = arith.addf %27, %32 : vector<64x128xf32>
    %c0_42 = arith.constant 0 : index
    %c2_43 = arith.constant 2 : index
    %c8_44 = arith.constant 8 : index
    %c0_45 = arith.constant 0 : index
    %34 = vector.load %arg3[%c0_42, %c2_43, %c8_44, %c0_45] : memref<1x3x80x64xbf16, #tpu.memory_space<vmem>>, vector<1x1x64x64xbf16>
    %35 = vector.shape_cast %34 : vector<1x1x64x64xbf16> to vector<64x64xbf16>
    %c1_46 = arith.constant 1 : index
    %c2_47 = arith.constant 2 : index
    %c0_48 = arith.constant 0 : index
    %c0_49 = arith.constant 0 : index
    %36 = vector.load %arg4[%c1_46, %c2_47, %c0_48, %c0_49] : memref<3x3x64x128xbf16, #tpu.memory_space<vmem>>, vector<1x1x64x128xbf16>
    %37 = vector.shape_cast %36 : vector<1x1x64x128xbf16> to vector<64x128xbf16>
    %cst_50 = arith.constant dense<0.000000e+00> : vector<64x128xf32>
    %38 = tpu.matmul %35, %37, %cst_50 {dimension_numbers = #tpu.dot_dimension_numbers<[1], [0], [0], [1], [0, 0, 1, 1], [], []>} : vector<64x64xbf16>, vector<64x128xbf16>, vector<64x128xf32> -> vector<64x128xf32>
    %39 = arith.addf %33, %38 : vector<64x128xf32>
    %c0_51 = arith.constant 0 : index
    %c0_52 = arith.constant 0 : index
    %c16 = arith.constant 16 : index
    %c0_53 = arith.constant 0 : index
    %40 = vector.load %arg3[%c0_51, %c0_52, %c16, %c0_53] : memref<1x3x80x64xbf16, #tpu.memory_space<vmem>>, vector<1x1x64x64xbf16>
    %41 = vector.shape_cast %40 : vector<1x1x64x64xbf16> to vector<64x64xbf16>
    %c2_54 = arith.constant 2 : index
    %c0_55 = arith.constant 0 : index
    %c0_56 = arith.constant 0 : index
    %c0_57 = arith.constant 0 : index
    %42 = vector.load %arg4[%c2_54, %c0_55, %c0_56, %c0_57] : memref<3x3x64x128xbf16, #tpu.memory_space<vmem>>, vector<1x1x64x128xbf16>
    %43 = vector.shape_cast %42 : vector<1x1x64x128xbf16> to vector<64x128xbf16>
    %cst_58 = arith.constant dense<0.000000e+00> : vector<64x128xf32>
    %44 = tpu.matmul %41, %43, %cst_58 {dimension_numbers = #tpu.dot_dimension_numbers<[1], [0], [0], [1], [0, 0, 1, 1], [], []>} : vector<64x64xbf16>, vector<64x128xbf16>, vector<64x128xf32> -> vector<64x128xf32>
    %45 = arith.addf %39, %44 : vector<64x128xf32>
    %c0_59 = arith.constant 0 : index
    %c1_60 = arith.constant 1 : index
    %c16_61 = arith.constant 16 : index
    %c0_62 = arith.constant 0 : index
    %46 = vector.load %arg3[%c0_59, %c1_60, %c16_61, %c0_62] : memref<1x3x80x64xbf16, #tpu.memory_space<vmem>>, vector<1x1x64x64xbf16>
    %47 = vector.shape_cast %46 : vector<1x1x64x64xbf16> to vector<64x64xbf16>
    %c2_63 = arith.constant 2 : index
    %c1_64 = arith.constant 1 : index
    %c0_65 = arith.constant 0 : index
    %c0_66 = arith.constant 0 : index
    %48 = vector.load %arg4[%c2_63, %c1_64, %c0_65, %c0_66] : memref<3x3x64x128xbf16, #tpu.memory_space<vmem>>, vector<1x1x64x128xbf16>
    %49 = vector.shape_cast %48 : vector<1x1x64x128xbf16> to vector<64x128xbf16>
    %cst_67 = arith.constant dense<0.000000e+00> : vector<64x128xf32>
    %50 = tpu.matmul %47, %49, %cst_67 {dimension_numbers = #tpu.dot_dimension_numbers<[1], [0], [0], [1], [0, 0, 1, 1], [], []>} : vector<64x64xbf16>, vector<64x128xbf16>, vector<64x128xf32> -> vector<64x128xf32>
    %51 = arith.addf %45, %50 : vector<64x128xf32>
    %c0_68 = arith.constant 0 : index
    %c2_69 = arith.constant 2 : index
    %c16_70 = arith.constant 16 : index
    %c0_71 = arith.constant 0 : index
    %52 = vector.load %arg3[%c0_68, %c2_69, %c16_70, %c0_71] : memref<1x3x80x64xbf16, #tpu.memory_space<vmem>>, vector<1x1x64x64xbf16>
    %53 = vector.shape_cast %52 : vector<1x1x64x64xbf16> to vector<64x64xbf16>
    %c2_72 = arith.constant 2 : index
    %c2_73 = arith.constant 2 : index
    %c0_74 = arith.constant 0 : index
    %c0_75 = arith.constant 0 : index
    %54 = vector.load %arg4[%c2_72, %c2_73, %c0_74, %c0_75] : memref<3x3x64x128xbf16, #tpu.memory_space<vmem>>, vector<1x1x64x128xbf16>
    %55 = vector.shape_cast %54 : vector<1x1x64x128xbf16> to vector<64x128xbf16>
    %cst_76 = arith.constant dense<0.000000e+00> : vector<64x128xf32>
    %56 = tpu.matmul %53, %55, %cst_76 {dimension_numbers = #tpu.dot_dimension_numbers<[1], [0], [0], [1], [0, 0, 1, 1], [], []>} : vector<64x64xbf16>, vector<64x128xbf16>, vector<64x128xf32> -> vector<64x128xf32>
    %57 = arith.addf %51, %56 : vector<64x128xf32>
    %c0_77 = arith.constant 0 : index
    %c0_78 = arith.constant 0 : index
    %c0_79 = arith.constant 0 : index
    %58 = vector.load %arg6[%c0_77, %c0_78, %c0_79] : memref<1x64x128xf32, #tpu.memory_space<vmem>>, vector<1x64x128xf32>
    %59 = vector.shape_cast %58 : vector<1x64x128xf32> to vector<64x128xf32>
    %60 = arith.addf %59, %57 : vector<64x128xf32>
    %c0_80 = arith.constant 0 : index
    %c0_81 = arith.constant 0 : index
    %c0_82 = arith.constant 0 : index
    %61 = vector.load %arg6[%c0_80, %c0_81, %c0_82] : memref<1x64x128xf32, #tpu.memory_space<vmem>>, vector<1x64x128xf32>
    %62 = vector.shape_cast %61 : vector<1x64x128xf32> to vector<64x128xf32>
    %63 = vector.shape_cast %60 : vector<64x128xf32> to vector<1x64x128xf32>
    tpu.vector_store %arg6[%c0_80, %c0_81, %c0_82], %63 {strides = array<i32>} : memref<1x64x128xf32, #tpu.memory_space<vmem>>, vector<1x64x128xf32>,
    %c0_i32_83 = arith.constant 0 : i32
    %64 = arith.cmpi eq, %arg2, %c0_i32_83 : i32
    %65 = arith.extui %64 : i1 to i32
    %c0_i32_84 = arith.constant 0 : i32
    %66 = arith.cmpi ne, %65, %c0_i32_84 : i32
    scf.if %66 {
      %c0_85 = arith.constant 0 : index
      %c0_86 = arith.constant 0 : index
      %c0_87 = arith.constant 0 : index
      %67 = vector.load %arg6[%c0_85, %c0_86, %c0_87] : memref<1x64x128xf32, #tpu.memory_space<vmem>>, vector<1x64x128xf32>
      %68 = vector.shape_cast %67 : vector<1x64x128xf32> to vector<64x128xf32>
      %c0_88 = arith.constant 0 : index
      %c0_89 = arith.constant 0 : index
      %69 = vector.load %arg5[%c0_88, %c0_89] : memref<1x128xf32, #tpu.memory_space<vmem>>, vector<1x128xf32>
      %70 = vector.broadcast %69 : vector<1x128xf32> to vector<64x128xf32>
      %71 = arith.addf %68, %70 : vector<64x128xf32>
      %c0_90 = arith.constant 0 : index
      %c0_91 = arith.constant 0 : index
      %c0_92 = arith.constant 0 : index
      %72 = vector.load %arg6[%c0_90, %c0_91, %c0_92] : memref<1x64x128xf32, #tpu.memory_space<vmem>>, vector<1x64x128xf32>
      %73 = vector.shape_cast %72 : vector<1x64x128xf32> to vector<64x128xf32>
      %74 = vector.shape_cast %71 : vector<64x128xf32> to vector<1x64x128xf32>
      tpu.vector_store %arg6[%c0_90, %c0_91, %c0_92], %74 {strides = array<i32>} : memref<1x64x128xf32, #tpu.memory_space<vmem>>, vector<1x64x128xf32>,
    } else {
    }
    return
  }
  func.func @transform_0(%arg0: i32, %arg1: i32, %arg2: i32) -> (i32, i32, i32, i32) {
    %c0_i32 = arith.constant 0 : i32
    %c0_i32_0 = arith.constant 0 : i32
    %c0_i32_1 = arith.constant 0 : i32
    return %arg0, %c0_i32, %c0_i32_0, %arg2 : i32, i32, i32, i32
  }
  func.func @transform_1(%arg0: i32, %arg1: i32, %arg2: i32) -> (i32, i32, i32, i32) {
    %c0_i32 = arith.constant 0 : i32
    %c0_i32_0 = arith.constant 0 : i32
    %c0_i32_1 = arith.constant 0 : i32
    return %c0_i32, %c0_i32_0, %arg2, %arg1 : i32, i32, i32, i32
  }
  func.func @transform_2(%arg0: i32, %arg1: i32, %arg2: i32) -> (i32, i32) {
    %c0_i32 = arith.constant 0 : i32
    %c0_i32_0 = arith.constant 0 : i32
    return %c0_i32, %arg1 : i32, i32
  }
  func.func @transform_3(%arg0: i32, %arg1: i32, %arg2: i32) -> (i32, i32, i32) {
    %c0_i32 = arith.constant 0 : i32
    %c0_i32_0 = arith.constant 0 : i32
    return %arg0, %c0_i32, %arg1 : i32, i32, i32
  }
}

module attributes {stable_mosaic.version = 11 : i64} {
  func.func @_conv3x3_kernel(%arg0: i32, %arg1: i32, %arg2: i32, %arg3: memref<1x3x80x128xbf16, #tpu.memory_space<vmem>>, %arg4: memref<3x3x128x128xbf16, #tpu.memory_space<vmem>>, %arg5: memref<1x128xf32, #tpu.memory_space<vmem>>, %arg6: memref<1x64x128xf32, #tpu.memory_space<vmem>>, %arg7: memref<1x128xf32, #tpu.memory_space<vmem>>, %arg8: memref<1x128xf32, #tpu.memory_space<vmem>>, %arg9: memref<1x64x128xf32, #tpu.memory_space<vmem>>) attributes {dimension_semantics = [#tpu.dimension_semantics<parallel>, #tpu.dimension_semantics<parallel>, #tpu.dimension_semantics<arbitrary>], iteration_bounds = array<i64: 2, 1, 1>, scalar_prefetch = 0 : i64, scratch_operands = 0 : i64, tpu.core_type = #tpu.core_type<tc>, window_params = [{transform_indices = @transform_0, window_bounds = array<i64: 1, 3, 80, 128>}, {transform_indices = @transform_1, window_bounds = array<i64: 3, 3, 128, 128>}, {transform_indices = @transform_2, window_bounds = array<i64: 1, 128>}, {transform_indices = @transform_3, window_bounds = array<i64: 1, 64, 128>}, {transform_indices = @transform_4, window_bounds = array<i64: 1, 128>}, {transform_indices = @transform_5, window_bounds = array<i64: 1, 128>}, {transform_indices = @transform_6, window_bounds = array<i64: 1, 64, 128>}]} {
    %c0_i32 = arith.constant 0 : i32
    %0 = arith.cmpi eq, %arg2, %c0_i32 : i32
    %1 = arith.extui %0 : i1 to i32
    %c0_i32_0 = arith.constant 0 : i32
    %2 = arith.cmpi ne, %1, %c0_i32_0 : i32
    scf.if %2 {
      %cst_85 = arith.constant 0.000000e+00 : f32
      %67 = vector.broadcast %cst_85 : f32 to vector<1x64x128xf32>
      %c0_86 = arith.constant 0 : index
      %c0_87 = arith.constant 0 : index
      %c0_88 = arith.constant 0 : index
      %68 = vector.load %arg9[%c0_86, %c0_87, %c0_88] : memref<1x64x128xf32, #tpu.memory_space<vmem>>, vector<1x64x128xf32>
      tpu.vector_store %arg9[%c0_86, %c0_87, %c0_88], %67 {strides = array<i32>} : memref<1x64x128xf32, #tpu.memory_space<vmem>>, vector<1x64x128xf32>,
    } else {
    }
    %cst = arith.constant 0.000000e+00 : f32
    %3 = vector.broadcast %cst : f32 to vector<64x128xf32>
    %c0 = arith.constant 0 : index
    %c0_1 = arith.constant 0 : index
    %c0_2 = arith.constant 0 : index
    %c0_3 = arith.constant 0 : index
    %4 = vector.load %arg3[%c0, %c0_1, %c0_2, %c0_3] : memref<1x3x80x128xbf16, #tpu.memory_space<vmem>>, vector<1x1x64x128xbf16>
    %5 = vector.shape_cast %4 : vector<1x1x64x128xbf16> to vector<64x128xbf16>
    %c0_4 = arith.constant 0 : index
    %c0_5 = arith.constant 0 : index
    %c0_6 = arith.constant 0 : index
    %c0_7 = arith.constant 0 : index
    %6 = vector.load %arg4[%c0_4, %c0_5, %c0_6, %c0_7] : memref<3x3x128x128xbf16, #tpu.memory_space<vmem>>, vector<1x1x128x128xbf16>
    %7 = vector.shape_cast %6 : vector<1x1x128x128xbf16> to vector<128x128xbf16>
    %cst_8 = arith.constant dense<0.000000e+00> : vector<64x128xf32>
    %8 = tpu.matmul %5, %7, %cst_8 {dimension_numbers = #tpu.dot_dimension_numbers<[1], [0], [0], [1], [0, 0, 1, 1], [], []>} : vector<64x128xbf16>, vector<128x128xbf16>, vector<64x128xf32> -> vector<64x128xf32>
    %9 = arith.addf %3, %8 : vector<64x128xf32>
    %c0_9 = arith.constant 0 : index
    %c1 = arith.constant 1 : index
    %c0_10 = arith.constant 0 : index
    %c0_11 = arith.constant 0 : index
    %10 = vector.load %arg3[%c0_9, %c1, %c0_10, %c0_11] : memref<1x3x80x128xbf16, #tpu.memory_space<vmem>>, vector<1x1x64x128xbf16>
    %11 = vector.shape_cast %10 : vector<1x1x64x128xbf16> to vector<64x128xbf16>
    %c0_12 = arith.constant 0 : index
    %c1_13 = arith.constant 1 : index
    %c0_14 = arith.constant 0 : index
    %c0_15 = arith.constant 0 : index
    %12 = vector.load %arg4[%c0_12, %c1_13, %c0_14, %c0_15] : memref<3x3x128x128xbf16, #tpu.memory_space<vmem>>, vector<1x1x128x128xbf16>
    %13 = vector.shape_cast %12 : vector<1x1x128x128xbf16> to vector<128x128xbf16>
    %cst_16 = arith.constant dense<0.000000e+00> : vector<64x128xf32>
    %14 = tpu.matmul %11, %13, %cst_16 {dimension_numbers = #tpu.dot_dimension_numbers<[1], [0], [0], [1], [0, 0, 1, 1], [], []>} : vector<64x128xbf16>, vector<128x128xbf16>, vector<64x128xf32> -> vector<64x128xf32>
    %15 = arith.addf %9, %14 : vector<64x128xf32>
    %c0_17 = arith.constant 0 : index
    %c2 = arith.constant 2 : index
    %c0_18 = arith.constant 0 : index
    %c0_19 = arith.constant 0 : index
    %16 = vector.load %arg3[%c0_17, %c2, %c0_18, %c0_19] : memref<1x3x80x128xbf16, #tpu.memory_space<vmem>>, vector<1x1x64x128xbf16>
    %17 = vector.shape_cast %16 : vector<1x1x64x128xbf16> to vector<64x128xbf16>
    %c0_20 = arith.constant 0 : index
    %c2_21 = arith.constant 2 : index
    %c0_22 = arith.constant 0 : index
    %c0_23 = arith.constant 0 : index
    %18 = vector.load %arg4[%c0_20, %c2_21, %c0_22, %c0_23] : memref<3x3x128x128xbf16, #tpu.memory_space<vmem>>, vector<1x1x128x128xbf16>
    %19 = vector.shape_cast %18 : vector<1x1x128x128xbf16> to vector<128x128xbf16>
    %cst_24 = arith.constant dense<0.000000e+00> : vector<64x128xf32>
    %20 = tpu.matmul %17, %19, %cst_24 {dimension_numbers = #tpu.dot_dimension_numbers<[1], [0], [0], [1], [0, 0, 1, 1], [], []>} : vector<64x128xbf16>, vector<128x128xbf16>, vector<64x128xf32> -> vector<64x128xf32>
    %21 = arith.addf %15, %20 : vector<64x128xf32>
    %c0_25 = arith.constant 0 : index
    %c0_26 = arith.constant 0 : index
    %c8 = arith.constant 8 : index
    %c0_27 = arith.constant 0 : index
    %22 = vector.load %arg3[%c0_25, %c0_26, %c8, %c0_27] : memref<1x3x80x128xbf16, #tpu.memory_space<vmem>>, vector<1x1x64x128xbf16>
    %23 = vector.shape_cast %22 : vector<1x1x64x128xbf16> to vector<64x128xbf16>
    %c1_28 = arith.constant 1 : index
    %c0_29 = arith.constant 0 : index
    %c0_30 = arith.constant 0 : index
    %c0_31 = arith.constant 0 : index
    %24 = vector.load %arg4[%c1_28, %c0_29, %c0_30, %c0_31] : memref<3x3x128x128xbf16, #tpu.memory_space<vmem>>, vector<1x1x128x128xbf16>
    %25 = vector.shape_cast %24 : vector<1x1x128x128xbf16> to vector<128x128xbf16>
    %cst_32 = arith.constant dense<0.000000e+00> : vector<64x128xf32>
    %26 = tpu.matmul %23, %25, %cst_32 {dimension_numbers = #tpu.dot_dimension_numbers<[1], [0], [0], [1], [0, 0, 1, 1], [], []>} : vector<64x128xbf16>, vector<128x128xbf16>, vector<64x128xf32> -> vector<64x128xf32>
    %27 = arith.addf %21, %26 : vector<64x128xf32>
    %c0_33 = arith.constant 0 : index
    %c1_34 = arith.constant 1 : index
    %c8_35 = arith.constant 8 : index
    %c0_36 = arith.constant 0 : index
    %28 = vector.load %arg3[%c0_33, %c1_34, %c8_35, %c0_36] : memref<1x3x80x128xbf16, #tpu.memory_space<vmem>>, vector<1x1x64x128xbf16>
    %29 = vector.shape_cast %28 : vector<1x1x64x128xbf16> to vector<64x128xbf16>
    %c1_37 = arith.constant 1 : index
    %c1_38 = arith.constant 1 : index
    %c0_39 = arith.constant 0 : index
    %c0_40 = arith.constant 0 : index
    %30 = vector.load %arg4[%c1_37, %c1_38, %c0_39, %c0_40] : memref<3x3x128x128xbf16, #tpu.memory_space<vmem>>, vector<1x1x128x128xbf16>
    %31 = vector.shape_cast %30 : vector<1x1x128x128xbf16> to vector<128x128xbf16>
    %cst_41 = arith.constant dense<0.000000e+00> : vector<64x128xf32>
    %32 = tpu.matmul %29, %31, %cst_41 {dimension_numbers = #tpu.dot_dimension_numbers<[1], [0], [0], [1], [0, 0, 1, 1], [], []>} : vector<64x128xbf16>, vector<128x128xbf16>, vector<64x128xf32> -> vector<64x128xf32>
    %33 = arith.addf %27, %32 : vector<64x128xf32>
    %c0_42 = arith.constant 0 : index
    %c2_43 = arith.constant 2 : index
    %c8_44 = arith.constant 8 : index
    %c0_45 = arith.constant 0 : index
    %34 = vector.load %arg3[%c0_42, %c2_43, %c8_44, %c0_45] : memref<1x3x80x128xbf16, #tpu.memory_space<vmem>>, vector<1x1x64x128xbf16>
    %35 = vector.shape_cast %34 : vector<1x1x64x128xbf16> to vector<64x128xbf16>
    %c1_46 = arith.constant 1 : index
    %c2_47 = arith.constant 2 : index
    %c0_48 = arith.constant 0 : index
    %c0_49 = arith.constant 0 : index
    %36 = vector.load %arg4[%c1_46, %c2_47, %c0_48, %c0_49] : memref<3x3x128x128xbf16, #tpu.memory_space<vmem>>, vector<1x1x128x128xbf16>
    %37 = vector.shape_cast %36 : vector<1x1x128x128xbf16> to vector<128x128xbf16>
    %cst_50 = arith.constant dense<0.000000e+00> : vector<64x128xf32>
    %38 = tpu.matmul %35, %37, %cst_50 {dimension_numbers = #tpu.dot_dimension_numbers<[1], [0], [0], [1], [0, 0, 1, 1], [], []>} : vector<64x128xbf16>, vector<128x128xbf16>, vector<64x128xf32> -> vector<64x128xf32>
    %39 = arith.addf %33, %38 : vector<64x128xf32>
    %c0_51 = arith.constant 0 : index
    %c0_52 = arith.constant 0 : index
    %c16 = arith.constant 16 : index
    %c0_53 = arith.constant 0 : index
    %40 = vector.load %arg3[%c0_51, %c0_52, %c16, %c0_53] : memref<1x3x80x128xbf16, #tpu.memory_space<vmem>>, vector<1x1x64x128xbf16>
    %41 = vector.shape_cast %40 : vector<1x1x64x128xbf16> to vector<64x128xbf16>
    %c2_54 = arith.constant 2 : index
    %c0_55 = arith.constant 0 : index
    %c0_56 = arith.constant 0 : index
    %c0_57 = arith.constant 0 : index
    %42 = vector.load %arg4[%c2_54, %c0_55, %c0_56, %c0_57] : memref<3x3x128x128xbf16, #tpu.memory_space<vmem>>, vector<1x1x128x128xbf16>
    %43 = vector.shape_cast %42 : vector<1x1x128x128xbf16> to vector<128x128xbf16>
    %cst_58 = arith.constant dense<0.000000e+00> : vector<64x128xf32>
    %44 = tpu.matmul %41, %43, %cst_58 {dimension_numbers = #tpu.dot_dimension_numbers<[1], [0], [0], [1], [0, 0, 1, 1], [], []>} : vector<64x128xbf16>, vector<128x128xbf16>, vector<64x128xf32> -> vector<64x128xf32>
    %45 = arith.addf %39, %44 : vector<64x128xf32>
    %c0_59 = arith.constant 0 : index
    %c1_60 = arith.constant 1 : index
    %c16_61 = arith.constant 16 : index
    %c0_62 = arith.constant 0 : index
    %46 = vector.load %arg3[%c0_59, %c1_60, %c16_61, %c0_62] : memref<1x3x80x128xbf16, #tpu.memory_space<vmem>>, vector<1x1x64x128xbf16>
    %47 = vector.shape_cast %46 : vector<1x1x64x128xbf16> to vector<64x128xbf16>
    %c2_63 = arith.constant 2 : index
    %c1_64 = arith.constant 1 : index
    %c0_65 = arith.constant 0 : index
    %c0_66 = arith.constant 0 : index
    %48 = vector.load %arg4[%c2_63, %c1_64, %c0_65, %c0_66] : memref<3x3x128x128xbf16, #tpu.memory_space<vmem>>, vector<1x1x128x128xbf16>
    %49 = vector.shape_cast %48 : vector<1x1x128x128xbf16> to vector<128x128xbf16>
    %cst_67 = arith.constant dense<0.000000e+00> : vector<64x128xf32>
    %50 = tpu.matmul %47, %49, %cst_67 {dimension_numbers = #tpu.dot_dimension_numbers<[1], [0], [0], [1], [0, 0, 1, 1], [], []>} : vector<64x128xbf16>, vector<128x128xbf16>, vector<64x128xf32> -> vector<64x128xf32>
    %51 = arith.addf %45, %50 : vector<64x128xf32>
    %c0_68 = arith.constant 0 : index
    %c2_69 = arith.constant 2 : index
    %c16_70 = arith.constant 16 : index
    %c0_71 = arith.constant 0 : index
    %52 = vector.load %arg3[%c0_68, %c2_69, %c16_70, %c0_71] : memref<1x3x80x128xbf16, #tpu.memory_space<vmem>>, vector<1x1x64x128xbf16>
    %53 = vector.shape_cast %52 : vector<1x1x64x128xbf16> to vector<64x128xbf16>
    %c2_72 = arith.constant 2 : index
    %c2_73 = arith.constant 2 : index
    %c0_74 = arith.constant 0 : index
    %c0_75 = arith.constant 0 : index
    %54 = vector.load %arg4[%c2_72, %c2_73, %c0_74, %c0_75] : memref<3x3x128x128xbf16, #tpu.memory_space<vmem>>, vector<1x1x128x128xbf16>
    %55 = vector.shape_cast %54 : vector<1x1x128x128xbf16> to vector<128x128xbf16>
    %cst_76 = arith.constant dense<0.000000e+00> : vector<64x128xf32>
    %56 = tpu.matmul %53, %55, %cst_76 {dimension_numbers = #tpu.dot_dimension_numbers<[1], [0], [0], [1], [0, 0, 1, 1], [], []>} : vector<64x128xbf16>, vector<128x128xbf16>, vector<64x128xf32> -> vector<64x128xf32>
    %57 = arith.addf %51, %56 : vector<64x128xf32>
    %c0_77 = arith.constant 0 : index
    %c0_78 = arith.constant 0 : index
    %c0_79 = arith.constant 0 : index
    %58 = vector.load %arg9[%c0_77, %c0_78, %c0_79] : memref<1x64x128xf32, #tpu.memory_space<vmem>>, vector<1x64x128xf32>
    %59 = vector.shape_cast %58 : vector<1x64x128xf32> to vector<64x128xf32>
    %60 = arith.addf %59, %57 : vector<64x128xf32>
    %c0_80 = arith.constant 0 : index
    %c0_81 = arith.constant 0 : index
    %c0_82 = arith.constant 0 : index
    %61 = vector.load %arg9[%c0_80, %c0_81, %c0_82] : memref<1x64x128xf32, #tpu.memory_space<vmem>>, vector<1x64x128xf32>
    %62 = vector.shape_cast %61 : vector<1x64x128xf32> to vector<64x128xf32>
    %63 = vector.shape_cast %60 : vector<64x128xf32> to vector<1x64x128xf32>
    tpu.vector_store %arg9[%c0_80, %c0_81, %c0_82], %63 {strides = array<i32>} : memref<1x64x128xf32, #tpu.memory_space<vmem>>, vector<1x64x128xf32>,
    %c0_i32_83 = arith.constant 0 : i32
    %64 = arith.cmpi eq, %arg2, %c0_i32_83 : i32
    %65 = arith.extui %64 : i1 to i32
    %c0_i32_84 = arith.constant 0 : i32
    %66 = arith.cmpi ne, %65, %c0_i32_84 : i32
    scf.if %66 {
      %c0_85 = arith.constant 0 : index
      %c0_86 = arith.constant 0 : index
      %c0_87 = arith.constant 0 : index
      %67 = vector.load %arg9[%c0_85, %c0_86, %c0_87] : memref<1x64x128xf32, #tpu.memory_space<vmem>>, vector<1x64x128xf32>
      %68 = vector.shape_cast %67 : vector<1x64x128xf32> to vector<64x128xf32>
      %c0_88 = arith.constant 0 : index
      %c0_89 = arith.constant 0 : index
      %69 = vector.load %arg5[%c0_88, %c0_89] : memref<1x128xf32, #tpu.memory_space<vmem>>, vector<1x128xf32>
      %70 = vector.broadcast %69 : vector<1x128xf32> to vector<64x128xf32>
      %71 = arith.addf %68, %70 : vector<64x128xf32>
      %c0_90 = arith.constant 0 : index
      %c0_91 = arith.constant 0 : index
      %c0_92 = arith.constant 0 : index
      %72 = vector.load %arg6[%c0_90, %c0_91, %c0_92] : memref<1x64x128xf32, #tpu.memory_space<vmem>>, vector<1x64x128xf32>
      %73 = vector.shape_cast %72 : vector<1x64x128xf32> to vector<64x128xf32>
      %c0_93 = arith.constant 0 : index
      %c0_94 = arith.constant 0 : index
      %74 = vector.load %arg7[%c0_93, %c0_94] : memref<1x128xf32, #tpu.memory_space<vmem>>, vector<1x128xf32>
      %75 = vector.broadcast %74 : vector<1x128xf32> to vector<64x128xf32>
      %76 = arith.mulf %73, %75 : vector<64x128xf32>
      %77 = arith.addf %71, %76 : vector<64x128xf32>
      %c0_95 = arith.constant 0 : index
      %c0_96 = arith.constant 0 : index
      %78 = vector.load %arg8[%c0_95, %c0_96] : memref<1x128xf32, #tpu.memory_space<vmem>>, vector<1x128xf32>
      %79 = vector.broadcast %78 : vector<1x128xf32> to vector<64x128xf32>
      %80 = arith.addf %77, %79 : vector<64x128xf32>
      %c0_97 = arith.constant 0 : index
      %c0_98 = arith.constant 0 : index
      %c0_99 = arith.constant 0 : index
      %81 = vector.load %arg9[%c0_97, %c0_98, %c0_99] : memref<1x64x128xf32, #tpu.memory_space<vmem>>, vector<1x64x128xf32>
      %82 = vector.shape_cast %81 : vector<1x64x128xf32> to vector<64x128xf32>
      %83 = vector.shape_cast %80 : vector<64x128xf32> to vector<1x64x128xf32>
      tpu.vector_store %arg9[%c0_97, %c0_98, %c0_99], %83 {strides = array<i32>} : memref<1x64x128xf32, #tpu.memory_space<vmem>>, vector<1x64x128xf32>,
    } else {
    }
    return
  }
  func.func @transform_0(%arg0: i32, %arg1: i32, %arg2: i32) -> (i32, i32, i32, i32) {
    %c0_i32 = arith.constant 0 : i32
    %c0_i32_0 = arith.constant 0 : i32
    %c0_i32_1 = arith.constant 0 : i32
    return %arg0, %c0_i32, %c0_i32_0, %arg2 : i32, i32, i32, i32
  }
  func.func @transform_1(%arg0: i32, %arg1: i32, %arg2: i32) -> (i32, i32, i32, i32) {
    %c0_i32 = arith.constant 0 : i32
    %c0_i32_0 = arith.constant 0 : i32
    %c0_i32_1 = arith.constant 0 : i32
    return %c0_i32, %c0_i32_0, %arg2, %arg1 : i32, i32, i32, i32
  }
  func.func @transform_2(%arg0: i32, %arg1: i32, %arg2: i32) -> (i32, i32) {
    %c0_i32 = arith.constant 0 : i32
    %c0_i32_0 = arith.constant 0 : i32
    return %c0_i32, %arg1 : i32, i32
  }
  func.func @transform_3(%arg0: i32, %arg1: i32, %arg2: i32) -> (i32, i32, i32) {
    %c0_i32 = arith.constant 0 : i32
    %c0_i32_0 = arith.constant 0 : i32
    return %arg0, %c0_i32, %arg1 : i32, i32, i32
  }
  func.func @transform_4(%arg0: i32, %arg1: i32, %arg2: i32) -> (i32, i32) {
    %c0_i32 = arith.constant 0 : i32
    %c0_i32_0 = arith.constant 0 : i32
    return %c0_i32, %arg1 : i32, i32
  }
  func.func @transform_5(%arg0: i32, %arg1: i32, %arg2: i32) -> (i32, i32) {
    %c0_i32 = arith.constant 0 : i32
    %c0_i32_0 = arith.constant 0 : i32
    return %c0_i32, %arg1 : i32, i32
  }
  func.func @transform_6(%arg0: i32, %arg1: i32, %arg2: i32) -> (i32, i32, i32) {
    %c0_i32 = arith.constant 0 : i32
    %c0_i32_0 = arith.constant 0 : i32
    return %arg0, %c0_i32, %arg1 : i32, i32, i32
  }
}

module attributes {stable_mosaic.version = 11 : i64} {
  func.func @_matmul_kernel(%arg0: i32, %arg1: i32, %arg2: i32, %arg3: memref<32x128xbf16, #tpu.memory_space<vmem>>, %arg4: memref<128x256xbf16, #tpu.memory_space<vmem>>, %arg5: memref<1x256xf32, #tpu.memory_space<vmem>>, %arg6: memref<32x256xf32, #tpu.memory_space<vmem>>) attributes {dimension_semantics = [#tpu.dimension_semantics<parallel>, #tpu.dimension_semantics<parallel>, #tpu.dimension_semantics<arbitrary>], iteration_bounds = array<i64: 1, 1, 1>, scalar_prefetch = 0 : i64, scratch_operands = 0 : i64, tpu.core_type = #tpu.core_type<tc>, window_params = [{transform_indices = @transform_0, window_bounds = array<i64: 32, 128>}, {transform_indices = @transform_1, window_bounds = array<i64: 128, 256>}, {transform_indices = @transform_2, window_bounds = array<i64: 1, 256>}, {transform_indices = @transform_3, window_bounds = array<i64: 32, 256>}]} {
    %c0_i32 = arith.constant 0 : i32
    %0 = arith.cmpi eq, %arg2, %c0_i32 : i32
    %1 = arith.extui %0 : i1 to i32
    %c0_i32_0 = arith.constant 0 : i32
    %2 = arith.cmpi ne, %1, %c0_i32_0 : i32
    scf.if %2 {
      %cst_10 = arith.constant 0.000000e+00 : f32
      %12 = vector.broadcast %cst_10 : f32 to vector<32x256xf32>
      %c0_11 = arith.constant 0 : index
      %c0_12 = arith.constant 0 : index
      %13 = vector.load %arg6[%c0_11, %c0_12] : memref<32x256xf32, #tpu.memory_space<vmem>>, vector<32x256xf32>
      tpu.vector_store %arg6[%c0_11, %c0_12], %12 {strides = array<i32>} : memref<32x256xf32, #tpu.memory_space<vmem>>, vector<32x256xf32>,
    } else {
    }
    %c0 = arith.constant 0 : index
    %c0_1 = arith.constant 0 : index
    %3 = vector.load %arg6[%c0, %c0_1] : memref<32x256xf32, #tpu.memory_space<vmem>>, vector<32x256xf32>
    %c0_2 = arith.constant 0 : index
    %c0_3 = arith.constant 0 : index
    %4 = vector.load %arg3[%c0_2, %c0_3] : memref<32x128xbf16, #tpu.memory_space<vmem>>, vector<32x128xbf16>
    %c0_4 = arith.constant 0 : index
    %c0_5 = arith.constant 0 : index
    %5 = vector.load %arg4[%c0_4, %c0_5] : memref<128x256xbf16, #tpu.memory_space<vmem>>, vector<128x256xbf16>
    %cst = arith.constant dense<0.000000e+00> : vector<32x256xf32>
    %6 = tpu.matmul %4, %5, %cst {dimension_numbers = #tpu.dot_dimension_numbers<[1], [0], [0], [1], [0, 0, 1, 1], [], []>} : vector<32x128xbf16>, vector<128x256xbf16>, vector<32x256xf32> -> vector<32x256xf32>
    %7 = arith.addf %3, %6 : vector<32x256xf32>
    %c0_6 = arith.constant 0 : index
    %c0_7 = arith.constant 0 : index
    %8 = vector.load %arg6[%c0_6, %c0_7] : memref<32x256xf32, #tpu.memory_space<vmem>>, vector<32x256xf32>
    tpu.vector_store %arg6[%c0_6, %c0_7], %7 {strides = array<i32>} : memref<32x256xf32, #tpu.memory_space<vmem>>, vector<32x256xf32>,
    %c0_i32_8 = arith.constant 0 : i32
    %9 = arith.cmpi eq, %arg2, %c0_i32_8 : i32
    %10 = arith.extui %9 : i1 to i32
    %c0_i32_9 = arith.constant 0 : i32
    %11 = arith.cmpi ne, %10, %c0_i32_9 : i32
    scf.if %11 {
      %c0_10 = arith.constant 0 : index
      %c0_11 = arith.constant 0 : index
      %12 = vector.load %arg6[%c0_10, %c0_11] : memref<32x256xf32, #tpu.memory_space<vmem>>, vector<32x256xf32>
      %c0_12 = arith.constant 0 : index
      %c0_13 = arith.constant 0 : index
      %13 = vector.load %arg5[%c0_12, %c0_13] : memref<1x256xf32, #tpu.memory_space<vmem>>, vector<1x256xf32>
      %14 = vector.broadcast %13 : vector<1x256xf32> to vector<32x256xf32>
      %15 = arith.addf %12, %14 : vector<32x256xf32>
      %c0_14 = arith.constant 0 : index
      %c0_15 = arith.constant 0 : index
      %16 = vector.load %arg6[%c0_14, %c0_15] : memref<32x256xf32, #tpu.memory_space<vmem>>, vector<32x256xf32>
      tpu.vector_store %arg6[%c0_14, %c0_15], %15 {strides = array<i32>} : memref<32x256xf32, #tpu.memory_space<vmem>>, vector<32x256xf32>,
    } else {
    }
    return
  }
  func.func @transform_0(%arg0: i32, %arg1: i32, %arg2: i32) -> (i32, i32) {
    %c0_i32 = arith.constant 0 : i32
    return %arg0, %arg2 : i32, i32
  }
  func.func @transform_1(%arg0: i32, %arg1: i32, %arg2: i32) -> (i32, i32) {
    %c0_i32 = arith.constant 0 : i32
    return %arg2, %arg1 : i32, i32
  }
  func.func @transform_2(%arg0: i32, %arg1: i32, %arg2: i32) -> (i32, i32) {
    %c0_i32 = arith.constant 0 : i32
    %c0_i32_0 = arith.constant 0 : i32
    return %c0_i32, %arg1 : i32, i32
  }
  func.func @transform_3(%arg0: i32, %arg1: i32, %arg2: i32) -> (i32, i32) {
    %c0_i32 = arith.constant 0 : i32
    return %arg0, %arg1 : i32, i32
  }
}

module attributes {stable_mosaic.version = 11 : i64} {
  func.func @_conv3x3_kernel(%arg0: i32, %arg1: i32, %arg2: i32, %arg3: memref<1x3x24x128xbf16, #tpu.memory_space<vmem>>, %arg4: memref<3x3x128x256xbf16, #tpu.memory_space<vmem>>, %arg5: memref<1x256xf32, #tpu.memory_space<vmem>>, %arg6: memref<1x16x256xf32, #tpu.memory_space<vmem>>) attributes {dimension_semantics = [#tpu.dimension_semantics<parallel>, #tpu.dimension_semantics<parallel>, #tpu.dimension_semantics<arbitrary>], iteration_bounds = array<i64: 2, 1, 1>, scalar_prefetch = 0 : i64, scratch_operands = 0 : i64, tpu.core_type = #tpu.core_type<tc>, window_params = [{transform_indices = @transform_0, window_bounds = array<i64: 1, 3, 24, 128>}, {transform_indices = @transform_1, window_bounds = array<i64: 3, 3, 128, 256>}, {transform_indices = @transform_2, window_bounds = array<i64: 1, 256>}, {transform_indices = @transform_3, window_bounds = array<i64: 1, 16, 256>}]} {
    %c0_i32 = arith.constant 0 : i32
    %0 = arith.cmpi eq, %arg2, %c0_i32 : i32
    %1 = arith.extui %0 : i1 to i32
    %c0_i32_0 = arith.constant 0 : i32
    %2 = arith.cmpi ne, %1, %c0_i32_0 : i32
    scf.if %2 {
      %cst_85 = arith.constant 0.000000e+00 : f32
      %67 = vector.broadcast %cst_85 : f32 to vector<1x16x256xf32>
      %c0_86 = arith.constant 0 : index
      %c0_87 = arith.constant 0 : index
      %c0_88 = arith.constant 0 : index
      %68 = vector.load %arg6[%c0_86, %c0_87, %c0_88] : memref<1x16x256xf32, #tpu.memory_space<vmem>>, vector<1x16x256xf32>
      tpu.vector_store %arg6[%c0_86, %c0_87, %c0_88], %67 {strides = array<i32>} : memref<1x16x256xf32, #tpu.memory_space<vmem>>, vector<1x16x256xf32>,
    } else {
    }
    %cst = arith.constant 0.000000e+00 : f32
    %3 = vector.broadcast %cst : f32 to vector<16x256xf32>
    %c0 = arith.constant 0 : index
    %c0_1 = arith.constant 0 : index
    %c0_2 = arith.constant 0 : index
    %c0_3 = arith.constant 0 : index
    %4 = vector.load %arg3[%c0, %c0_1, %c0_2, %c0_3] : memref<1x3x24x128xbf16, #tpu.memory_space<vmem>>, vector<1x1x16x128xbf16>
    %5 = vector.shape_cast %4 : vector<1x1x16x128xbf16> to vector<16x128xbf16>
    %c0_4 = arith.constant 0 : index
    %c0_5 = arith.constant 0 : index
    %c0_6 = arith.constant 0 : index
    %c0_7 = arith.constant 0 : index
    %6 = vector.load %arg4[%c0_4, %c0_5, %c0_6, %c0_7] : memref<3x3x128x256xbf16, #tpu.memory_space<vmem>>, vector<1x1x128x256xbf16>
    %7 = vector.shape_cast %6 : vector<1x1x128x256xbf16> to vector<128x256xbf16>
    %cst_8 = arith.constant dense<0.000000e+00> : vector<16x256xf32>
    %8 = tpu.matmul %5, %7, %cst_8 {dimension_numbers = #tpu.dot_dimension_numbers<[1], [0], [0], [1], [0, 0, 1, 1], [], []>} : vector<16x128xbf16>, vector<128x256xbf16>, vector<16x256xf32> -> vector<16x256xf32>
    %9 = arith.addf %3, %8 : vector<16x256xf32>
    %c0_9 = arith.constant 0 : index
    %c1 = arith.constant 1 : index
    %c0_10 = arith.constant 0 : index
    %c0_11 = arith.constant 0 : index
    %10 = vector.load %arg3[%c0_9, %c1, %c0_10, %c0_11] : memref<1x3x24x128xbf16, #tpu.memory_space<vmem>>, vector<1x1x16x128xbf16>
    %11 = vector.shape_cast %10 : vector<1x1x16x128xbf16> to vector<16x128xbf16>
    %c0_12 = arith.constant 0 : index
    %c1_13 = arith.constant 1 : index
    %c0_14 = arith.constant 0 : index
    %c0_15 = arith.constant 0 : index
    %12 = vector.load %arg4[%c0_12, %c1_13, %c0_14, %c0_15] : memref<3x3x128x256xbf16, #tpu.memory_space<vmem>>, vector<1x1x128x256xbf16>
    %13 = vector.shape_cast %12 : vector<1x1x128x256xbf16> to vector<128x256xbf16>
    %cst_16 = arith.constant dense<0.000000e+00> : vector<16x256xf32>
    %14 = tpu.matmul %11, %13, %cst_16 {dimension_numbers = #tpu.dot_dimension_numbers<[1], [0], [0], [1], [0, 0, 1, 1], [], []>} : vector<16x128xbf16>, vector<128x256xbf16>, vector<16x256xf32> -> vector<16x256xf32>
    %15 = arith.addf %9, %14 : vector<16x256xf32>
    %c0_17 = arith.constant 0 : index
    %c2 = arith.constant 2 : index
    %c0_18 = arith.constant 0 : index
    %c0_19 = arith.constant 0 : index
    %16 = vector.load %arg3[%c0_17, %c2, %c0_18, %c0_19] : memref<1x3x24x128xbf16, #tpu.memory_space<vmem>>, vector<1x1x16x128xbf16>
    %17 = vector.shape_cast %16 : vector<1x1x16x128xbf16> to vector<16x128xbf16>
    %c0_20 = arith.constant 0 : index
    %c2_21 = arith.constant 2 : index
    %c0_22 = arith.constant 0 : index
    %c0_23 = arith.constant 0 : index
    %18 = vector.load %arg4[%c0_20, %c2_21, %c0_22, %c0_23] : memref<3x3x128x256xbf16, #tpu.memory_space<vmem>>, vector<1x1x128x256xbf16>
    %19 = vector.shape_cast %18 : vector<1x1x128x256xbf16> to vector<128x256xbf16>
    %cst_24 = arith.constant dense<0.000000e+00> : vector<16x256xf32>
    %20 = tpu.matmul %17, %19, %cst_24 {dimension_numbers = #tpu.dot_dimension_numbers<[1], [0], [0], [1], [0, 0, 1, 1], [], []>} : vector<16x128xbf16>, vector<128x256xbf16>, vector<16x256xf32> -> vector<16x256xf32>
    %21 = arith.addf %15, %20 : vector<16x256xf32>
    %c0_25 = arith.constant 0 : index
    %c0_26 = arith.constant 0 : index
    %c4 = arith.constant 4 : index
    %c0_27 = arith.constant 0 : index
    %22 = vector.load %arg3[%c0_25, %c0_26, %c4, %c0_27] : memref<1x3x24x128xbf16, #tpu.memory_space<vmem>>, vector<1x1x16x128xbf16>
    %23 = vector.shape_cast %22 : vector<1x1x16x128xbf16> to vector<16x128xbf16>
    %c1_28 = arith.constant 1 : index
    %c0_29 = arith.constant 0 : index
    %c0_30 = arith.constant 0 : index
    %c0_31 = arith.constant 0 : index
    %24 = vector.load %arg4[%c1_28, %c0_29, %c0_30, %c0_31] : memref<3x3x128x256xbf16, #tpu.memory_space<vmem>>, vector<1x1x128x256xbf16>
    %25 = vector.shape_cast %24 : vector<1x1x128x256xbf16> to vector<128x256xbf16>
    %cst_32 = arith.constant dense<0.000000e+00> : vector<16x256xf32>
    %26 = tpu.matmul %23, %25, %cst_32 {dimension_numbers = #tpu.dot_dimension_numbers<[1], [0], [0], [1], [0, 0, 1, 1], [], []>} : vector<16x128xbf16>, vector<128x256xbf16>, vector<16x256xf32> -> vector<16x256xf32>
    %27 = arith.addf %21, %26 : vector<16x256xf32>
    %c0_33 = arith.constant 0 : index
    %c1_34 = arith.constant 1 : index
    %c4_35 = arith.constant 4 : index
    %c0_36 = arith.constant 0 : index
    %28 = vector.load %arg3[%c0_33, %c1_34, %c4_35, %c0_36] : memref<1x3x24x128xbf16, #tpu.memory_space<vmem>>, vector<1x1x16x128xbf16>
    %29 = vector.shape_cast %28 : vector<1x1x16x128xbf16> to vector<16x128xbf16>
    %c1_37 = arith.constant 1 : index
    %c1_38 = arith.constant 1 : index
    %c0_39 = arith.constant 0 : index
    %c0_40 = arith.constant 0 : index
    %30 = vector.load %arg4[%c1_37, %c1_38, %c0_39, %c0_40] : memref<3x3x128x256xbf16, #tpu.memory_space<vmem>>, vector<1x1x128x256xbf16>
    %31 = vector.shape_cast %30 : vector<1x1x128x256xbf16> to vector<128x256xbf16>
    %cst_41 = arith.constant dense<0.000000e+00> : vector<16x256xf32>
    %32 = tpu.matmul %29, %31, %cst_41 {dimension_numbers = #tpu.dot_dimension_numbers<[1], [0], [0], [1], [0, 0, 1, 1], [], []>} : vector<16x128xbf16>, vector<128x256xbf16>, vector<16x256xf32> -> vector<16x256xf32>
    %33 = arith.addf %27, %32 : vector<16x256xf32>
    %c0_42 = arith.constant 0 : index
    %c2_43 = arith.constant 2 : index
    %c4_44 = arith.constant 4 : index
    %c0_45 = arith.constant 0 : index
    %34 = vector.load %arg3[%c0_42, %c2_43, %c4_44, %c0_45] : memref<1x3x24x128xbf16, #tpu.memory_space<vmem>>, vector<1x1x16x128xbf16>
    %35 = vector.shape_cast %34 : vector<1x1x16x128xbf16> to vector<16x128xbf16>
    %c1_46 = arith.constant 1 : index
    %c2_47 = arith.constant 2 : index
    %c0_48 = arith.constant 0 : index
    %c0_49 = arith.constant 0 : index
    %36 = vector.load %arg4[%c1_46, %c2_47, %c0_48, %c0_49] : memref<3x3x128x256xbf16, #tpu.memory_space<vmem>>, vector<1x1x128x256xbf16>
    %37 = vector.shape_cast %36 : vector<1x1x128x256xbf16> to vector<128x256xbf16>
    %cst_50 = arith.constant dense<0.000000e+00> : vector<16x256xf32>
    %38 = tpu.matmul %35, %37, %cst_50 {dimension_numbers = #tpu.dot_dimension_numbers<[1], [0], [0], [1], [0, 0, 1, 1], [], []>} : vector<16x128xbf16>, vector<128x256xbf16>, vector<16x256xf32> -> vector<16x256xf32>
    %39 = arith.addf %33, %38 : vector<16x256xf32>
    %c0_51 = arith.constant 0 : index
    %c0_52 = arith.constant 0 : index
    %c8 = arith.constant 8 : index
    %c0_53 = arith.constant 0 : index
    %40 = vector.load %arg3[%c0_51, %c0_52, %c8, %c0_53] : memref<1x3x24x128xbf16, #tpu.memory_space<vmem>>, vector<1x1x16x128xbf16>
    %41 = vector.shape_cast %40 : vector<1x1x16x128xbf16> to vector<16x128xbf16>
    %c2_54 = arith.constant 2 : index
    %c0_55 = arith.constant 0 : index
    %c0_56 = arith.constant 0 : index
    %c0_57 = arith.constant 0 : index
    %42 = vector.load %arg4[%c2_54, %c0_55, %c0_56, %c0_57] : memref<3x3x128x256xbf16, #tpu.memory_space<vmem>>, vector<1x1x128x256xbf16>
    %43 = vector.shape_cast %42 : vector<1x1x128x256xbf16> to vector<128x256xbf16>
    %cst_58 = arith.constant dense<0.000000e+00> : vector<16x256xf32>
    %44 = tpu.matmul %41, %43, %cst_58 {dimension_numbers = #tpu.dot_dimension_numbers<[1], [0], [0], [1], [0, 0, 1, 1], [], []>} : vector<16x128xbf16>, vector<128x256xbf16>, vector<16x256xf32> -> vector<16x256xf32>
    %45 = arith.addf %39, %44 : vector<16x256xf32>
    %c0_59 = arith.constant 0 : index
    %c1_60 = arith.constant 1 : index
    %c8_61 = arith.constant 8 : index
    %c0_62 = arith.constant 0 : index
    %46 = vector.load %arg3[%c0_59, %c1_60, %c8_61, %c0_62] : memref<1x3x24x128xbf16, #tpu.memory_space<vmem>>, vector<1x1x16x128xbf16>
    %47 = vector.shape_cast %46 : vector<1x1x16x128xbf16> to vector<16x128xbf16>
    %c2_63 = arith.constant 2 : index
    %c1_64 = arith.constant 1 : index
    %c0_65 = arith.constant 0 : index
    %c0_66 = arith.constant 0 : index
    %48 = vector.load %arg4[%c2_63, %c1_64, %c0_65, %c0_66] : memref<3x3x128x256xbf16, #tpu.memory_space<vmem>>, vector<1x1x128x256xbf16>
    %49 = vector.shape_cast %48 : vector<1x1x128x256xbf16> to vector<128x256xbf16>
    %cst_67 = arith.constant dense<0.000000e+00> : vector<16x256xf32>
    %50 = tpu.matmul %47, %49, %cst_67 {dimension_numbers = #tpu.dot_dimension_numbers<[1], [0], [0], [1], [0, 0, 1, 1], [], []>} : vector<16x128xbf16>, vector<128x256xbf16>, vector<16x256xf32> -> vector<16x256xf32>
    %51 = arith.addf %45, %50 : vector<16x256xf32>
    %c0_68 = arith.constant 0 : index
    %c2_69 = arith.constant 2 : index
    %c8_70 = arith.constant 8 : index
    %c0_71 = arith.constant 0 : index
    %52 = vector.load %arg3[%c0_68, %c2_69, %c8_70, %c0_71] : memref<1x3x24x128xbf16, #tpu.memory_space<vmem>>, vector<1x1x16x128xbf16>
    %53 = vector.shape_cast %52 : vector<1x1x16x128xbf16> to vector<16x128xbf16>
    %c2_72 = arith.constant 2 : index
    %c2_73 = arith.constant 2 : index
    %c0_74 = arith.constant 0 : index
    %c0_75 = arith.constant 0 : index
    %54 = vector.load %arg4[%c2_72, %c2_73, %c0_74, %c0_75] : memref<3x3x128x256xbf16, #tpu.memory_space<vmem>>, vector<1x1x128x256xbf16>
    %55 = vector.shape_cast %54 : vector<1x1x128x256xbf16> to vector<128x256xbf16>
    %cst_76 = arith.constant dense<0.000000e+00> : vector<16x256xf32>
    %56 = tpu.matmul %53, %55, %cst_76 {dimension_numbers = #tpu.dot_dimension_numbers<[1], [0], [0], [1], [0, 0, 1, 1], [], []>} : vector<16x128xbf16>, vector<128x256xbf16>, vector<16x256xf32> -> vector<16x256xf32>
    %57 = arith.addf %51, %56 : vector<16x256xf32>
    %c0_77 = arith.constant 0 : index
    %c0_78 = arith.constant 0 : index
    %c0_79 = arith.constant 0 : index
    %58 = vector.load %arg6[%c0_77, %c0_78, %c0_79] : memref<1x16x256xf32, #tpu.memory_space<vmem>>, vector<1x16x256xf32>
    %59 = vector.shape_cast %58 : vector<1x16x256xf32> to vector<16x256xf32>
    %60 = arith.addf %59, %57 : vector<16x256xf32>
    %c0_80 = arith.constant 0 : index
    %c0_81 = arith.constant 0 : index
    %c0_82 = arith.constant 0 : index
    %61 = vector.load %arg6[%c0_80, %c0_81, %c0_82] : memref<1x16x256xf32, #tpu.memory_space<vmem>>, vector<1x16x256xf32>
    %62 = vector.shape_cast %61 : vector<1x16x256xf32> to vector<16x256xf32>
    %63 = vector.shape_cast %60 : vector<16x256xf32> to vector<1x16x256xf32>
    tpu.vector_store %arg6[%c0_80, %c0_81, %c0_82], %63 {strides = array<i32>} : memref<1x16x256xf32, #tpu.memory_space<vmem>>, vector<1x16x256xf32>,
    %c0_i32_83 = arith.constant 0 : i32
    %64 = arith.cmpi eq, %arg2, %c0_i32_83 : i32
    %65 = arith.extui %64 : i1 to i32
    %c0_i32_84 = arith.constant 0 : i32
    %66 = arith.cmpi ne, %65, %c0_i32_84 : i32
    scf.if %66 {
      %c0_85 = arith.constant 0 : index
      %c0_86 = arith.constant 0 : index
      %c0_87 = arith.constant 0 : index
      %67 = vector.load %arg6[%c0_85, %c0_86, %c0_87] : memref<1x16x256xf32, #tpu.memory_space<vmem>>, vector<1x16x256xf32>
      %68 = vector.shape_cast %67 : vector<1x16x256xf32> to vector<16x256xf32>
      %c0_88 = arith.constant 0 : index
      %c0_89 = arith.constant 0 : index
      %69 = vector.load %arg5[%c0_88, %c0_89] : memref<1x256xf32, #tpu.memory_space<vmem>>, vector<1x256xf32>
      %70 = vector.broadcast %69 : vector<1x256xf32> to vector<16x256xf32>
      %71 = arith.addf %68, %70 : vector<16x256xf32>
      %c0_90 = arith.constant 0 : index
      %c0_91 = arith.constant 0 : index
      %c0_92 = arith.constant 0 : index
      %72 = vector.load %arg6[%c0_90, %c0_91, %c0_92] : memref<1x16x256xf32, #tpu.memory_space<vmem>>, vector<1x16x256xf32>
      %73 = vector.shape_cast %72 : vector<1x16x256xf32> to vector<16x256xf32>
      %74 = vector.shape_cast %71 : vector<16x256xf32> to vector<1x16x256xf32>
      tpu.vector_store %arg6[%c0_90, %c0_91, %c0_92], %74 {strides = array<i32>} : memref<1x16x256xf32, #tpu.memory_space<vmem>>, vector<1x16x256xf32>,
    } else {
    }
    return
  }
  func.func @transform_0(%arg0: i32, %arg1: i32, %arg2: i32) -> (i32, i32, i32, i32) {
    %c0_i32 = arith.constant 0 : i32
    %c0_i32_0 = arith.constant 0 : i32
    %c0_i32_1 = arith.constant 0 : i32
    return %arg0, %c0_i32, %c0_i32_0, %arg2 : i32, i32, i32, i32
  }
  func.func @transform_1(%arg0: i32, %arg1: i32, %arg2: i32) -> (i32, i32, i32, i32) {
    %c0_i32 = arith.constant 0 : i32
    %c0_i32_0 = arith.constant 0 : i32
    %c0_i32_1 = arith.constant 0 : i32
    return %c0_i32, %c0_i32_0, %arg2, %arg1 : i32, i32, i32, i32
  }
  func.func @transform_2(%arg0: i32, %arg1: i32, %arg2: i32) -> (i32, i32) {
    %c0_i32 = arith.constant 0 : i32
    %c0_i32_0 = arith.constant 0 : i32
    return %c0_i32, %arg1 : i32, i32
  }
  func.func @transform_3(%arg0: i32, %arg1: i32, %arg2: i32) -> (i32, i32, i32) {
    %c0_i32 = arith.constant 0 : i32
    %c0_i32_0 = arith.constant 0 : i32
    return %arg0, %c0_i32, %arg1 : i32, i32, i32
  }
}

module attributes {stable_mosaic.version = 11 : i64} {
  func.func @_conv3x3_kernel(%arg0: i32, %arg1: i32, %arg2: i32, %arg3: memref<1x3x24x256xbf16, #tpu.memory_space<vmem>>, %arg4: memref<3x3x256x256xbf16, #tpu.memory_space<vmem>>, %arg5: memref<1x256xf32, #tpu.memory_space<vmem>>, %arg6: memref<1x16x256xf32, #tpu.memory_space<vmem>>, %arg7: memref<1x256xf32, #tpu.memory_space<vmem>>, %arg8: memref<1x256xf32, #tpu.memory_space<vmem>>, %arg9: memref<1x16x256xf32, #tpu.memory_space<vmem>>) attributes {dimension_semantics = [#tpu.dimension_semantics<parallel>, #tpu.dimension_semantics<parallel>, #tpu.dimension_semantics<arbitrary>], iteration_bounds = array<i64: 2, 1, 1>, scalar_prefetch = 0 : i64, scratch_operands = 0 : i64, tpu.core_type = #tpu.core_type<tc>, window_params = [{transform_indices = @transform_0, window_bounds = array<i64: 1, 3, 24, 256>}, {transform_indices = @transform_1, window_bounds = array<i64: 3, 3, 256, 256>}, {transform_indices = @transform_2, window_bounds = array<i64: 1, 256>}, {transform_indices = @transform_3, window_bounds = array<i64: 1, 16, 256>}, {transform_indices = @transform_4, window_bounds = array<i64: 1, 256>}, {transform_indices = @transform_5, window_bounds = array<i64: 1, 256>}, {transform_indices = @transform_6, window_bounds = array<i64: 1, 16, 256>}]} {
    %c0_i32 = arith.constant 0 : i32
    %0 = arith.cmpi eq, %arg2, %c0_i32 : i32
    %1 = arith.extui %0 : i1 to i32
    %c0_i32_0 = arith.constant 0 : i32
    %2 = arith.cmpi ne, %1, %c0_i32_0 : i32
    scf.if %2 {
      %cst_85 = arith.constant 0.000000e+00 : f32
      %67 = vector.broadcast %cst_85 : f32 to vector<1x16x256xf32>
      %c0_86 = arith.constant 0 : index
      %c0_87 = arith.constant 0 : index
      %c0_88 = arith.constant 0 : index
      %68 = vector.load %arg9[%c0_86, %c0_87, %c0_88] : memref<1x16x256xf32, #tpu.memory_space<vmem>>, vector<1x16x256xf32>
      tpu.vector_store %arg9[%c0_86, %c0_87, %c0_88], %67 {strides = array<i32>} : memref<1x16x256xf32, #tpu.memory_space<vmem>>, vector<1x16x256xf32>,
    } else {
    }
    %cst = arith.constant 0.000000e+00 : f32
    %3 = vector.broadcast %cst : f32 to vector<16x256xf32>
    %c0 = arith.constant 0 : index
    %c0_1 = arith.constant 0 : index
    %c0_2 = arith.constant 0 : index
    %c0_3 = arith.constant 0 : index
    %4 = vector.load %arg3[%c0, %c0_1, %c0_2, %c0_3] : memref<1x3x24x256xbf16, #tpu.memory_space<vmem>>, vector<1x1x16x256xbf16>
    %5 = vector.shape_cast %4 : vector<1x1x16x256xbf16> to vector<16x256xbf16>
    %c0_4 = arith.constant 0 : index
    %c0_5 = arith.constant 0 : index
    %c0_6 = arith.constant 0 : index
    %c0_7 = arith.constant 0 : index
    %6 = vector.load %arg4[%c0_4, %c0_5, %c0_6, %c0_7] : memref<3x3x256x256xbf16, #tpu.memory_space<vmem>>, vector<1x1x256x256xbf16>
    %7 = vector.shape_cast %6 : vector<1x1x256x256xbf16> to vector<256x256xbf16>
    %cst_8 = arith.constant dense<0.000000e+00> : vector<16x256xf32>
    %8 = tpu.matmul %5, %7, %cst_8 {dimension_numbers = #tpu.dot_dimension_numbers<[1], [0], [0], [1], [0, 0, 1, 1], [], []>} : vector<16x256xbf16>, vector<256x256xbf16>, vector<16x256xf32> -> vector<16x256xf32>
    %9 = arith.addf %3, %8 : vector<16x256xf32>
    %c0_9 = arith.constant 0 : index
    %c1 = arith.constant 1 : index
    %c0_10 = arith.constant 0 : index
    %c0_11 = arith.constant 0 : index
    %10 = vector.load %arg3[%c0_9, %c1, %c0_10, %c0_11] : memref<1x3x24x256xbf16, #tpu.memory_space<vmem>>, vector<1x1x16x256xbf16>
    %11 = vector.shape_cast %10 : vector<1x1x16x256xbf16> to vector<16x256xbf16>
    %c0_12 = arith.constant 0 : index
    %c1_13 = arith.constant 1 : index
    %c0_14 = arith.constant 0 : index
    %c0_15 = arith.constant 0 : index
    %12 = vector.load %arg4[%c0_12, %c1_13, %c0_14, %c0_15] : memref<3x3x256x256xbf16, #tpu.memory_space<vmem>>, vector<1x1x256x256xbf16>
    %13 = vector.shape_cast %12 : vector<1x1x256x256xbf16> to vector<256x256xbf16>
    %cst_16 = arith.constant dense<0.000000e+00> : vector<16x256xf32>
    %14 = tpu.matmul %11, %13, %cst_16 {dimension_numbers = #tpu.dot_dimension_numbers<[1], [0], [0], [1], [0, 0, 1, 1], [], []>} : vector<16x256xbf16>, vector<256x256xbf16>, vector<16x256xf32> -> vector<16x256xf32>
    %15 = arith.addf %9, %14 : vector<16x256xf32>
    %c0_17 = arith.constant 0 : index
    %c2 = arith.constant 2 : index
    %c0_18 = arith.constant 0 : index
    %c0_19 = arith.constant 0 : index
    %16 = vector.load %arg3[%c0_17, %c2, %c0_18, %c0_19] : memref<1x3x24x256xbf16, #tpu.memory_space<vmem>>, vector<1x1x16x256xbf16>
    %17 = vector.shape_cast %16 : vector<1x1x16x256xbf16> to vector<16x256xbf16>
    %c0_20 = arith.constant 0 : index
    %c2_21 = arith.constant 2 : index
    %c0_22 = arith.constant 0 : index
    %c0_23 = arith.constant 0 : index
    %18 = vector.load %arg4[%c0_20, %c2_21, %c0_22, %c0_23] : memref<3x3x256x256xbf16, #tpu.memory_space<vmem>>, vector<1x1x256x256xbf16>
    %19 = vector.shape_cast %18 : vector<1x1x256x256xbf16> to vector<256x256xbf16>
    %cst_24 = arith.constant dense<0.000000e+00> : vector<16x256xf32>
    %20 = tpu.matmul %17, %19, %cst_24 {dimension_numbers = #tpu.dot_dimension_numbers<[1], [0], [0], [1], [0, 0, 1, 1], [], []>} : vector<16x256xbf16>, vector<256x256xbf16>, vector<16x256xf32> -> vector<16x256xf32>
    %21 = arith.addf %15, %20 : vector<16x256xf32>
    %c0_25 = arith.constant 0 : index
    %c0_26 = arith.constant 0 : index
    %c4 = arith.constant 4 : index
    %c0_27 = arith.constant 0 : index
    %22 = vector.load %arg3[%c0_25, %c0_26, %c4, %c0_27] : memref<1x3x24x256xbf16, #tpu.memory_space<vmem>>, vector<1x1x16x256xbf16>
    %23 = vector.shape_cast %22 : vector<1x1x16x256xbf16> to vector<16x256xbf16>
    %c1_28 = arith.constant 1 : index
    %c0_29 = arith.constant 0 : index
    %c0_30 = arith.constant 0 : index
    %c0_31 = arith.constant 0 : index
    %24 = vector.load %arg4[%c1_28, %c0_29, %c0_30, %c0_31] : memref<3x3x256x256xbf16, #tpu.memory_space<vmem>>, vector<1x1x256x256xbf16>
    %25 = vector.shape_cast %24 : vector<1x1x256x256xbf16> to vector<256x256xbf16>
    %cst_32 = arith.constant dense<0.000000e+00> : vector<16x256xf32>
    %26 = tpu.matmul %23, %25, %cst_32 {dimension_numbers = #tpu.dot_dimension_numbers<[1], [0], [0], [1], [0, 0, 1, 1], [], []>} : vector<16x256xbf16>, vector<256x256xbf16>, vector<16x256xf32> -> vector<16x256xf32>
    %27 = arith.addf %21, %26 : vector<16x256xf32>
    %c0_33 = arith.constant 0 : index
    %c1_34 = arith.constant 1 : index
    %c4_35 = arith.constant 4 : index
    %c0_36 = arith.constant 0 : index
    %28 = vector.load %arg3[%c0_33, %c1_34, %c4_35, %c0_36] : memref<1x3x24x256xbf16, #tpu.memory_space<vmem>>, vector<1x1x16x256xbf16>
    %29 = vector.shape_cast %28 : vector<1x1x16x256xbf16> to vector<16x256xbf16>
    %c1_37 = arith.constant 1 : index
    %c1_38 = arith.constant 1 : index
    %c0_39 = arith.constant 0 : index
    %c0_40 = arith.constant 0 : index
    %30 = vector.load %arg4[%c1_37, %c1_38, %c0_39, %c0_40] : memref<3x3x256x256xbf16, #tpu.memory_space<vmem>>, vector<1x1x256x256xbf16>
    %31 = vector.shape_cast %30 : vector<1x1x256x256xbf16> to vector<256x256xbf16>
    %cst_41 = arith.constant dense<0.000000e+00> : vector<16x256xf32>
    %32 = tpu.matmul %29, %31, %cst_41 {dimension_numbers = #tpu.dot_dimension_numbers<[1], [0], [0], [1], [0, 0, 1, 1], [], []>} : vector<16x256xbf16>, vector<256x256xbf16>, vector<16x256xf32> -> vector<16x256xf32>
    %33 = arith.addf %27, %32 : vector<16x256xf32>
    %c0_42 = arith.constant 0 : index
    %c2_43 = arith.constant 2 : index
    %c4_44 = arith.constant 4 : index
    %c0_45 = arith.constant 0 : index
    %34 = vector.load %arg3[%c0_42, %c2_43, %c4_44, %c0_45] : memref<1x3x24x256xbf16, #tpu.memory_space<vmem>>, vector<1x1x16x256xbf16>
    %35 = vector.shape_cast %34 : vector<1x1x16x256xbf16> to vector<16x256xbf16>
    %c1_46 = arith.constant 1 : index
    %c2_47 = arith.constant 2 : index
    %c0_48 = arith.constant 0 : index
    %c0_49 = arith.constant 0 : index
    %36 = vector.load %arg4[%c1_46, %c2_47, %c0_48, %c0_49] : memref<3x3x256x256xbf16, #tpu.memory_space<vmem>>, vector<1x1x256x256xbf16>
    %37 = vector.shape_cast %36 : vector<1x1x256x256xbf16> to vector<256x256xbf16>
    %cst_50 = arith.constant dense<0.000000e+00> : vector<16x256xf32>
    %38 = tpu.matmul %35, %37, %cst_50 {dimension_numbers = #tpu.dot_dimension_numbers<[1], [0], [0], [1], [0, 0, 1, 1], [], []>} : vector<16x256xbf16>, vector<256x256xbf16>, vector<16x256xf32> -> vector<16x256xf32>
    %39 = arith.addf %33, %38 : vector<16x256xf32>
    %c0_51 = arith.constant 0 : index
    %c0_52 = arith.constant 0 : index
    %c8 = arith.constant 8 : index
    %c0_53 = arith.constant 0 : index
    %40 = vector.load %arg3[%c0_51, %c0_52, %c8, %c0_53] : memref<1x3x24x256xbf16, #tpu.memory_space<vmem>>, vector<1x1x16x256xbf16>
    %41 = vector.shape_cast %40 : vector<1x1x16x256xbf16> to vector<16x256xbf16>
    %c2_54 = arith.constant 2 : index
    %c0_55 = arith.constant 0 : index
    %c0_56 = arith.constant 0 : index
    %c0_57 = arith.constant 0 : index
    %42 = vector.load %arg4[%c2_54, %c0_55, %c0_56, %c0_57] : memref<3x3x256x256xbf16, #tpu.memory_space<vmem>>, vector<1x1x256x256xbf16>
    %43 = vector.shape_cast %42 : vector<1x1x256x256xbf16> to vector<256x256xbf16>
    %cst_58 = arith.constant dense<0.000000e+00> : vector<16x256xf32>
    %44 = tpu.matmul %41, %43, %cst_58 {dimension_numbers = #tpu.dot_dimension_numbers<[1], [0], [0], [1], [0, 0, 1, 1], [], []>} : vector<16x256xbf16>, vector<256x256xbf16>, vector<16x256xf32> -> vector<16x256xf32>
    %45 = arith.addf %39, %44 : vector<16x256xf32>
    %c0_59 = arith.constant 0 : index
    %c1_60 = arith.constant 1 : index
    %c8_61 = arith.constant 8 : index
    %c0_62 = arith.constant 0 : index
    %46 = vector.load %arg3[%c0_59, %c1_60, %c8_61, %c0_62] : memref<1x3x24x256xbf16, #tpu.memory_space<vmem>>, vector<1x1x16x256xbf16>
    %47 = vector.shape_cast %46 : vector<1x1x16x256xbf16> to vector<16x256xbf16>
    %c2_63 = arith.constant 2 : index
    %c1_64 = arith.constant 1 : index
    %c0_65 = arith.constant 0 : index
    %c0_66 = arith.constant 0 : index
    %48 = vector.load %arg4[%c2_63, %c1_64, %c0_65, %c0_66] : memref<3x3x256x256xbf16, #tpu.memory_space<vmem>>, vector<1x1x256x256xbf16>
    %49 = vector.shape_cast %48 : vector<1x1x256x256xbf16> to vector<256x256xbf16>
    %cst_67 = arith.constant dense<0.000000e+00> : vector<16x256xf32>
    %50 = tpu.matmul %47, %49, %cst_67 {dimension_numbers = #tpu.dot_dimension_numbers<[1], [0], [0], [1], [0, 0, 1, 1], [], []>} : vector<16x256xbf16>, vector<256x256xbf16>, vector<16x256xf32> -> vector<16x256xf32>
    %51 = arith.addf %45, %50 : vector<16x256xf32>
    %c0_68 = arith.constant 0 : index
    %c2_69 = arith.constant 2 : index
    %c8_70 = arith.constant 8 : index
    %c0_71 = arith.constant 0 : index
    %52 = vector.load %arg3[%c0_68, %c2_69, %c8_70, %c0_71] : memref<1x3x24x256xbf16, #tpu.memory_space<vmem>>, vector<1x1x16x256xbf16>
    %53 = vector.shape_cast %52 : vector<1x1x16x256xbf16> to vector<16x256xbf16>
    %c2_72 = arith.constant 2 : index
    %c2_73 = arith.constant 2 : index
    %c0_74 = arith.constant 0 : index
    %c0_75 = arith.constant 0 : index
    %54 = vector.load %arg4[%c2_72, %c2_73, %c0_74, %c0_75] : memref<3x3x256x256xbf16, #tpu.memory_space<vmem>>, vector<1x1x256x256xbf16>
    %55 = vector.shape_cast %54 : vector<1x1x256x256xbf16> to vector<256x256xbf16>
    %cst_76 = arith.constant dense<0.000000e+00> : vector<16x256xf32>
    %56 = tpu.matmul %53, %55, %cst_76 {dimension_numbers = #tpu.dot_dimension_numbers<[1], [0], [0], [1], [0, 0, 1, 1], [], []>} : vector<16x256xbf16>, vector<256x256xbf16>, vector<16x256xf32> -> vector<16x256xf32>
    %57 = arith.addf %51, %56 : vector<16x256xf32>
    %c0_77 = arith.constant 0 : index
    %c0_78 = arith.constant 0 : index
    %c0_79 = arith.constant 0 : index
    %58 = vector.load %arg9[%c0_77, %c0_78, %c0_79] : memref<1x16x256xf32, #tpu.memory_space<vmem>>, vector<1x16x256xf32>
    %59 = vector.shape_cast %58 : vector<1x16x256xf32> to vector<16x256xf32>
    %60 = arith.addf %59, %57 : vector<16x256xf32>
    %c0_80 = arith.constant 0 : index
    %c0_81 = arith.constant 0 : index
    %c0_82 = arith.constant 0 : index
    %61 = vector.load %arg9[%c0_80, %c0_81, %c0_82] : memref<1x16x256xf32, #tpu.memory_space<vmem>>, vector<1x16x256xf32>
    %62 = vector.shape_cast %61 : vector<1x16x256xf32> to vector<16x256xf32>
    %63 = vector.shape_cast %60 : vector<16x256xf32> to vector<1x16x256xf32>
    tpu.vector_store %arg9[%c0_80, %c0_81, %c0_82], %63 {strides = array<i32>} : memref<1x16x256xf32, #tpu.memory_space<vmem>>, vector<1x16x256xf32>,
    %c0_i32_83 = arith.constant 0 : i32
    %64 = arith.cmpi eq, %arg2, %c0_i32_83 : i32
    %65 = arith.extui %64 : i1 to i32
    %c0_i32_84 = arith.constant 0 : i32
    %66 = arith.cmpi ne, %65, %c0_i32_84 : i32
    scf.if %66 {
      %c0_85 = arith.constant 0 : index
      %c0_86 = arith.constant 0 : index
      %c0_87 = arith.constant 0 : index
      %67 = vector.load %arg9[%c0_85, %c0_86, %c0_87] : memref<1x16x256xf32, #tpu.memory_space<vmem>>, vector<1x16x256xf32>
      %68 = vector.shape_cast %67 : vector<1x16x256xf32> to vector<16x256xf32>
      %c0_88 = arith.constant 0 : index
      %c0_89 = arith.constant 0 : index
      %69 = vector.load %arg5[%c0_88, %c0_89] : memref<1x256xf32, #tpu.memory_space<vmem>>, vector<1x256xf32>
      %70 = vector.broadcast %69 : vector<1x256xf32> to vector<16x256xf32>
      %71 = arith.addf %68, %70 : vector<16x256xf32>
      %c0_90 = arith.constant 0 : index
      %c0_91 = arith.constant 0 : index
      %c0_92 = arith.constant 0 : index
      %72 = vector.load %arg6[%c0_90, %c0_91, %c0_92] : memref<1x16x256xf32, #tpu.memory_space<vmem>>, vector<1x16x256xf32>
      %73 = vector.shape_cast %72 : vector<1x16x256xf32> to vector<16x256xf32>
      %c0_93 = arith.constant 0 : index
      %c0_94 = arith.constant 0 : index
      %74 = vector.load %arg7[%c0_93, %c0_94] : memref<1x256xf32, #tpu.memory_space<vmem>>, vector<1x256xf32>
      %75 = vector.broadcast %74 : vector<1x256xf32> to vector<16x256xf32>
      %76 = arith.mulf %73, %75 : vector<16x256xf32>
      %77 = arith.addf %71, %76 : vector<16x256xf32>
      %c0_95 = arith.constant 0 : index
      %c0_96 = arith.constant 0 : index
      %78 = vector.load %arg8[%c0_95, %c0_96] : memref<1x256xf32, #tpu.memory_space<vmem>>, vector<1x256xf32>
      %79 = vector.broadcast %78 : vector<1x256xf32> to vector<16x256xf32>
      %80 = arith.addf %77, %79 : vector<16x256xf32>
      %c0_97 = arith.constant 0 : index
      %c0_98 = arith.constant 0 : index
      %c0_99 = arith.constant 0 : index
      %81 = vector.load %arg9[%c0_97, %c0_98, %c0_99] : memref<1x16x256xf32, #tpu.memory_space<vmem>>, vector<1x16x256xf32>
      %82 = vector.shape_cast %81 : vector<1x16x256xf32> to vector<16x256xf32>
      %83 = vector.shape_cast %80 : vector<16x256xf32> to vector<1x16x256xf32>
      tpu.vector_store %arg9[%c0_97, %c0_98, %c0_99], %83 {strides = array<i32>} : memref<1x16x256xf32, #tpu.memory_space<vmem>>, vector<1x16x256xf32>,
    } else {
    }
    return
  }
  func.func @transform_0(%arg0: i32, %arg1: i32, %arg2: i32) -> (i32, i32, i32, i32) {
    %c0_i32 = arith.constant 0 : i32
    %c0_i32_0 = arith.constant 0 : i32
    %c0_i32_1 = arith.constant 0 : i32
    return %arg0, %c0_i32, %c0_i32_0, %arg2 : i32, i32, i32, i32
  }
  func.func @transform_1(%arg0: i32, %arg1: i32, %arg2: i32) -> (i32, i32, i32, i32) {
    %c0_i32 = arith.constant 0 : i32
    %c0_i32_0 = arith.constant 0 : i32
    %c0_i32_1 = arith.constant 0 : i32
    return %c0_i32, %c0_i32_0, %arg2, %arg1 : i32, i32, i32, i32
  }
  func.func @transform_2(%arg0: i32, %arg1: i32, %arg2: i32) -> (i32, i32) {
    %c0_i32 = arith.constant 0 : i32
    %c0_i32_0 = arith.constant 0 : i32
    return %c0_i32, %arg1 : i32, i32
  }
  func.func @transform_3(%arg0: i32, %arg1: i32, %arg2: i32) -> (i32, i32, i32) {
    %c0_i32 = arith.constant 0 : i32
    %c0_i32_0 = arith.constant 0 : i32
    return %arg0, %c0_i32, %arg1 : i32, i32, i32
  }
  func.func @transform_4(%arg0: i32, %arg1: i32, %arg2: i32) -> (i32, i32) {
    %c0_i32 = arith.constant 0 : i32
    %c0_i32_0 = arith.constant 0 : i32
    return %c0_i32, %arg1 : i32, i32
  }
  func.func @transform_5(%arg0: i32, %arg1: i32, %arg2: i32) -> (i32, i32) {
    %c0_i32 = arith.constant 0 : i32
    %c0_i32_0 = arith.constant 0 : i32
    return %c0_i32, %arg1 : i32, i32
  }
  func.func @transform_6(%arg0: i32, %arg1: i32, %arg2: i32) -> (i32, i32, i32) {
    %c0_i32 = arith.constant 0 : i32
    %c0_i32_0 = arith.constant 0 : i32
    return %arg0, %c0_i32, %arg1 : i32, i32, i32
  }
}

module attributes {stable_mosaic.version = 11 : i64} {
  func.func @_matmul_kernel(%arg0: i32, %arg1: i32, %arg2: i32, %arg3: memref<8x256xbf16, #tpu.memory_space<vmem>>, %arg4: memref<256x256xbf16, #tpu.memory_space<vmem>>, %arg5: memref<1x256xf32, #tpu.memory_space<vmem>>, %arg6: memref<8x256xf32, #tpu.memory_space<vmem>>) attributes {dimension_semantics = [#tpu.dimension_semantics<parallel>, #tpu.dimension_semantics<parallel>, #tpu.dimension_semantics<arbitrary>], iteration_bounds = array<i64: 1, 2, 1>, scalar_prefetch = 0 : i64, scratch_operands = 0 : i64, tpu.core_type = #tpu.core_type<tc>, window_params = [{transform_indices = @transform_0, window_bounds = array<i64: 8, 256>}, {transform_indices = @transform_1, window_bounds = array<i64: 256, 256>}, {transform_indices = @transform_2, window_bounds = array<i64: 1, 256>}, {transform_indices = @transform_3, window_bounds = array<i64: 8, 256>}]} {
    %c0_i32 = arith.constant 0 : i32
    %0 = arith.cmpi eq, %arg2, %c0_i32 : i32
    %1 = arith.extui %0 : i1 to i32
    %c0_i32_0 = arith.constant 0 : i32
    %2 = arith.cmpi ne, %1, %c0_i32_0 : i32
    scf.if %2 {
      %cst_10 = arith.constant 0.000000e+00 : f32
      %12 = vector.broadcast %cst_10 : f32 to vector<8x256xf32>
      %c0_11 = arith.constant 0 : index
      %c0_12 = arith.constant 0 : index
      %13 = vector.load %arg6[%c0_11, %c0_12] : memref<8x256xf32, #tpu.memory_space<vmem>>, vector<8x256xf32>
      tpu.vector_store %arg6[%c0_11, %c0_12], %12 {strides = array<i32>} : memref<8x256xf32, #tpu.memory_space<vmem>>, vector<8x256xf32>,
    } else {
    }
    %c0 = arith.constant 0 : index
    %c0_1 = arith.constant 0 : index
    %3 = vector.load %arg6[%c0, %c0_1] : memref<8x256xf32, #tpu.memory_space<vmem>>, vector<8x256xf32>
    %c0_2 = arith.constant 0 : index
    %c0_3 = arith.constant 0 : index
    %4 = vector.load %arg3[%c0_2, %c0_3] : memref<8x256xbf16, #tpu.memory_space<vmem>>, vector<8x256xbf16>
    %c0_4 = arith.constant 0 : index
    %c0_5 = arith.constant 0 : index
    %5 = vector.load %arg4[%c0_4, %c0_5] : memref<256x256xbf16, #tpu.memory_space<vmem>>, vector<256x256xbf16>
    %cst = arith.constant dense<0.000000e+00> : vector<8x256xf32>
    %6 = tpu.matmul %4, %5, %cst {dimension_numbers = #tpu.dot_dimension_numbers<[1], [0], [0], [1], [0, 0, 1, 1], [], []>} : vector<8x256xbf16>, vector<256x256xbf16>, vector<8x256xf32> -> vector<8x256xf32>
    %7 = arith.addf %3, %6 : vector<8x256xf32>
    %c0_6 = arith.constant 0 : index
    %c0_7 = arith.constant 0 : index
    %8 = vector.load %arg6[%c0_6, %c0_7] : memref<8x256xf32, #tpu.memory_space<vmem>>, vector<8x256xf32>
    tpu.vector_store %arg6[%c0_6, %c0_7], %7 {strides = array<i32>} : memref<8x256xf32, #tpu.memory_space<vmem>>, vector<8x256xf32>,
    %c0_i32_8 = arith.constant 0 : i32
    %9 = arith.cmpi eq, %arg2, %c0_i32_8 : i32
    %10 = arith.extui %9 : i1 to i32
    %c0_i32_9 = arith.constant 0 : i32
    %11 = arith.cmpi ne, %10, %c0_i32_9 : i32
    scf.if %11 {
      %c0_10 = arith.constant 0 : index
      %c0_11 = arith.constant 0 : index
      %12 = vector.load %arg6[%c0_10, %c0_11] : memref<8x256xf32, #tpu.memory_space<vmem>>, vector<8x256xf32>
      %c0_12 = arith.constant 0 : index
      %c0_13 = arith.constant 0 : index
      %13 = vector.load %arg5[%c0_12, %c0_13] : memref<1x256xf32, #tpu.memory_space<vmem>>, vector<1x256xf32>
      %14 = vector.broadcast %13 : vector<1x256xf32> to vector<8x256xf32>
      %15 = arith.addf %12, %14 : vector<8x256xf32>
      %c0_14 = arith.constant 0 : index
      %c0_15 = arith.constant 0 : index
      %16 = vector.load %arg6[%c0_14, %c0_15] : memref<8x256xf32, #tpu.memory_space<vmem>>, vector<8x256xf32>
      tpu.vector_store %arg6[%c0_14, %c0_15], %15 {strides = array<i32>} : memref<8x256xf32, #tpu.memory_space<vmem>>, vector<8x256xf32>,
    } else {
    }
    return
  }
  func.func @transform_0(%arg0: i32, %arg1: i32, %arg2: i32) -> (i32, i32) {
    %c0_i32 = arith.constant 0 : i32
    return %arg0, %arg2 : i32, i32
  }
  func.func @transform_1(%arg0: i32, %arg1: i32, %arg2: i32) -> (i32, i32) {
    %c0_i32 = arith.constant 0 : i32
    return %arg2, %arg1 : i32, i32
  }
  func.func @transform_2(%arg0: i32, %arg1: i32, %arg2: i32) -> (i32, i32) {
    %c0_i32 = arith.constant 0 : i32
    %c0_i32_0 = arith.constant 0 : i32
    return %c0_i32, %arg1 : i32, i32
  }
  func.func @transform_3(%arg0: i32, %arg1: i32, %arg2: i32) -> (i32, i32) {
    %c0_i32 = arith.constant 0 : i32
    return %arg0, %arg1 : i32, i32
  }
}

module attributes {stable_mosaic.version = 11 : i64} {
  func.func @_conv3x3_kernel(%arg0: i32, %arg1: i32, %arg2: i32, %arg3: memref<1x3x8x256xbf16, #tpu.memory_space<vmem>>, %arg4: memref<3x3x256x256xbf16, #tpu.memory_space<vmem>>, %arg5: memref<1x256xf32, #tpu.memory_space<vmem>>, %arg6: memref<1x4x256xf32, #tpu.memory_space<vmem>>) attributes {dimension_semantics = [#tpu.dimension_semantics<parallel>, #tpu.dimension_semantics<parallel>, #tpu.dimension_semantics<arbitrary>], iteration_bounds = array<i64: 2, 2, 1>, scalar_prefetch = 0 : i64, scratch_operands = 0 : i64, tpu.core_type = #tpu.core_type<tc>, window_params = [{transform_indices = @transform_0, window_bounds = array<i64: 1, 3, 8, 256>}, {transform_indices = @transform_1, window_bounds = array<i64: 3, 3, 256, 256>}, {transform_indices = @transform_2, window_bounds = array<i64: 1, 256>}, {transform_indices = @transform_3, window_bounds = array<i64: 1, 4, 256>}]} {
    %c0_i32 = arith.constant 0 : i32
    %0 = arith.cmpi eq, %arg2, %c0_i32 : i32
    %1 = arith.extui %0 : i1 to i32
    %c0_i32_0 = arith.constant 0 : i32
    %2 = arith.cmpi ne, %1, %c0_i32_0 : i32
    scf.if %2 {
      %cst_86 = arith.constant 0.000000e+00 : f32
      %67 = vector.broadcast %cst_86 : f32 to vector<1x4x256xf32>
      %c0_87 = arith.constant 0 : index
      %c0_88 = arith.constant 0 : index
      %c0_89 = arith.constant 0 : index
      %68 = vector.load %arg6[%c0_87, %c0_88, %c0_89] : memref<1x4x256xf32, #tpu.memory_space<vmem>>, vector<1x4x256xf32>
      tpu.vector_store %arg6[%c0_87, %c0_88, %c0_89], %67 {strides = array<i32>} : memref<1x4x256xf32, #tpu.memory_space<vmem>>, vector<1x4x256xf32>,
    } else {
    }
    %cst = arith.constant 0.000000e+00 : f32
    %3 = vector.broadcast %cst : f32 to vector<4x256xf32>
    %c0 = arith.constant 0 : index
    %c0_1 = arith.constant 0 : index
    %c0_2 = arith.constant 0 : index
    %c0_3 = arith.constant 0 : index
    %4 = vector.load %arg3[%c0, %c0_1, %c0_2, %c0_3] : memref<1x3x8x256xbf16, #tpu.memory_space<vmem>>, vector<1x1x4x256xbf16>
    %5 = vector.shape_cast %4 : vector<1x1x4x256xbf16> to vector<4x256xbf16>
    %c0_4 = arith.constant 0 : index
    %c0_5 = arith.constant 0 : index
    %c0_6 = arith.constant 0 : index
    %c0_7 = arith.constant 0 : index
    %6 = vector.load %arg4[%c0_4, %c0_5, %c0_6, %c0_7] : memref<3x3x256x256xbf16, #tpu.memory_space<vmem>>, vector<1x1x256x256xbf16>
    %7 = vector.shape_cast %6 : vector<1x1x256x256xbf16> to vector<256x256xbf16>
    %cst_8 = arith.constant dense<0.000000e+00> : vector<4x256xf32>
    %8 = tpu.matmul %5, %7, %cst_8 {dimension_numbers = #tpu.dot_dimension_numbers<[1], [0], [0], [1], [0, 0, 1, 1], [], []>} : vector<4x256xbf16>, vector<256x256xbf16>, vector<4x256xf32> -> vector<4x256xf32>
    %9 = arith.addf %3, %8 : vector<4x256xf32>
    %c0_9 = arith.constant 0 : index
    %c1 = arith.constant 1 : index
    %c0_10 = arith.constant 0 : index
    %c0_11 = arith.constant 0 : index
    %10 = vector.load %arg3[%c0_9, %c1, %c0_10, %c0_11] : memref<1x3x8x256xbf16, #tpu.memory_space<vmem>>, vector<1x1x4x256xbf16>
    %11 = vector.shape_cast %10 : vector<1x1x4x256xbf16> to vector<4x256xbf16>
    %c0_12 = arith.constant 0 : index
    %c1_13 = arith.constant 1 : index
    %c0_14 = arith.constant 0 : index
    %c0_15 = arith.constant 0 : index
    %12 = vector.load %arg4[%c0_12, %c1_13, %c0_14, %c0_15] : memref<3x3x256x256xbf16, #tpu.memory_space<vmem>>, vector<1x1x256x256xbf16>
    %13 = vector.shape_cast %12 : vector<1x1x256x256xbf16> to vector<256x256xbf16>
    %cst_16 = arith.constant dense<0.000000e+00> : vector<4x256xf32>
    %14 = tpu.matmul %11, %13, %cst_16 {dimension_numbers = #tpu.dot_dimension_numbers<[1], [0], [0], [1], [0, 0, 1, 1], [], []>} : vector<4x256xbf16>, vector<256x256xbf16>, vector<4x256xf32> -> vector<4x256xf32>
    %15 = arith.addf %9, %14 : vector<4x256xf32>
    %c0_17 = arith.constant 0 : index
    %c2 = arith.constant 2 : index
    %c0_18 = arith.constant 0 : index
    %c0_19 = arith.constant 0 : index
    %16 = vector.load %arg3[%c0_17, %c2, %c0_18, %c0_19] : memref<1x3x8x256xbf16, #tpu.memory_space<vmem>>, vector<1x1x4x256xbf16>
    %17 = vector.shape_cast %16 : vector<1x1x4x256xbf16> to vector<4x256xbf16>
    %c0_20 = arith.constant 0 : index
    %c2_21 = arith.constant 2 : index
    %c0_22 = arith.constant 0 : index
    %c0_23 = arith.constant 0 : index
    %18 = vector.load %arg4[%c0_20, %c2_21, %c0_22, %c0_23] : memref<3x3x256x256xbf16, #tpu.memory_space<vmem>>, vector<1x1x256x256xbf16>
    %19 = vector.shape_cast %18 : vector<1x1x256x256xbf16> to vector<256x256xbf16>
    %cst_24 = arith.constant dense<0.000000e+00> : vector<4x256xf32>
    %20 = tpu.matmul %17, %19, %cst_24 {dimension_numbers = #tpu.dot_dimension_numbers<[1], [0], [0], [1], [0, 0, 1, 1], [], []>} : vector<4x256xbf16>, vector<256x256xbf16>, vector<4x256xf32> -> vector<4x256xf32>
    %21 = arith.addf %15, %20 : vector<4x256xf32>
    %c0_25 = arith.constant 0 : index
    %c0_26 = arith.constant 0 : index
    %c2_27 = arith.constant 2 : index
    %c0_28 = arith.constant 0 : index
    %22 = vector.load %arg3[%c0_25, %c0_26, %c2_27, %c0_28] : memref<1x3x8x256xbf16, #tpu.memory_space<vmem>>, vector<1x1x4x256xbf16>
    %23 = vector.shape_cast %22 : vector<1x1x4x256xbf16> to vector<4x256xbf16>
    %c1_29 = arith.constant 1 : index
    %c0_30 = arith.constant 0 : index
    %c0_31 = arith.constant 0 : index
    %c0_32 = arith.constant 0 : index
    %24 = vector.load %arg4[%c1_29, %c0_30, %c0_31, %c0_32] : memref<3x3x256x256xbf16, #tpu.memory_space<vmem>>, vector<1x1x256x256xbf16>
    %25 = vector.shape_cast %24 : vector<1x1x256x256xbf16> to vector<256x256xbf16>
    %cst_33 = arith.constant dense<0.000000e+00> : vector<4x256xf32>
    %26 = tpu.matmul %23, %25, %cst_33 {dimension_numbers = #tpu.dot_dimension_numbers<[1], [0], [0], [1], [0, 0, 1, 1], [], []>} : vector<4x256xbf16>, vector<256x256xbf16>, vector<4x256xf32> -> vector<4x256xf32>
    %27 = arith.addf %21, %26 : vector<4x256xf32>
    %c0_34 = arith.constant 0 : index
    %c1_35 = arith.constant 1 : index
    %c2_36 = arith.constant 2 : index
    %c0_37 = arith.constant 0 : index
    %28 = vector.load %arg3[%c0_34, %c1_35, %c2_36, %c0_37] : memref<1x3x8x256xbf16, #tpu.memory_space<vmem>>, vector<1x1x4x256xbf16>
    %29 = vector.shape_cast %28 : vector<1x1x4x256xbf16> to vector<4x256xbf16>
    %c1_38 = arith.constant 1 : index
    %c1_39 = arith.constant 1 : index
    %c0_40 = arith.constant 0 : index
    %c0_41 = arith.constant 0 : index
    %30 = vector.load %arg4[%c1_38, %c1_39, %c0_40, %c0_41] : memref<3x3x256x256xbf16, #tpu.memory_space<vmem>>, vector<1x1x256x256xbf16>
    %31 = vector.shape_cast %30 : vector<1x1x256x256xbf16> to vector<256x256xbf16>
    %cst_42 = arith.constant dense<0.000000e+00> : vector<4x256xf32>
    %32 = tpu.matmul %29, %31, %cst_42 {dimension_numbers = #tpu.dot_dimension_numbers<[1], [0], [0], [1], [0, 0, 1, 1], [], []>} : vector<4x256xbf16>, vector<256x256xbf16>, vector<4x256xf32> -> vector<4x256xf32>
    %33 = arith.addf %27, %32 : vector<4x256xf32>
    %c0_43 = arith.constant 0 : index
    %c2_44 = arith.constant 2 : index
    %c2_45 = arith.constant 2 : index
    %c0_46 = arith.constant 0 : index
    %34 = vector.load %arg3[%c0_43, %c2_44, %c2_45, %c0_46] : memref<1x3x8x256xbf16, #tpu.memory_space<vmem>>, vector<1x1x4x256xbf16>
    %35 = vector.shape_cast %34 : vector<1x1x4x256xbf16> to vector<4x256xbf16>
    %c1_47 = arith.constant 1 : index
    %c2_48 = arith.constant 2 : index
    %c0_49 = arith.constant 0 : index
    %c0_50 = arith.constant 0 : index
    %36 = vector.load %arg4[%c1_47, %c2_48, %c0_49, %c0_50] : memref<3x3x256x256xbf16, #tpu.memory_space<vmem>>, vector<1x1x256x256xbf16>
    %37 = vector.shape_cast %36 : vector<1x1x256x256xbf16> to vector<256x256xbf16>
    %cst_51 = arith.constant dense<0.000000e+00> : vector<4x256xf32>
    %38 = tpu.matmul %35, %37, %cst_51 {dimension_numbers = #tpu.dot_dimension_numbers<[1], [0], [0], [1], [0, 0, 1, 1], [], []>} : vector<4x256xbf16>, vector<256x256xbf16>, vector<4x256xf32> -> vector<4x256xf32>
    %39 = arith.addf %33, %38 : vector<4x256xf32>
    %c0_52 = arith.constant 0 : index
    %c0_53 = arith.constant 0 : index
    %c4 = arith.constant 4 : index
    %c0_54 = arith.constant 0 : index
    %40 = vector.load %arg3[%c0_52, %c0_53, %c4, %c0_54] : memref<1x3x8x256xbf16, #tpu.memory_space<vmem>>, vector<1x1x4x256xbf16>
    %41 = vector.shape_cast %40 : vector<1x1x4x256xbf16> to vector<4x256xbf16>
    %c2_55 = arith.constant 2 : index
    %c0_56 = arith.constant 0 : index
    %c0_57 = arith.constant 0 : index
    %c0_58 = arith.constant 0 : index
    %42 = vector.load %arg4[%c2_55, %c0_56, %c0_57, %c0_58] : memref<3x3x256x256xbf16, #tpu.memory_space<vmem>>, vector<1x1x256x256xbf16>
    %43 = vector.shape_cast %42 : vector<1x1x256x256xbf16> to vector<256x256xbf16>
    %cst_59 = arith.constant dense<0.000000e+00> : vector<4x256xf32>
    %44 = tpu.matmul %41, %43, %cst_59 {dimension_numbers = #tpu.dot_dimension_numbers<[1], [0], [0], [1], [0, 0, 1, 1], [], []>} : vector<4x256xbf16>, vector<256x256xbf16>, vector<4x256xf32> -> vector<4x256xf32>
    %45 = arith.addf %39, %44 : vector<4x256xf32>
    %c0_60 = arith.constant 0 : index
    %c1_61 = arith.constant 1 : index
    %c4_62 = arith.constant 4 : index
    %c0_63 = arith.constant 0 : index
    %46 = vector.load %arg3[%c0_60, %c1_61, %c4_62, %c0_63] : memref<1x3x8x256xbf16, #tpu.memory_space<vmem>>, vector<1x1x4x256xbf16>
    %47 = vector.shape_cast %46 : vector<1x1x4x256xbf16> to vector<4x256xbf16>
    %c2_64 = arith.constant 2 : index
    %c1_65 = arith.constant 1 : index
    %c0_66 = arith.constant 0 : index
    %c0_67 = arith.constant 0 : index
    %48 = vector.load %arg4[%c2_64, %c1_65, %c0_66, %c0_67] : memref<3x3x256x256xbf16, #tpu.memory_space<vmem>>, vector<1x1x256x256xbf16>
    %49 = vector.shape_cast %48 : vector<1x1x256x256xbf16> to vector<256x256xbf16>
    %cst_68 = arith.constant dense<0.000000e+00> : vector<4x256xf32>
    %50 = tpu.matmul %47, %49, %cst_68 {dimension_numbers = #tpu.dot_dimension_numbers<[1], [0], [0], [1], [0, 0, 1, 1], [], []>} : vector<4x256xbf16>, vector<256x256xbf16>, vector<4x256xf32> -> vector<4x256xf32>
    %51 = arith.addf %45, %50 : vector<4x256xf32>
    %c0_69 = arith.constant 0 : index
    %c2_70 = arith.constant 2 : index
    %c4_71 = arith.constant 4 : index
    %c0_72 = arith.constant 0 : index
    %52 = vector.load %arg3[%c0_69, %c2_70, %c4_71, %c0_72] : memref<1x3x8x256xbf16, #tpu.memory_space<vmem>>, vector<1x1x4x256xbf16>
    %53 = vector.shape_cast %52 : vector<1x1x4x256xbf16> to vector<4x256xbf16>
    %c2_73 = arith.constant 2 : index
    %c2_74 = arith.constant 2 : index
    %c0_75 = arith.constant 0 : index
    %c0_76 = arith.constant 0 : index
    %54 = vector.load %arg4[%c2_73, %c2_74, %c0_75, %c0_76] : memref<3x3x256x256xbf16, #tpu.memory_space<vmem>>, vector<1x1x256x256xbf16>
    %55 = vector.shape_cast %54 : vector<1x1x256x256xbf16> to vector<256x256xbf16>
    %cst_77 = arith.constant dense<0.000000e+00> : vector<4x256xf32>
    %56 = tpu.matmul %53, %55, %cst_77 {dimension_numbers = #tpu.dot_dimension_numbers<[1], [0], [0], [1], [0, 0, 1, 1], [], []>} : vector<4x256xbf16>, vector<256x256xbf16>, vector<4x256xf32> -> vector<4x256xf32>
    %57 = arith.addf %51, %56 : vector<4x256xf32>
    %c0_78 = arith.constant 0 : index
    %c0_79 = arith.constant 0 : index
    %c0_80 = arith.constant 0 : index
    %58 = vector.load %arg6[%c0_78, %c0_79, %c0_80] : memref<1x4x256xf32, #tpu.memory_space<vmem>>, vector<1x4x256xf32>
    %59 = vector.shape_cast %58 : vector<1x4x256xf32> to vector<4x256xf32>
    %60 = arith.addf %59, %57 : vector<4x256xf32>
    %c0_81 = arith.constant 0 : index
    %c0_82 = arith.constant 0 : index
    %c0_83 = arith.constant 0 : index
    %61 = vector.load %arg6[%c0_81, %c0_82, %c0_83] : memref<1x4x256xf32, #tpu.memory_space<vmem>>, vector<1x4x256xf32>
    %62 = vector.shape_cast %61 : vector<1x4x256xf32> to vector<4x256xf32>
    %63 = vector.shape_cast %60 : vector<4x256xf32> to vector<1x4x256xf32>
    tpu.vector_store %arg6[%c0_81, %c0_82, %c0_83], %63 {strides = array<i32>} : memref<1x4x256xf32, #tpu.memory_space<vmem>>, vector<1x4x256xf32>,
    %c0_i32_84 = arith.constant 0 : i32
    %64 = arith.cmpi eq, %arg2, %c0_i32_84 : i32
    %65 = arith.extui %64 : i1 to i32
    %c0_i32_85 = arith.constant 0 : i32
    %66 = arith.cmpi ne, %65, %c0_i32_85 : i32
    scf.if %66 {
      %c0_86 = arith.constant 0 : index
      %c0_87 = arith.constant 0 : index
      %c0_88 = arith.constant 0 : index
      %67 = vector.load %arg6[%c0_86, %c0_87, %c0_88] : memref<1x4x256xf32, #tpu.memory_space<vmem>>, vector<1x4x256xf32>
      %68 = vector.shape_cast %67 : vector<1x4x256xf32> to vector<4x256xf32>
      %c0_89 = arith.constant 0 : index
      %c0_90 = arith.constant 0 : index
      %69 = vector.load %arg5[%c0_89, %c0_90] : memref<1x256xf32, #tpu.memory_space<vmem>>, vector<1x256xf32>
      %70 = vector.broadcast %69 : vector<1x256xf32> to vector<4x256xf32>
      %71 = arith.addf %68, %70 : vector<4x256xf32>
      %c0_91 = arith.constant 0 : index
      %c0_92 = arith.constant 0 : index
      %c0_93 = arith.constant 0 : index
      %72 = vector.load %arg6[%c0_91, %c0_92, %c0_93] : memref<1x4x256xf32, #tpu.memory_space<vmem>>, vector<1x4x256xf32>
      %73 = vector.shape_cast %72 : vector<1x4x256xf32> to vector<4x256xf32>
      %74 = vector.shape_cast %71 : vector<4x256xf32> to vector<1x4x256xf32>
      tpu.vector_store %arg6[%c0_91, %c0_92, %c0_93], %74 {strides = array<i32>} : memref<1x4x256xf32, #tpu.memory_space<vmem>>, vector<1x4x256xf32>,
    } else {
    }
    return
  }
  func.func @transform_0(%arg0: i32, %arg1: i32, %arg2: i32) -> (i32, i32, i32, i32) {
    %c0_i32 = arith.constant 0 : i32
    %c0_i32_0 = arith.constant 0 : i32
    %c0_i32_1 = arith.constant 0 : i32
    return %arg0, %c0_i32, %c0_i32_0, %arg2 : i32, i32, i32, i32
  }
  func.func @transform_1(%arg0: i32, %arg1: i32, %arg2: i32) -> (i32, i32, i32, i32) {
    %c0_i32 = arith.constant 0 : i32
    %c0_i32_0 = arith.constant 0 : i32
    %c0_i32_1 = arith.constant 0 : i32
    return %c0_i32, %c0_i32_0, %arg2, %arg1 : i32, i32, i32, i32
  }
  func.func @transform_2(%arg0: i32, %arg1: i32, %arg2: i32) -> (i32, i32) {
    %c0_i32 = arith.constant 0 : i32
    %c0_i32_0 = arith.constant 0 : i32
    return %c0_i32, %arg1 : i32, i32
  }
  func.func @transform_3(%arg0: i32, %arg1: i32, %arg2: i32) -> (i32, i32, i32) {
    %c0_i32 = arith.constant 0 : i32
    %c0_i32_0 = arith.constant 0 : i32
    return %arg0, %c0_i32, %arg1 : i32, i32, i32
  }
}

module attributes {stable_mosaic.version = 11 : i64} {
  func.func @_conv3x3_kernel(%arg0: i32, %arg1: i32, %arg2: i32, %arg3: memref<1x3x8x256xbf16, #tpu.memory_space<vmem>>, %arg4: memref<3x3x256x256xbf16, #tpu.memory_space<vmem>>, %arg5: memref<1x256xf32, #tpu.memory_space<vmem>>, %arg6: memref<1x4x256xf32, #tpu.memory_space<vmem>>, %arg7: memref<1x256xf32, #tpu.memory_space<vmem>>, %arg8: memref<1x256xf32, #tpu.memory_space<vmem>>, %arg9: memref<1x4x256xf32, #tpu.memory_space<vmem>>) attributes {dimension_semantics = [#tpu.dimension_semantics<parallel>, #tpu.dimension_semantics<parallel>, #tpu.dimension_semantics<arbitrary>], iteration_bounds = array<i64: 2, 2, 2>, scalar_prefetch = 0 : i64, scratch_operands = 0 : i64, tpu.core_type = #tpu.core_type<tc>, window_params = [{transform_indices = @transform_0, window_bounds = array<i64: 1, 3, 8, 256>}, {transform_indices = @transform_1, window_bounds = array<i64: 3, 3, 256, 256>}, {transform_indices = @transform_2, window_bounds = array<i64: 1, 256>}, {transform_indices = @transform_3, window_bounds = array<i64: 1, 4, 256>}, {transform_indices = @transform_4, window_bounds = array<i64: 1, 256>}, {transform_indices = @transform_5, window_bounds = array<i64: 1, 256>}, {transform_indices = @transform_6, window_bounds = array<i64: 1, 4, 256>}]} {
    %c0_i32 = arith.constant 0 : i32
    %0 = arith.cmpi eq, %arg2, %c0_i32 : i32
    %1 = arith.extui %0 : i1 to i32
    %c0_i32_0 = arith.constant 0 : i32
    %2 = arith.cmpi ne, %1, %c0_i32_0 : i32
    scf.if %2 {
      %cst_85 = arith.constant 0.000000e+00 : f32
      %67 = vector.broadcast %cst_85 : f32 to vector<1x4x256xf32>
      %c0_86 = arith.constant 0 : index
      %c0_87 = arith.constant 0 : index
      %c0_88 = arith.constant 0 : index
      %68 = vector.load %arg9[%c0_86, %c0_87, %c0_88] : memref<1x4x256xf32, #tpu.memory_space<vmem>>, vector<1x4x256xf32>
      tpu.vector_store %arg9[%c0_86, %c0_87, %c0_88], %67 {strides = array<i32>} : memref<1x4x256xf32, #tpu.memory_space<vmem>>, vector<1x4x256xf32>,
    } else {
    }
    %cst = arith.constant 0.000000e+00 : f32
    %3 = vector.broadcast %cst : f32 to vector<4x256xf32>
    %c0 = arith.constant 0 : index
    %c0_1 = arith.constant 0 : index
    %c0_2 = arith.constant 0 : index
    %c0_3 = arith.constant 0 : index
    %4 = vector.load %arg3[%c0, %c0_1, %c0_2, %c0_3] : memref<1x3x8x256xbf16, #tpu.memory_space<vmem>>, vector<1x1x4x256xbf16>
    %5 = vector.shape_cast %4 : vector<1x1x4x256xbf16> to vector<4x256xbf16>
    %c0_4 = arith.constant 0 : index
    %c0_5 = arith.constant 0 : index
    %c0_6 = arith.constant 0 : index
    %c0_7 = arith.constant 0 : index
    %6 = vector.load %arg4[%c0_4, %c0_5, %c0_6, %c0_7] : memref<3x3x256x256xbf16, #tpu.memory_space<vmem>>, vector<1x1x256x256xbf16>
    %7 = vector.shape_cast %6 : vector<1x1x256x256xbf16> to vector<256x256xbf16>
    %cst_8 = arith.constant dense<0.000000e+00> : vector<4x256xf32>
    %8 = tpu.matmul %5, %7, %cst_8 {dimension_numbers = #tpu.dot_dimension_numbers<[1], [0], [0], [1], [0, 0, 1, 1], [], []>} : vector<4x256xbf16>, vector<256x256xbf16>, vector<4x256xf32> -> vector<4x256xf32>
    %9 = arith.addf %3, %8 : vector<4x256xf32>
    %c0_9 = arith.constant 0 : index
    %c1 = arith.constant 1 : index
    %c0_10 = arith.constant 0 : index
    %c0_11 = arith.constant 0 : index
    %10 = vector.load %arg3[%c0_9, %c1, %c0_10, %c0_11] : memref<1x3x8x256xbf16, #tpu.memory_space<vmem>>, vector<1x1x4x256xbf16>
    %11 = vector.shape_cast %10 : vector<1x1x4x256xbf16> to vector<4x256xbf16>
    %c0_12 = arith.constant 0 : index
    %c1_13 = arith.constant 1 : index
    %c0_14 = arith.constant 0 : index
    %c0_15 = arith.constant 0 : index
    %12 = vector.load %arg4[%c0_12, %c1_13, %c0_14, %c0_15] : memref<3x3x256x256xbf16, #tpu.memory_space<vmem>>, vector<1x1x256x256xbf16>
    %13 = vector.shape_cast %12 : vector<1x1x256x256xbf16> to vector<256x256xbf16>
    %cst_16 = arith.constant dense<0.000000e+00> : vector<4x256xf32>
    %14 = tpu.matmul %11, %13, %cst_16 {dimension_numbers = #tpu.dot_dimension_numbers<[1], [0], [0], [1], [0, 0, 1, 1], [], []>} : vector<4x256xbf16>, vector<256x256xbf16>, vector<4x256xf32> -> vector<4x256xf32>
    %15 = arith.addf %9, %14 : vector<4x256xf32>
    %c0_17 = arith.constant 0 : index
    %c2 = arith.constant 2 : index
    %c0_18 = arith.constant 0 : index
    %c0_19 = arith.constant 0 : index
    %16 = vector.load %arg3[%c0_17, %c2, %c0_18, %c0_19] : memref<1x3x8x256xbf16, #tpu.memory_space<vmem>>, vector<1x1x4x256xbf16>
    %17 = vector.shape_cast %16 : vector<1x1x4x256xbf16> to vector<4x256xbf16>
    %c0_20 = arith.constant 0 : index
    %c2_21 = arith.constant 2 : index
    %c0_22 = arith.constant 0 : index
    %c0_23 = arith.constant 0 : index
    %18 = vector.load %arg4[%c0_20, %c2_21, %c0_22, %c0_23] : memref<3x3x256x256xbf16, #tpu.memory_space<vmem>>, vector<1x1x256x256xbf16>
    %19 = vector.shape_cast %18 : vector<1x1x256x256xbf16> to vector<256x256xbf16>
    %cst_24 = arith.constant dense<0.000000e+00> : vector<4x256xf32>
    %20 = tpu.matmul %17, %19, %cst_24 {dimension_numbers = #tpu.dot_dimension_numbers<[1], [0], [0], [1], [0, 0, 1, 1], [], []>} : vector<4x256xbf16>, vector<256x256xbf16>, vector<4x256xf32> -> vector<4x256xf32>
    %21 = arith.addf %15, %20 : vector<4x256xf32>
    %c0_25 = arith.constant 0 : index
    %c0_26 = arith.constant 0 : index
    %c2_27 = arith.constant 2 : index
    %c0_28 = arith.constant 0 : index
    %22 = vector.load %arg3[%c0_25, %c0_26, %c2_27, %c0_28] : memref<1x3x8x256xbf16, #tpu.memory_space<vmem>>, vector<1x1x4x256xbf16>
    %23 = vector.shape_cast %22 : vector<1x1x4x256xbf16> to vector<4x256xbf16>
    %c1_29 = arith.constant 1 : index
    %c0_30 = arith.constant 0 : index
    %c0_31 = arith.constant 0 : index
    %c0_32 = arith.constant 0 : index
    %24 = vector.load %arg4[%c1_29, %c0_30, %c0_31, %c0_32] : memref<3x3x256x256xbf16, #tpu.memory_space<vmem>>, vector<1x1x256x256xbf16>
    %25 = vector.shape_cast %24 : vector<1x1x256x256xbf16> to vector<256x256xbf16>
    %cst_33 = arith.constant dense<0.000000e+00> : vector<4x256xf32>
    %26 = tpu.matmul %23, %25, %cst_33 {dimension_numbers = #tpu.dot_dimension_numbers<[1], [0], [0], [1], [0, 0, 1, 1], [], []>} : vector<4x256xbf16>, vector<256x256xbf16>, vector<4x256xf32> -> vector<4x256xf32>
    %27 = arith.addf %21, %26 : vector<4x256xf32>
    %c0_34 = arith.constant 0 : index
    %c1_35 = arith.constant 1 : index
    %c2_36 = arith.constant 2 : index
    %c0_37 = arith.constant 0 : index
    %28 = vector.load %arg3[%c0_34, %c1_35, %c2_36, %c0_37] : memref<1x3x8x256xbf16, #tpu.memory_space<vmem>>, vector<1x1x4x256xbf16>
    %29 = vector.shape_cast %28 : vector<1x1x4x256xbf16> to vector<4x256xbf16>
    %c1_38 = arith.constant 1 : index
    %c1_39 = arith.constant 1 : index
    %c0_40 = arith.constant 0 : index
    %c0_41 = arith.constant 0 : index
    %30 = vector.load %arg4[%c1_38, %c1_39, %c0_40, %c0_41] : memref<3x3x256x256xbf16, #tpu.memory_space<vmem>>, vector<1x1x256x256xbf16>
    %31 = vector.shape_cast %30 : vector<1x1x256x256xbf16> to vector<256x256xbf16>
    %cst_42 = arith.constant dense<0.000000e+00> : vector<4x256xf32>
    %32 = tpu.matmul %29, %31, %cst_42 {dimension_numbers = #tpu.dot_dimension_numbers<[1], [0], [0], [1], [0, 0, 1, 1], [], []>} : vector<4x256xbf16>, vector<256x256xbf16>, vector<4x256xf32> -> vector<4x256xf32>
    %33 = arith.addf %27, %32 : vector<4x256xf32>
    %c0_43 = arith.constant 0 : index
    %c2_44 = arith.constant 2 : index
    %c2_45 = arith.constant 2 : index
    %c0_46 = arith.constant 0 : index
    %34 = vector.load %arg3[%c0_43, %c2_44, %c2_45, %c0_46] : memref<1x3x8x256xbf16, #tpu.memory_space<vmem>>, vector<1x1x4x256xbf16>
    %35 = vector.shape_cast %34 : vector<1x1x4x256xbf16> to vector<4x256xbf16>
    %c1_47 = arith.constant 1 : index
    %c2_48 = arith.constant 2 : index
    %c0_49 = arith.constant 0 : index
    %c0_50 = arith.constant 0 : index
    %36 = vector.load %arg4[%c1_47, %c2_48, %c0_49, %c0_50] : memref<3x3x256x256xbf16, #tpu.memory_space<vmem>>, vector<1x1x256x256xbf16>
    %37 = vector.shape_cast %36 : vector<1x1x256x256xbf16> to vector<256x256xbf16>
    %cst_51 = arith.constant dense<0.000000e+00> : vector<4x256xf32>
    %38 = tpu.matmul %35, %37, %cst_51 {dimension_numbers = #tpu.dot_dimension_numbers<[1], [0], [0], [1], [0, 0, 1, 1], [], []>} : vector<4x256xbf16>, vector<256x256xbf16>, vector<4x256xf32> -> vector<4x256xf32>
    %39 = arith.addf %33, %38 : vector<4x256xf32>
    %c0_52 = arith.constant 0 : index
    %c0_53 = arith.constant 0 : index
    %c4 = arith.constant 4 : index
    %c0_54 = arith.constant 0 : index
    %40 = vector.load %arg3[%c0_52, %c0_53, %c4, %c0_54] : memref<1x3x8x256xbf16, #tpu.memory_space<vmem>>, vector<1x1x4x256xbf16>
    %41 = vector.shape_cast %40 : vector<1x1x4x256xbf16> to vector<4x256xbf16>
    %c2_55 = arith.constant 2 : index
    %c0_56 = arith.constant 0 : index
    %c0_57 = arith.constant 0 : index
    %c0_58 = arith.constant 0 : index
    %42 = vector.load %arg4[%c2_55, %c0_56, %c0_57, %c0_58] : memref<3x3x256x256xbf16, #tpu.memory_space<vmem>>, vector<1x1x256x256xbf16>
    %43 = vector.shape_cast %42 : vector<1x1x256x256xbf16> to vector<256x256xbf16>
    %cst_59 = arith.constant dense<0.000000e+00> : vector<4x256xf32>
    %44 = tpu.matmul %41, %43, %cst_59 {dimension_numbers = #tpu.dot_dimension_numbers<[1], [0], [0], [1], [0, 0, 1, 1], [], []>} : vector<4x256xbf16>, vector<256x256xbf16>, vector<4x256xf32> -> vector<4x256xf32>
    %45 = arith.addf %39, %44 : vector<4x256xf32>
    %c0_60 = arith.constant 0 : index
    %c1_61 = arith.constant 1 : index
    %c4_62 = arith.constant 4 : index
    %c0_63 = arith.constant 0 : index
    %46 = vector.load %arg3[%c0_60, %c1_61, %c4_62, %c0_63] : memref<1x3x8x256xbf16, #tpu.memory_space<vmem>>, vector<1x1x4x256xbf16>
    %47 = vector.shape_cast %46 : vector<1x1x4x256xbf16> to vector<4x256xbf16>
    %c2_64 = arith.constant 2 : index
    %c1_65 = arith.constant 1 : index
    %c0_66 = arith.constant 0 : index
    %c0_67 = arith.constant 0 : index
    %48 = vector.load %arg4[%c2_64, %c1_65, %c0_66, %c0_67] : memref<3x3x256x256xbf16, #tpu.memory_space<vmem>>, vector<1x1x256x256xbf16>
    %49 = vector.shape_cast %48 : vector<1x1x256x256xbf16> to vector<256x256xbf16>
    %cst_68 = arith.constant dense<0.000000e+00> : vector<4x256xf32>
    %50 = tpu.matmul %47, %49, %cst_68 {dimension_numbers = #tpu.dot_dimension_numbers<[1], [0], [0], [1], [0, 0, 1, 1], [], []>} : vector<4x256xbf16>, vector<256x256xbf16>, vector<4x256xf32> -> vector<4x256xf32>
    %51 = arith.addf %45, %50 : vector<4x256xf32>
    %c0_69 = arith.constant 0 : index
    %c2_70 = arith.constant 2 : index
    %c4_71 = arith.constant 4 : index
    %c0_72 = arith.constant 0 : index
    %52 = vector.load %arg3[%c0_69, %c2_70, %c4_71, %c0_72] : memref<1x3x8x256xbf16, #tpu.memory_space<vmem>>, vector<1x1x4x256xbf16>
    %53 = vector.shape_cast %52 : vector<1x1x4x256xbf16> to vector<4x256xbf16>
    %c2_73 = arith.constant 2 : index
    %c2_74 = arith.constant 2 : index
    %c0_75 = arith.constant 0 : index
    %c0_76 = arith.constant 0 : index
    %54 = vector.load %arg4[%c2_73, %c2_74, %c0_75, %c0_76] : memref<3x3x256x256xbf16, #tpu.memory_space<vmem>>, vector<1x1x256x256xbf16>
    %55 = vector.shape_cast %54 : vector<1x1x256x256xbf16> to vector<256x256xbf16>
    %cst_77 = arith.constant dense<0.000000e+00> : vector<4x256xf32>
    %56 = tpu.matmul %53, %55, %cst_77 {dimension_numbers = #tpu.dot_dimension_numbers<[1], [0], [0], [1], [0, 0, 1, 1], [], []>} : vector<4x256xbf16>, vector<256x256xbf16>, vector<4x256xf32> -> vector<4x256xf32>
    %57 = arith.addf %51, %56 : vector<4x256xf32>
    %c0_78 = arith.constant 0 : index
    %c0_79 = arith.constant 0 : index
    %c0_80 = arith.constant 0 : index
    %58 = vector.load %arg9[%c0_78, %c0_79, %c0_80] : memref<1x4x256xf32, #tpu.memory_space<vmem>>, vector<1x4x256xf32>
    %59 = vector.shape_cast %58 : vector<1x4x256xf32> to vector<4x256xf32>
    %60 = arith.addf %59, %57 : vector<4x256xf32>
    %c0_81 = arith.constant 0 : index
    %c0_82 = arith.constant 0 : index
    %c0_83 = arith.constant 0 : index
    %61 = vector.load %arg9[%c0_81, %c0_82, %c0_83] : memref<1x4x256xf32, #tpu.memory_space<vmem>>, vector<1x4x256xf32>
    %62 = vector.shape_cast %61 : vector<1x4x256xf32> to vector<4x256xf32>
    %63 = vector.shape_cast %60 : vector<4x256xf32> to vector<1x4x256xf32>
    tpu.vector_store %arg9[%c0_81, %c0_82, %c0_83], %63 {strides = array<i32>} : memref<1x4x256xf32, #tpu.memory_space<vmem>>, vector<1x4x256xf32>,
    %c1_i32 = arith.constant 1 : i32
    %64 = arith.cmpi eq, %arg2, %c1_i32 : i32
    %65 = arith.extui %64 : i1 to i32
    %c0_i32_84 = arith.constant 0 : i32
    %66 = arith.cmpi ne, %65, %c0_i32_84 : i32
    scf.if %66 {
      %c0_85 = arith.constant 0 : index
      %c0_86 = arith.constant 0 : index
      %c0_87 = arith.constant 0 : index
      %67 = vector.load %arg9[%c0_85, %c0_86, %c0_87] : memref<1x4x256xf32, #tpu.memory_space<vmem>>, vector<1x4x256xf32>
      %68 = vector.shape_cast %67 : vector<1x4x256xf32> to vector<4x256xf32>
      %c0_88 = arith.constant 0 : index
      %c0_89 = arith.constant 0 : index
      %69 = vector.load %arg5[%c0_88, %c0_89] : memref<1x256xf32, #tpu.memory_space<vmem>>, vector<1x256xf32>
      %70 = vector.broadcast %69 : vector<1x256xf32> to vector<4x256xf32>
      %71 = arith.addf %68, %70 : vector<4x256xf32>
      %c0_90 = arith.constant 0 : index
      %c0_91 = arith.constant 0 : index
      %c0_92 = arith.constant 0 : index
      %72 = vector.load %arg6[%c0_90, %c0_91, %c0_92] : memref<1x4x256xf32, #tpu.memory_space<vmem>>, vector<1x4x256xf32>
      %73 = vector.shape_cast %72 : vector<1x4x256xf32> to vector<4x256xf32>
      %c0_93 = arith.constant 0 : index
      %c0_94 = arith.constant 0 : index
      %74 = vector.load %arg7[%c0_93, %c0_94] : memref<1x256xf32, #tpu.memory_space<vmem>>, vector<1x256xf32>
      %75 = vector.broadcast %74 : vector<1x256xf32> to vector<4x256xf32>
      %76 = arith.mulf %73, %75 : vector<4x256xf32>
      %77 = arith.addf %71, %76 : vector<4x256xf32>
      %c0_95 = arith.constant 0 : index
      %c0_96 = arith.constant 0 : index
      %78 = vector.load %arg8[%c0_95, %c0_96] : memref<1x256xf32, #tpu.memory_space<vmem>>, vector<1x256xf32>
      %79 = vector.broadcast %78 : vector<1x256xf32> to vector<4x256xf32>
      %80 = arith.addf %77, %79 : vector<4x256xf32>
      %c0_97 = arith.constant 0 : index
      %c0_98 = arith.constant 0 : index
      %c0_99 = arith.constant 0 : index
      %81 = vector.load %arg9[%c0_97, %c0_98, %c0_99] : memref<1x4x256xf32, #tpu.memory_space<vmem>>, vector<1x4x256xf32>
      %82 = vector.shape_cast %81 : vector<1x4x256xf32> to vector<4x256xf32>
      %83 = vector.shape_cast %80 : vector<4x256xf32> to vector<1x4x256xf32>
      tpu.vector_store %arg9[%c0_97, %c0_98, %c0_99], %83 {strides = array<i32>} : memref<1x4x256xf32, #tpu.memory_space<vmem>>, vector<1x4x256xf32>,
    } else {
    }
    return
  }
  func.func @transform_0(%arg0: i32, %arg1: i32, %arg2: i32) -> (i32, i32, i32, i32) {
    %c0_i32 = arith.constant 0 : i32
    %c0_i32_0 = arith.constant 0 : i32
    %c0_i32_1 = arith.constant 0 : i32
    return %arg0, %c0_i32, %c0_i32_0, %arg2 : i32, i32, i32, i32
  }
  func.func @transform_1(%arg0: i32, %arg1: i32, %arg2: i32) -> (i32, i32, i32, i32) {
    %c0_i32 = arith.constant 0 : i32
    %c0_i32_0 = arith.constant 0 : i32
    %c0_i32_1 = arith.constant 0 : i32
    return %c0_i32, %c0_i32_0, %arg2, %arg1 : i32, i32, i32, i32
  }
  func.func @transform_2(%arg0: i32, %arg1: i32, %arg2: i32) -> (i32, i32) {
    %c0_i32 = arith.constant 0 : i32
    %c0_i32_0 = arith.constant 0 : i32
    return %c0_i32, %arg1 : i32, i32
  }
  func.func @transform_3(%arg0: i32, %arg1: i32, %arg2: i32) -> (i32, i32, i32) {
    %c0_i32 = arith.constant 0 : i32
    %c0_i32_0 = arith.constant 0 : i32
    return %arg0, %c0_i32, %arg1 : i32, i32, i32
  }
  func.func @transform_4(%arg0: i32, %arg1: i32, %arg2: i32) -> (i32, i32) {
    %c0_i32 = arith.constant 0 : i32
    %c0_i32_0 = arith.constant 0 : i32
    return %c0_i32, %arg1 : i32, i32
  }
  func.func @transform_5(%arg0: i32, %arg1: i32, %arg2: i32) -> (i32, i32) {
    %c0_i32 = arith.constant 0 : i32
    %c0_i32_0 = arith.constant 0 : i32
    return %c0_i32, %arg1 : i32, i32
  }
  func.func @transform_6(%arg0: i32, %arg1: i32, %arg2: i32) -> (i32, i32, i32) {
    %c0_i32 = arith.constant 0 : i32
    %c0_i32_0 = arith.constant 0 : i32
    return %arg0, %c0_i32, %arg1 : i32, i32, i32
  }
}

module attributes {stable_mosaic.version = 11 : i64} {
  func.func @_conv3x3_kernel(%arg0: i32, %arg1: i32, %arg2: i32, %arg3: memref<1x3x3x256xbf16, #tpu.memory_space<vmem>>, %arg4: memref<3x3x256x256xbf16, #tpu.memory_space<vmem>>, %arg5: memref<1x256xf32, #tpu.memory_space<vmem>>, %arg6: memref<1x1x256xf32, #tpu.memory_space<vmem>>) attributes {dimension_semantics = [#tpu.dimension_semantics<parallel>, #tpu.dimension_semantics<parallel>, #tpu.dimension_semantics<arbitrary>], iteration_bounds = array<i64: 2, 4, 2>, scalar_prefetch = 0 : i64, scratch_operands = 0 : i64, tpu.core_type = #tpu.core_type<tc>, window_params = [{transform_indices = @transform_0, window_bounds = array<i64: 1, 3, 3, 256>}, {transform_indices = @transform_1, window_bounds = array<i64: 3, 3, 256, 256>}, {transform_indices = @transform_2, window_bounds = array<i64: 1, 256>}, {transform_indices = @transform_3, window_bounds = array<i64: 1, 1, 256>}]} {
    %c0_i32 = arith.constant 0 : i32
    %0 = arith.cmpi eq, %arg2, %c0_i32 : i32
    %1 = arith.extui %0 : i1 to i32
    %c0_i32_0 = arith.constant 0 : i32
    %2 = arith.cmpi ne, %1, %c0_i32_0 : i32
    scf.if %2 {
      %cst_86 = arith.constant 0.000000e+00 : f32
      %67 = vector.broadcast %cst_86 : f32 to vector<1x1x256xf32>
      %c0_87 = arith.constant 0 : index
      %c0_88 = arith.constant 0 : index
      %c0_89 = arith.constant 0 : index
      %68 = vector.load %arg6[%c0_87, %c0_88, %c0_89] : memref<1x1x256xf32, #tpu.memory_space<vmem>>, vector<1x1x256xf32>
      tpu.vector_store %arg6[%c0_87, %c0_88, %c0_89], %67 {strides = array<i32>} : memref<1x1x256xf32, #tpu.memory_space<vmem>>, vector<1x1x256xf32>,
    } else {
    }
    %cst = arith.constant 0.000000e+00 : f32
    %3 = vector.broadcast %cst : f32 to vector<1x256xf32>
    %c0 = arith.constant 0 : index
    %c0_1 = arith.constant 0 : index
    %c0_2 = arith.constant 0 : index
    %c0_3 = arith.constant 0 : index
    %4 = vector.load %arg3[%c0, %c0_1, %c0_2, %c0_3] : memref<1x3x3x256xbf16, #tpu.memory_space<vmem>>, vector<1x1x1x256xbf16>
    %5 = vector.shape_cast %4 : vector<1x1x1x256xbf16> to vector<1x256xbf16>
    %c0_4 = arith.constant 0 : index
    %c0_5 = arith.constant 0 : index
    %c0_6 = arith.constant 0 : index
    %c0_7 = arith.constant 0 : index
    %6 = vector.load %arg4[%c0_4, %c0_5, %c0_6, %c0_7] : memref<3x3x256x256xbf16, #tpu.memory_space<vmem>>, vector<1x1x256x256xbf16>
    %7 = vector.shape_cast %6 : vector<1x1x256x256xbf16> to vector<256x256xbf16>
    %cst_8 = arith.constant dense<0.000000e+00> : vector<1x256xf32>
    %8 = tpu.matmul %5, %7, %cst_8 {dimension_numbers = #tpu.dot_dimension_numbers<[1], [0], [0], [1], [0, 0, 1, 1], [], []>} : vector<1x256xbf16>, vector<256x256xbf16>, vector<1x256xf32> -> vector<1x256xf32>
    %9 = arith.addf %3, %8 : vector<1x256xf32>
    %c0_9 = arith.constant 0 : index
    %c1 = arith.constant 1 : index
    %c0_10 = arith.constant 0 : index
    %c0_11 = arith.constant 0 : index
    %10 = vector.load %arg3[%c0_9, %c1, %c0_10, %c0_11] : memref<1x3x3x256xbf16, #tpu.memory_space<vmem>>, vector<1x1x1x256xbf16>
    %11 = vector.shape_cast %10 : vector<1x1x1x256xbf16> to vector<1x256xbf16>
    %c0_12 = arith.constant 0 : index
    %c1_13 = arith.constant 1 : index
    %c0_14 = arith.constant 0 : index
    %c0_15 = arith.constant 0 : index
    %12 = vector.load %arg4[%c0_12, %c1_13, %c0_14, %c0_15] : memref<3x3x256x256xbf16, #tpu.memory_space<vmem>>, vector<1x1x256x256xbf16>
    %13 = vector.shape_cast %12 : vector<1x1x256x256xbf16> to vector<256x256xbf16>
    %cst_16 = arith.constant dense<0.000000e+00> : vector<1x256xf32>
    %14 = tpu.matmul %11, %13, %cst_16 {dimension_numbers = #tpu.dot_dimension_numbers<[1], [0], [0], [1], [0, 0, 1, 1], [], []>} : vector<1x256xbf16>, vector<256x256xbf16>, vector<1x256xf32> -> vector<1x256xf32>
    %15 = arith.addf %9, %14 : vector<1x256xf32>
    %c0_17 = arith.constant 0 : index
    %c2 = arith.constant 2 : index
    %c0_18 = arith.constant 0 : index
    %c0_19 = arith.constant 0 : index
    %16 = vector.load %arg3[%c0_17, %c2, %c0_18, %c0_19] : memref<1x3x3x256xbf16, #tpu.memory_space<vmem>>, vector<1x1x1x256xbf16>
    %17 = vector.shape_cast %16 : vector<1x1x1x256xbf16> to vector<1x256xbf16>
    %c0_20 = arith.constant 0 : index
    %c2_21 = arith.constant 2 : index
    %c0_22 = arith.constant 0 : index
    %c0_23 = arith.constant 0 : index
    %18 = vector.load %arg4[%c0_20, %c2_21, %c0_22, %c0_23] : memref<3x3x256x256xbf16, #tpu.memory_space<vmem>>, vector<1x1x256x256xbf16>
    %19 = vector.shape_cast %18 : vector<1x1x256x256xbf16> to vector<256x256xbf16>
    %cst_24 = arith.constant dense<0.000000e+00> : vector<1x256xf32>
    %20 = tpu.matmul %17, %19, %cst_24 {dimension_numbers = #tpu.dot_dimension_numbers<[1], [0], [0], [1], [0, 0, 1, 1], [], []>} : vector<1x256xbf16>, vector<256x256xbf16>, vector<1x256xf32> -> vector<1x256xf32>
    %21 = arith.addf %15, %20 : vector<1x256xf32>
    %c0_25 = arith.constant 0 : index
    %c0_26 = arith.constant 0 : index
    %c1_27 = arith.constant 1 : index
    %c0_28 = arith.constant 0 : index
    %22 = vector.load %arg3[%c0_25, %c0_26, %c1_27, %c0_28] : memref<1x3x3x256xbf16, #tpu.memory_space<vmem>>, vector<1x1x1x256xbf16>
    %23 = vector.shape_cast %22 : vector<1x1x1x256xbf16> to vector<1x256xbf16>
    %c1_29 = arith.constant 1 : index
    %c0_30 = arith.constant 0 : index
    %c0_31 = arith.constant 0 : index
    %c0_32 = arith.constant 0 : index
    %24 = vector.load %arg4[%c1_29, %c0_30, %c0_31, %c0_32] : memref<3x3x256x256xbf16, #tpu.memory_space<vmem>>, vector<1x1x256x256xbf16>
    %25 = vector.shape_cast %24 : vector<1x1x256x256xbf16> to vector<256x256xbf16>
    %cst_33 = arith.constant dense<0.000000e+00> : vector<1x256xf32>
    %26 = tpu.matmul %23, %25, %cst_33 {dimension_numbers = #tpu.dot_dimension_numbers<[1], [0], [0], [1], [0, 0, 1, 1], [], []>} : vector<1x256xbf16>, vector<256x256xbf16>, vector<1x256xf32> -> vector<1x256xf32>
    %27 = arith.addf %21, %26 : vector<1x256xf32>
    %c0_34 = arith.constant 0 : index
    %c1_35 = arith.constant 1 : index
    %c1_36 = arith.constant 1 : index
    %c0_37 = arith.constant 0 : index
    %28 = vector.load %arg3[%c0_34, %c1_35, %c1_36, %c0_37] : memref<1x3x3x256xbf16, #tpu.memory_space<vmem>>, vector<1x1x1x256xbf16>
    %29 = vector.shape_cast %28 : vector<1x1x1x256xbf16> to vector<1x256xbf16>
    %c1_38 = arith.constant 1 : index
    %c1_39 = arith.constant 1 : index
    %c0_40 = arith.constant 0 : index
    %c0_41 = arith.constant 0 : index
    %30 = vector.load %arg4[%c1_38, %c1_39, %c0_40, %c0_41] : memref<3x3x256x256xbf16, #tpu.memory_space<vmem>>, vector<1x1x256x256xbf16>
    %31 = vector.shape_cast %30 : vector<1x1x256x256xbf16> to vector<256x256xbf16>
    %cst_42 = arith.constant dense<0.000000e+00> : vector<1x256xf32>
    %32 = tpu.matmul %29, %31, %cst_42 {dimension_numbers = #tpu.dot_dimension_numbers<[1], [0], [0], [1], [0, 0, 1, 1], [], []>} : vector<1x256xbf16>, vector<256x256xbf16>, vector<1x256xf32> -> vector<1x256xf32>
    %33 = arith.addf %27, %32 : vector<1x256xf32>
    %c0_43 = arith.constant 0 : index
    %c2_44 = arith.constant 2 : index
    %c1_45 = arith.constant 1 : index
    %c0_46 = arith.constant 0 : index
    %34 = vector.load %arg3[%c0_43, %c2_44, %c1_45, %c0_46] : memref<1x3x3x256xbf16, #tpu.memory_space<vmem>>, vector<1x1x1x256xbf16>
    %35 = vector.shape_cast %34 : vector<1x1x1x256xbf16> to vector<1x256xbf16>
    %c1_47 = arith.constant 1 : index
    %c2_48 = arith.constant 2 : index
    %c0_49 = arith.constant 0 : index
    %c0_50 = arith.constant 0 : index
    %36 = vector.load %arg4[%c1_47, %c2_48, %c0_49, %c0_50] : memref<3x3x256x256xbf16, #tpu.memory_space<vmem>>, vector<1x1x256x256xbf16>
    %37 = vector.shape_cast %36 : vector<1x1x256x256xbf16> to vector<256x256xbf16>
    %cst_51 = arith.constant dense<0.000000e+00> : vector<1x256xf32>
    %38 = tpu.matmul %35, %37, %cst_51 {dimension_numbers = #tpu.dot_dimension_numbers<[1], [0], [0], [1], [0, 0, 1, 1], [], []>} : vector<1x256xbf16>, vector<256x256xbf16>, vector<1x256xf32> -> vector<1x256xf32>
    %39 = arith.addf %33, %38 : vector<1x256xf32>
    %c0_52 = arith.constant 0 : index
    %c0_53 = arith.constant 0 : index
    %c2_54 = arith.constant 2 : index
    %c0_55 = arith.constant 0 : index
    %40 = vector.load %arg3[%c0_52, %c0_53, %c2_54, %c0_55] : memref<1x3x3x256xbf16, #tpu.memory_space<vmem>>, vector<1x1x1x256xbf16>
    %41 = vector.shape_cast %40 : vector<1x1x1x256xbf16> to vector<1x256xbf16>
    %c2_56 = arith.constant 2 : index
    %c0_57 = arith.constant 0 : index
    %c0_58 = arith.constant 0 : index
    %c0_59 = arith.constant 0 : index
    %42 = vector.load %arg4[%c2_56, %c0_57, %c0_58, %c0_59] : memref<3x3x256x256xbf16, #tpu.memory_space<vmem>>, vector<1x1x256x256xbf16>
    %43 = vector.shape_cast %42 : vector<1x1x256x256xbf16> to vector<256x256xbf16>
    %cst_60 = arith.constant dense<0.000000e+00> : vector<1x256xf32>
    %44 = tpu.matmul %41, %43, %cst_60 {dimension_numbers = #tpu.dot_dimension_numbers<[1], [0], [0], [1], [0, 0, 1, 1], [], []>} : vector<1x256xbf16>, vector<256x256xbf16>, vector<1x256xf32> -> vector<1x256xf32>
    %45 = arith.addf %39, %44 : vector<1x256xf32>
    %c0_61 = arith.constant 0 : index
    %c1_62 = arith.constant 1 : index
    %c2_63 = arith.constant 2 : index
    %c0_64 = arith.constant 0 : index
    %46 = vector.load %arg3[%c0_61, %c1_62, %c2_63, %c0_64] : memref<1x3x3x256xbf16, #tpu.memory_space<vmem>>, vector<1x1x1x256xbf16>
    %47 = vector.shape_cast %46 : vector<1x1x1x256xbf16> to vector<1x256xbf16>
    %c2_65 = arith.constant 2 : index
    %c1_66 = arith.constant 1 : index
    %c0_67 = arith.constant 0 : index
    %c0_68 = arith.constant 0 : index
    %48 = vector.load %arg4[%c2_65, %c1_66, %c0_67, %c0_68] : memref<3x3x256x256xbf16, #tpu.memory_space<vmem>>, vector<1x1x256x256xbf16>
    %49 = vector.shape_cast %48 : vector<1x1x256x256xbf16> to vector<256x256xbf16>
    %cst_69 = arith.constant dense<0.000000e+00> : vector<1x256xf32>
    %50 = tpu.matmul %47, %49, %cst_69 {dimension_numbers = #tpu.dot_dimension_numbers<[1], [0], [0], [1], [0, 0, 1, 1], [], []>} : vector<1x256xbf16>, vector<256x256xbf16>, vector<1x256xf32> -> vector<1x256xf32>
    %51 = arith.addf %45, %50 : vector<1x256xf32>
    %c0_70 = arith.constant 0 : index
    %c2_71 = arith.constant 2 : index
    %c2_72 = arith.constant 2 : index
    %c0_73 = arith.constant 0 : index
    %52 = vector.load %arg3[%c0_70, %c2_71, %c2_72, %c0_73] : memref<1x3x3x256xbf16, #tpu.memory_space<vmem>>, vector<1x1x1x256xbf16>
    %53 = vector.shape_cast %52 : vector<1x1x1x256xbf16> to vector<1x256xbf16>
    %c2_74 = arith.constant 2 : index
    %c2_75 = arith.constant 2 : index
    %c0_76 = arith.constant 0 : index
    %c0_77 = arith.constant 0 : index
    %54 = vector.load %arg4[%c2_74, %c2_75, %c0_76, %c0_77] : memref<3x3x256x256xbf16, #tpu.memory_space<vmem>>, vector<1x1x256x256xbf16>
    %55 = vector.shape_cast %54 : vector<1x1x256x256xbf16> to vector<256x256xbf16>
    %cst_78 = arith.constant dense<0.000000e+00> : vector<1x256xf32>
    %56 = tpu.matmul %53, %55, %cst_78 {dimension_numbers = #tpu.dot_dimension_numbers<[1], [0], [0], [1], [0, 0, 1, 1], [], []>} : vector<1x256xbf16>, vector<256x256xbf16>, vector<1x256xf32> -> vector<1x256xf32>
    %57 = arith.addf %51, %56 : vector<1x256xf32>
    %c0_79 = arith.constant 0 : index
    %c0_80 = arith.constant 0 : index
    %c0_81 = arith.constant 0 : index
    %58 = vector.load %arg6[%c0_79, %c0_80, %c0_81] : memref<1x1x256xf32, #tpu.memory_space<vmem>>, vector<1x1x256xf32>
    %59 = vector.shape_cast %58 : vector<1x1x256xf32> to vector<1x256xf32>
    %60 = arith.addf %59, %57 : vector<1x256xf32>
    %c0_82 = arith.constant 0 : index
    %c0_83 = arith.constant 0 : index
    %c0_84 = arith.constant 0 : index
    %61 = vector.load %arg6[%c0_82, %c0_83, %c0_84] : memref<1x1x256xf32, #tpu.memory_space<vmem>>, vector<1x1x256xf32>
    %62 = vector.shape_cast %61 : vector<1x1x256xf32> to vector<1x256xf32>
    %63 = vector.shape_cast %60 : vector<1x256xf32> to vector<1x1x256xf32>
    tpu.vector_store %arg6[%c0_82, %c0_83, %c0_84], %63 {strides = array<i32>} : memref<1x1x256xf32, #tpu.memory_space<vmem>>, vector<1x1x256xf32>,
    %c1_i32 = arith.constant 1 : i32
    %64 = arith.cmpi eq, %arg2, %c1_i32 : i32
    %65 = arith.extui %64 : i1 to i32
    %c0_i32_85 = arith.constant 0 : i32
    %66 = arith.cmpi ne, %65, %c0_i32_85 : i32
    scf.if %66 {
      %c0_86 = arith.constant 0 : index
      %c0_87 = arith.constant 0 : index
      %c0_88 = arith.constant 0 : index
      %67 = vector.load %arg6[%c0_86, %c0_87, %c0_88] : memref<1x1x256xf32, #tpu.memory_space<vmem>>, vector<1x1x256xf32>
      %68 = vector.shape_cast %67 : vector<1x1x256xf32> to vector<1x256xf32>
      %c0_89 = arith.constant 0 : index
      %c0_90 = arith.constant 0 : index
      %69 = vector.load %arg5[%c0_89, %c0_90] : memref<1x256xf32, #tpu.memory_space<vmem>>, vector<1x256xf32>
      %70 = arith.addf %68, %69 : vector<1x256xf32>
      %c0_91 = arith.constant 0 : index
      %c0_92 = arith.constant 0 : index
      %c0_93 = arith.constant 0 : index
      %71 = vector.load %arg6[%c0_91, %c0_92, %c0_93] : memref<1x1x256xf32, #tpu.memory_space<vmem>>, vector<1x1x256xf32>
      %72 = vector.shape_cast %71 : vector<1x1x256xf32> to vector<1x256xf32>
      %73 = vector.shape_cast %70 : vector<1x256xf32> to vector<1x1x256xf32>
      tpu.vector_store %arg6[%c0_91, %c0_92, %c0_93], %73 {strides = array<i32>} : memref<1x1x256xf32, #tpu.memory_space<vmem>>, vector<1x1x256xf32>,
    } else {
    }
    return
  }
  func.func @transform_0(%arg0: i32, %arg1: i32, %arg2: i32) -> (i32, i32, i32, i32) {
    %c0_i32 = arith.constant 0 : i32
    %c0_i32_0 = arith.constant 0 : i32
    %c0_i32_1 = arith.constant 0 : i32
    return %arg0, %c0_i32, %c0_i32_0, %arg2 : i32, i32, i32, i32
  }
  func.func @transform_1(%arg0: i32, %arg1: i32, %arg2: i32) -> (i32, i32, i32, i32) {
    %c0_i32 = arith.constant 0 : i32
    %c0_i32_0 = arith.constant 0 : i32
    %c0_i32_1 = arith.constant 0 : i32
    return %c0_i32, %c0_i32_0, %arg2, %arg1 : i32, i32, i32, i32
  }
  func.func @transform_2(%arg0: i32, %arg1: i32, %arg2: i32) -> (i32, i32) {
    %c0_i32 = arith.constant 0 : i32
    %c0_i32_0 = arith.constant 0 : i32
    return %c0_i32, %arg1 : i32, i32
  }
  func.func @transform_3(%arg0: i32, %arg1: i32, %arg2: i32) -> (i32, i32, i32) {
    %c0_i32 = arith.constant 0 : i32
    %c0_i32_0 = arith.constant 0 : i32
    return %arg0, %c0_i32, %arg1 : i32, i32, i32
  }
}

module attributes {stable_mosaic.version = 11 : i64} {
  func.func @_conv3x3_kernel(%arg0: i32, %arg1: i32, %arg2: i32, %arg3: memref<1x3x3x256xbf16, #tpu.memory_space<vmem>>, %arg4: memref<3x3x256x256xbf16, #tpu.memory_space<vmem>>, %arg5: memref<1x256xf32, #tpu.memory_space<vmem>>, %arg6: memref<1x1x256xf32, #tpu.memory_space<vmem>>) attributes {dimension_semantics = [#tpu.dimension_semantics<parallel>, #tpu.dimension_semantics<parallel>, #tpu.dimension_semantics<arbitrary>], iteration_bounds = array<i64: 2, 4, 4>, scalar_prefetch = 0 : i64, scratch_operands = 0 : i64, tpu.core_type = #tpu.core_type<tc>, window_params = [{transform_indices = @transform_0, window_bounds = array<i64: 1, 3, 3, 256>}, {transform_indices = @transform_1, window_bounds = array<i64: 3, 3, 256, 256>}, {transform_indices = @transform_2, window_bounds = array<i64: 1, 256>}, {transform_indices = @transform_3, window_bounds = array<i64: 1, 1, 256>}]} {
    %c0_i32 = arith.constant 0 : i32
    %0 = arith.cmpi eq, %arg2, %c0_i32 : i32
    %1 = arith.extui %0 : i1 to i32
    %c0_i32_0 = arith.constant 0 : i32
    %2 = arith.cmpi ne, %1, %c0_i32_0 : i32
    scf.if %2 {
      %cst_86 = arith.constant 0.000000e+00 : f32
      %67 = vector.broadcast %cst_86 : f32 to vector<1x1x256xf32>
      %c0_87 = arith.constant 0 : index
      %c0_88 = arith.constant 0 : index
      %c0_89 = arith.constant 0 : index
      %68 = vector.load %arg6[%c0_87, %c0_88, %c0_89] : memref<1x1x256xf32, #tpu.memory_space<vmem>>, vector<1x1x256xf32>
      tpu.vector_store %arg6[%c0_87, %c0_88, %c0_89], %67 {strides = array<i32>} : memref<1x1x256xf32, #tpu.memory_space<vmem>>, vector<1x1x256xf32>,
    } else {
    }
    %cst = arith.constant 0.000000e+00 : f32
    %3 = vector.broadcast %cst : f32 to vector<1x256xf32>
    %c0 = arith.constant 0 : index
    %c0_1 = arith.constant 0 : index
    %c0_2 = arith.constant 0 : index
    %c0_3 = arith.constant 0 : index
    %4 = vector.load %arg3[%c0, %c0_1, %c0_2, %c0_3] : memref<1x3x3x256xbf16, #tpu.memory_space<vmem>>, vector<1x1x1x256xbf16>
    %5 = vector.shape_cast %4 : vector<1x1x1x256xbf16> to vector<1x256xbf16>
    %c0_4 = arith.constant 0 : index
    %c0_5 = arith.constant 0 : index
    %c0_6 = arith.constant 0 : index
    %c0_7 = arith.constant 0 : index
    %6 = vector.load %arg4[%c0_4, %c0_5, %c0_6, %c0_7] : memref<3x3x256x256xbf16, #tpu.memory_space<vmem>>, vector<1x1x256x256xbf16>
    %7 = vector.shape_cast %6 : vector<1x1x256x256xbf16> to vector<256x256xbf16>
    %cst_8 = arith.constant dense<0.000000e+00> : vector<1x256xf32>
    %8 = tpu.matmul %5, %7, %cst_8 {dimension_numbers = #tpu.dot_dimension_numbers<[1], [0], [0], [1], [0, 0, 1, 1], [], []>} : vector<1x256xbf16>, vector<256x256xbf16>, vector<1x256xf32> -> vector<1x256xf32>
    %9 = arith.addf %3, %8 : vector<1x256xf32>
    %c0_9 = arith.constant 0 : index
    %c1 = arith.constant 1 : index
    %c0_10 = arith.constant 0 : index
    %c0_11 = arith.constant 0 : index
    %10 = vector.load %arg3[%c0_9, %c1, %c0_10, %c0_11] : memref<1x3x3x256xbf16, #tpu.memory_space<vmem>>, vector<1x1x1x256xbf16>
    %11 = vector.shape_cast %10 : vector<1x1x1x256xbf16> to vector<1x256xbf16>
    %c0_12 = arith.constant 0 : index
    %c1_13 = arith.constant 1 : index
    %c0_14 = arith.constant 0 : index
    %c0_15 = arith.constant 0 : index
    %12 = vector.load %arg4[%c0_12, %c1_13, %c0_14, %c0_15] : memref<3x3x256x256xbf16, #tpu.memory_space<vmem>>, vector<1x1x256x256xbf16>
    %13 = vector.shape_cast %12 : vector<1x1x256x256xbf16> to vector<256x256xbf16>
    %cst_16 = arith.constant dense<0.000000e+00> : vector<1x256xf32>
    %14 = tpu.matmul %11, %13, %cst_16 {dimension_numbers = #tpu.dot_dimension_numbers<[1], [0], [0], [1], [0, 0, 1, 1], [], []>} : vector<1x256xbf16>, vector<256x256xbf16>, vector<1x256xf32> -> vector<1x256xf32>
    %15 = arith.addf %9, %14 : vector<1x256xf32>
    %c0_17 = arith.constant 0 : index
    %c2 = arith.constant 2 : index
    %c0_18 = arith.constant 0 : index
    %c0_19 = arith.constant 0 : index
    %16 = vector.load %arg3[%c0_17, %c2, %c0_18, %c0_19] : memref<1x3x3x256xbf16, #tpu.memory_space<vmem>>, vector<1x1x1x256xbf16>
    %17 = vector.shape_cast %16 : vector<1x1x1x256xbf16> to vector<1x256xbf16>
    %c0_20 = arith.constant 0 : index
    %c2_21 = arith.constant 2 : index
    %c0_22 = arith.constant 0 : index
    %c0_23 = arith.constant 0 : index
    %18 = vector.load %arg4[%c0_20, %c2_21, %c0_22, %c0_23] : memref<3x3x256x256xbf16, #tpu.memory_space<vmem>>, vector<1x1x256x256xbf16>
    %19 = vector.shape_cast %18 : vector<1x1x256x256xbf16> to vector<256x256xbf16>
    %cst_24 = arith.constant dense<0.000000e+00> : vector<1x256xf32>
    %20 = tpu.matmul %17, %19, %cst_24 {dimension_numbers = #tpu.dot_dimension_numbers<[1], [0], [0], [1], [0, 0, 1, 1], [], []>} : vector<1x256xbf16>, vector<256x256xbf16>, vector<1x256xf32> -> vector<1x256xf32>
    %21 = arith.addf %15, %20 : vector<1x256xf32>
    %c0_25 = arith.constant 0 : index
    %c0_26 = arith.constant 0 : index
    %c1_27 = arith.constant 1 : index
    %c0_28 = arith.constant 0 : index
    %22 = vector.load %arg3[%c0_25, %c0_26, %c1_27, %c0_28] : memref<1x3x3x256xbf16, #tpu.memory_space<vmem>>, vector<1x1x1x256xbf16>
    %23 = vector.shape_cast %22 : vector<1x1x1x256xbf16> to vector<1x256xbf16>
    %c1_29 = arith.constant 1 : index
    %c0_30 = arith.constant 0 : index
    %c0_31 = arith.constant 0 : index
    %c0_32 = arith.constant 0 : index
    %24 = vector.load %arg4[%c1_29, %c0_30, %c0_31, %c0_32] : memref<3x3x256x256xbf16, #tpu.memory_space<vmem>>, vector<1x1x256x256xbf16>
    %25 = vector.shape_cast %24 : vector<1x1x256x256xbf16> to vector<256x256xbf16>
    %cst_33 = arith.constant dense<0.000000e+00> : vector<1x256xf32>
    %26 = tpu.matmul %23, %25, %cst_33 {dimension_numbers = #tpu.dot_dimension_numbers<[1], [0], [0], [1], [0, 0, 1, 1], [], []>} : vector<1x256xbf16>, vector<256x256xbf16>, vector<1x256xf32> -> vector<1x256xf32>
    %27 = arith.addf %21, %26 : vector<1x256xf32>
    %c0_34 = arith.constant 0 : index
    %c1_35 = arith.constant 1 : index
    %c1_36 = arith.constant 1 : index
    %c0_37 = arith.constant 0 : index
    %28 = vector.load %arg3[%c0_34, %c1_35, %c1_36, %c0_37] : memref<1x3x3x256xbf16, #tpu.memory_space<vmem>>, vector<1x1x1x256xbf16>
    %29 = vector.shape_cast %28 : vector<1x1x1x256xbf16> to vector<1x256xbf16>
    %c1_38 = arith.constant 1 : index
    %c1_39 = arith.constant 1 : index
    %c0_40 = arith.constant 0 : index
    %c0_41 = arith.constant 0 : index
    %30 = vector.load %arg4[%c1_38, %c1_39, %c0_40, %c0_41] : memref<3x3x256x256xbf16, #tpu.memory_space<vmem>>, vector<1x1x256x256xbf16>
    %31 = vector.shape_cast %30 : vector<1x1x256x256xbf16> to vector<256x256xbf16>
    %cst_42 = arith.constant dense<0.000000e+00> : vector<1x256xf32>
    %32 = tpu.matmul %29, %31, %cst_42 {dimension_numbers = #tpu.dot_dimension_numbers<[1], [0], [0], [1], [0, 0, 1, 1], [], []>} : vector<1x256xbf16>, vector<256x256xbf16>, vector<1x256xf32> -> vector<1x256xf32>
    %33 = arith.addf %27, %32 : vector<1x256xf32>
    %c0_43 = arith.constant 0 : index
    %c2_44 = arith.constant 2 : index
    %c1_45 = arith.constant 1 : index
    %c0_46 = arith.constant 0 : index
    %34 = vector.load %arg3[%c0_43, %c2_44, %c1_45, %c0_46] : memref<1x3x3x256xbf16, #tpu.memory_space<vmem>>, vector<1x1x1x256xbf16>
    %35 = vector.shape_cast %34 : vector<1x1x1x256xbf16> to vector<1x256xbf16>
    %c1_47 = arith.constant 1 : index
    %c2_48 = arith.constant 2 : index
    %c0_49 = arith.constant 0 : index
    %c0_50 = arith.constant 0 : index
    %36 = vector.load %arg4[%c1_47, %c2_48, %c0_49, %c0_50] : memref<3x3x256x256xbf16, #tpu.memory_space<vmem>>, vector<1x1x256x256xbf16>
    %37 = vector.shape_cast %36 : vector<1x1x256x256xbf16> to vector<256x256xbf16>
    %cst_51 = arith.constant dense<0.000000e+00> : vector<1x256xf32>
    %38 = tpu.matmul %35, %37, %cst_51 {dimension_numbers = #tpu.dot_dimension_numbers<[1], [0], [0], [1], [0, 0, 1, 1], [], []>} : vector<1x256xbf16>, vector<256x256xbf16>, vector<1x256xf32> -> vector<1x256xf32>
    %39 = arith.addf %33, %38 : vector<1x256xf32>
    %c0_52 = arith.constant 0 : index
    %c0_53 = arith.constant 0 : index
    %c2_54 = arith.constant 2 : index
    %c0_55 = arith.constant 0 : index
    %40 = vector.load %arg3[%c0_52, %c0_53, %c2_54, %c0_55] : memref<1x3x3x256xbf16, #tpu.memory_space<vmem>>, vector<1x1x1x256xbf16>
    %41 = vector.shape_cast %40 : vector<1x1x1x256xbf16> to vector<1x256xbf16>
    %c2_56 = arith.constant 2 : index
    %c0_57 = arith.constant 0 : index
    %c0_58 = arith.constant 0 : index
    %c0_59 = arith.constant 0 : index
    %42 = vector.load %arg4[%c2_56, %c0_57, %c0_58, %c0_59] : memref<3x3x256x256xbf16, #tpu.memory_space<vmem>>, vector<1x1x256x256xbf16>
    %43 = vector.shape_cast %42 : vector<1x1x256x256xbf16> to vector<256x256xbf16>
    %cst_60 = arith.constant dense<0.000000e+00> : vector<1x256xf32>
    %44 = tpu.matmul %41, %43, %cst_60 {dimension_numbers = #tpu.dot_dimension_numbers<[1], [0], [0], [1], [0, 0, 1, 1], [], []>} : vector<1x256xbf16>, vector<256x256xbf16>, vector<1x256xf32> -> vector<1x256xf32>
    %45 = arith.addf %39, %44 : vector<1x256xf32>
    %c0_61 = arith.constant 0 : index
    %c1_62 = arith.constant 1 : index
    %c2_63 = arith.constant 2 : index
    %c0_64 = arith.constant 0 : index
    %46 = vector.load %arg3[%c0_61, %c1_62, %c2_63, %c0_64] : memref<1x3x3x256xbf16, #tpu.memory_space<vmem>>, vector<1x1x1x256xbf16>
    %47 = vector.shape_cast %46 : vector<1x1x1x256xbf16> to vector<1x256xbf16>
    %c2_65 = arith.constant 2 : index
    %c1_66 = arith.constant 1 : index
    %c0_67 = arith.constant 0 : index
    %c0_68 = arith.constant 0 : index
    %48 = vector.load %arg4[%c2_65, %c1_66, %c0_67, %c0_68] : memref<3x3x256x256xbf16, #tpu.memory_space<vmem>>, vector<1x1x256x256xbf16>
    %49 = vector.shape_cast %48 : vector<1x1x256x256xbf16> to vector<256x256xbf16>
    %cst_69 = arith.constant dense<0.000000e+00> : vector<1x256xf32>
    %50 = tpu.matmul %47, %49, %cst_69 {dimension_numbers = #tpu.dot_dimension_numbers<[1], [0], [0], [1], [0, 0, 1, 1], [], []>} : vector<1x256xbf16>, vector<256x256xbf16>, vector<1x256xf32> -> vector<1x256xf32>
    %51 = arith.addf %45, %50 : vector<1x256xf32>
    %c0_70 = arith.constant 0 : index
    %c2_71 = arith.constant 2 : index
    %c2_72 = arith.constant 2 : index
    %c0_73 = arith.constant 0 : index
    %52 = vector.load %arg3[%c0_70, %c2_71, %c2_72, %c0_73] : memref<1x3x3x256xbf16, #tpu.memory_space<vmem>>, vector<1x1x1x256xbf16>
    %53 = vector.shape_cast %52 : vector<1x1x1x256xbf16> to vector<1x256xbf16>
    %c2_74 = arith.constant 2 : index
    %c2_75 = arith.constant 2 : index
    %c0_76 = arith.constant 0 : index
    %c0_77 = arith.constant 0 : index
    %54 = vector.load %arg4[%c2_74, %c2_75, %c0_76, %c0_77] : memref<3x3x256x256xbf16, #tpu.memory_space<vmem>>, vector<1x1x256x256xbf16>
    %55 = vector.shape_cast %54 : vector<1x1x256x256xbf16> to vector<256x256xbf16>
    %cst_78 = arith.constant dense<0.000000e+00> : vector<1x256xf32>
    %56 = tpu.matmul %53, %55, %cst_78 {dimension_numbers = #tpu.dot_dimension_numbers<[1], [0], [0], [1], [0, 0, 1, 1], [], []>} : vector<1x256xbf16>, vector<256x256xbf16>, vector<1x256xf32> -> vector<1x256xf32>
    %57 = arith.addf %51, %56 : vector<1x256xf32>
    %c0_79 = arith.constant 0 : index
    %c0_80 = arith.constant 0 : index
    %c0_81 = arith.constant 0 : index
    %58 = vector.load %arg6[%c0_79, %c0_80, %c0_81] : memref<1x1x256xf32, #tpu.memory_space<vmem>>, vector<1x1x256xf32>
    %59 = vector.shape_cast %58 : vector<1x1x256xf32> to vector<1x256xf32>
    %60 = arith.addf %59, %57 : vector<1x256xf32>
    %c0_82 = arith.constant 0 : index
    %c0_83 = arith.constant 0 : index
    %c0_84 = arith.constant 0 : index
    %61 = vector.load %arg6[%c0_82, %c0_83, %c0_84] : memref<1x1x256xf32, #tpu.memory_space<vmem>>, vector<1x1x256xf32>
    %62 = vector.shape_cast %61 : vector<1x1x256xf32> to vector<1x256xf32>
    %63 = vector.shape_cast %60 : vector<1x256xf32> to vector<1x1x256xf32>
    tpu.vector_store %arg6[%c0_82, %c0_83, %c0_84], %63 {strides = array<i32>} : memref<1x1x256xf32, #tpu.memory_space<vmem>>, vector<1x1x256xf32>,
    %c3_i32 = arith.constant 3 : i32
    %64 = arith.cmpi eq, %arg2, %c3_i32 : i32
    %65 = arith.extui %64 : i1 to i32
    %c0_i32_85 = arith.constant 0 : i32
    %66 = arith.cmpi ne, %65, %c0_i32_85 : i32
    scf.if %66 {
      %c0_86 = arith.constant 0 : index
      %c0_87 = arith.constant 0 : index
      %c0_88 = arith.constant 0 : index
      %67 = vector.load %arg6[%c0_86, %c0_87, %c0_88] : memref<1x1x256xf32, #tpu.memory_space<vmem>>, vector<1x1x256xf32>
      %68 = vector.shape_cast %67 : vector<1x1x256xf32> to vector<1x256xf32>
      %c0_89 = arith.constant 0 : index
      %c0_90 = arith.constant 0 : index
      %69 = vector.load %arg5[%c0_89, %c0_90] : memref<1x256xf32, #tpu.memory_space<vmem>>, vector<1x256xf32>
      %70 = arith.addf %68, %69 : vector<1x256xf32>
      %c0_91 = arith.constant 0 : index
      %c0_92 = arith.constant 0 : index
      %c0_93 = arith.constant 0 : index
      %71 = vector.load %arg6[%c0_91, %c0_92, %c0_93] : memref<1x1x256xf32, #tpu.memory_space<vmem>>, vector<1x1x256xf32>
      %72 = vector.shape_cast %71 : vector<1x1x256xf32> to vector<1x256xf32>
      %73 = vector.shape_cast %70 : vector<1x256xf32> to vector<1x1x256xf32>
      tpu.vector_store %arg6[%c0_91, %c0_92, %c0_93], %73 {strides = array<i32>} : memref<1x1x256xf32, #tpu.memory_space<vmem>>, vector<1x1x256xf32>,
    } else {
    }
    return
  }
  func.func @transform_0(%arg0: i32, %arg1: i32, %arg2: i32) -> (i32, i32, i32, i32) {
    %c0_i32 = arith.constant 0 : i32
    %c0_i32_0 = arith.constant 0 : i32
    %c0_i32_1 = arith.constant 0 : i32
    return %arg0, %c0_i32, %c0_i32_0, %arg2 : i32, i32, i32, i32
  }
  func.func @transform_1(%arg0: i32, %arg1: i32, %arg2: i32) -> (i32, i32, i32, i32) {
    %c0_i32 = arith.constant 0 : i32
    %c0_i32_0 = arith.constant 0 : i32
    %c0_i32_1 = arith.constant 0 : i32
    return %c0_i32, %c0_i32_0, %arg2, %arg1 : i32, i32, i32, i32
  }
  func.func @transform_2(%arg0: i32, %arg1: i32, %arg2: i32) -> (i32, i32) {
    %c0_i32 = arith.constant 0 : i32
    %c0_i32_0 = arith.constant 0 : i32
    return %c0_i32, %arg1 : i32, i32
  }
  func.func @transform_3(%arg0: i32, %arg1: i32, %arg2: i32) -> (i32, i32, i32) {
    %c0_i32 = arith.constant 0 : i32
    %c0_i32_0 = arith.constant 0 : i32
    return %arg0, %c0_i32, %arg1 : i32, i32, i32
  }
}

module attributes {stable_mosaic.version = 11 : i64} {
  func.func @_matmul_kernel(%arg0: i32, %arg1: i32, %arg2: i32, %arg3: memref<8x256xbf16, #tpu.memory_space<vmem>>, %arg4: memref<256x256xbf16, #tpu.memory_space<vmem>>, %arg5: memref<1x256xf32, #tpu.memory_space<vmem>>, %arg6: memref<8x256xf32, #tpu.memory_space<vmem>>) attributes {dimension_semantics = [#tpu.dimension_semantics<parallel>, #tpu.dimension_semantics<parallel>, #tpu.dimension_semantics<arbitrary>], iteration_bounds = array<i64: 1, 2, 6>, scalar_prefetch = 0 : i64, scratch_operands = 0 : i64, tpu.core_type = #tpu.core_type<tc>, window_params = [{transform_indices = @transform_0, window_bounds = array<i64: 8, 256>}, {transform_indices = @transform_1, window_bounds = array<i64: 256, 256>}, {transform_indices = @transform_2, window_bounds = array<i64: 1, 256>}, {transform_indices = @transform_3, window_bounds = array<i64: 8, 256>}]} {
    %c0_i32 = arith.constant 0 : i32
    %0 = arith.cmpi eq, %arg2, %c0_i32 : i32
    %1 = arith.extui %0 : i1 to i32
    %c0_i32_0 = arith.constant 0 : i32
    %2 = arith.cmpi ne, %1, %c0_i32_0 : i32
    scf.if %2 {
      %cst_9 = arith.constant 0.000000e+00 : f32
      %12 = vector.broadcast %cst_9 : f32 to vector<8x256xf32>
      %c0_10 = arith.constant 0 : index
      %c0_11 = arith.constant 0 : index
      %13 = vector.load %arg6[%c0_10, %c0_11] : memref<8x256xf32, #tpu.memory_space<vmem>>, vector<8x256xf32>
      tpu.vector_store %arg6[%c0_10, %c0_11], %12 {strides = array<i32>} : memref<8x256xf32, #tpu.memory_space<vmem>>, vector<8x256xf32>,
    } else {
    }
    %c0 = arith.constant 0 : index
    %c0_1 = arith.constant 0 : index
    %3 = vector.load %arg6[%c0, %c0_1] : memref<8x256xf32, #tpu.memory_space<vmem>>, vector<8x256xf32>
    %c0_2 = arith.constant 0 : index
    %c0_3 = arith.constant 0 : index
    %4 = vector.load %arg3[%c0_2, %c0_3] : memref<8x256xbf16, #tpu.memory_space<vmem>>, vector<8x256xbf16>
    %c0_4 = arith.constant 0 : index
    %c0_5 = arith.constant 0 : index
    %5 = vector.load %arg4[%c0_4, %c0_5] : memref<256x256xbf16, #tpu.memory_space<vmem>>, vector<256x256xbf16>
    %cst = arith.constant dense<0.000000e+00> : vector<8x256xf32>
    %6 = tpu.matmul %4, %5, %cst {dimension_numbers = #tpu.dot_dimension_numbers<[1], [0], [0], [1], [0, 0, 1, 1], [], []>} : vector<8x256xbf16>, vector<256x256xbf16>, vector<8x256xf32> -> vector<8x256xf32>
    %7 = arith.addf %3, %6 : vector<8x256xf32>
    %c0_6 = arith.constant 0 : index
    %c0_7 = arith.constant 0 : index
    %8 = vector.load %arg6[%c0_6, %c0_7] : memref<8x256xf32, #tpu.memory_space<vmem>>, vector<8x256xf32>
    tpu.vector_store %arg6[%c0_6, %c0_7], %7 {strides = array<i32>} : memref<8x256xf32, #tpu.memory_space<vmem>>, vector<8x256xf32>,
    %c5_i32 = arith.constant 5 : i32
    %9 = arith.cmpi eq, %arg2, %c5_i32 : i32
    %10 = arith.extui %9 : i1 to i32
    %c0_i32_8 = arith.constant 0 : i32
    %11 = arith.cmpi ne, %10, %c0_i32_8 : i32
    scf.if %11 {
      %c0_9 = arith.constant 0 : index
      %c0_10 = arith.constant 0 : index
      %12 = vector.load %arg6[%c0_9, %c0_10] : memref<8x256xf32, #tpu.memory_space<vmem>>, vector<8x256xf32>
      %c0_11 = arith.constant 0 : index
      %c0_12 = arith.constant 0 : index
      %13 = vector.load %arg5[%c0_11, %c0_12] : memref<1x256xf32, #tpu.memory_space<vmem>>, vector<1x256xf32>
      %14 = vector.broadcast %13 : vector<1x256xf32> to vector<8x256xf32>
      %15 = arith.addf %12, %14 : vector<8x256xf32>
      %c0_13 = arith.constant 0 : index
      %c0_14 = arith.constant 0 : index
      %16 = vector.load %arg6[%c0_13, %c0_14] : memref<8x256xf32, #tpu.memory_space<vmem>>, vector<8x256xf32>
      tpu.vector_store %arg6[%c0_13, %c0_14], %15 {strides = array<i32>} : memref<8x256xf32, #tpu.memory_space<vmem>>, vector<8x256xf32>,
    } else {
    }
    return
  }
  func.func @transform_0(%arg0: i32, %arg1: i32, %arg2: i32) -> (i32, i32) {
    %c0_i32 = arith.constant 0 : i32
    return %arg0, %arg2 : i32, i32
  }
  func.func @transform_1(%arg0: i32, %arg1: i32, %arg2: i32) -> (i32, i32) {
    %c0_i32 = arith.constant 0 : i32
    return %arg2, %arg1 : i32, i32
  }
  func.func @transform_2(%arg0: i32, %arg1: i32, %arg2: i32) -> (i32, i32) {
    %c0_i32 = arith.constant 0 : i32
    %c0_i32_0 = arith.constant 0 : i32
    return %c0_i32, %arg1 : i32, i32
  }
  func.func @transform_3(%arg0: i32, %arg1: i32, %arg2: i32) -> (i32, i32) {
    %c0_i32 = arith.constant 0 : i32
    return %arg0, %arg1 : i32, i32
  }
}

module attributes {stable_mosaic.version = 11 : i64} {
  func.func @_conv3x3_kernel(%arg0: i32, %arg1: i32, %arg2: i32, %arg3: memref<1x3x8x256xbf16, #tpu.memory_space<vmem>>, %arg4: memref<3x3x256x256xbf16, #tpu.memory_space<vmem>>, %arg5: memref<1x256xf32, #tpu.memory_space<vmem>>, %arg6: memref<1x4x256xf32, #tpu.memory_space<vmem>>) attributes {dimension_semantics = [#tpu.dimension_semantics<parallel>, #tpu.dimension_semantics<parallel>, #tpu.dimension_semantics<arbitrary>], iteration_bounds = array<i64: 2, 2, 6>, scalar_prefetch = 0 : i64, scratch_operands = 0 : i64, tpu.core_type = #tpu.core_type<tc>, window_params = [{transform_indices = @transform_0, window_bounds = array<i64: 1, 3, 8, 256>}, {transform_indices = @transform_1, window_bounds = array<i64: 3, 3, 256, 256>}, {transform_indices = @transform_2, window_bounds = array<i64: 1, 256>}, {transform_indices = @transform_3, window_bounds = array<i64: 1, 4, 256>}]} {
    %c0_i32 = arith.constant 0 : i32
    %0 = arith.cmpi eq, %arg2, %c0_i32 : i32
    %1 = arith.extui %0 : i1 to i32
    %c0_i32_0 = arith.constant 0 : i32
    %2 = arith.cmpi ne, %1, %c0_i32_0 : i32
    scf.if %2 {
      %cst_85 = arith.constant 0.000000e+00 : f32
      %67 = vector.broadcast %cst_85 : f32 to vector<1x4x256xf32>
      %c0_86 = arith.constant 0 : index
      %c0_87 = arith.constant 0 : index
      %c0_88 = arith.constant 0 : index
      %68 = vector.load %arg6[%c0_86, %c0_87, %c0_88] : memref<1x4x256xf32, #tpu.memory_space<vmem>>, vector<1x4x256xf32>
      tpu.vector_store %arg6[%c0_86, %c0_87, %c0_88], %67 {strides = array<i32>} : memref<1x4x256xf32, #tpu.memory_space<vmem>>, vector<1x4x256xf32>,
    } else {
    }
    %cst = arith.constant 0.000000e+00 : f32
    %3 = vector.broadcast %cst : f32 to vector<4x256xf32>
    %c0 = arith.constant 0 : index
    %c0_1 = arith.constant 0 : index
    %c0_2 = arith.constant 0 : index
    %c0_3 = arith.constant 0 : index
    %4 = vector.load %arg3[%c0, %c0_1, %c0_2, %c0_3] : memref<1x3x8x256xbf16, #tpu.memory_space<vmem>>, vector<1x1x4x256xbf16>
    %5 = vector.shape_cast %4 : vector<1x1x4x256xbf16> to vector<4x256xbf16>
    %c0_4 = arith.constant 0 : index
    %c0_5 = arith.constant 0 : index
    %c0_6 = arith.constant 0 : index
    %c0_7 = arith.constant 0 : index
    %6 = vector.load %arg4[%c0_4, %c0_5, %c0_6, %c0_7] : memref<3x3x256x256xbf16, #tpu.memory_space<vmem>>, vector<1x1x256x256xbf16>
    %7 = vector.shape_cast %6 : vector<1x1x256x256xbf16> to vector<256x256xbf16>
    %cst_8 = arith.constant dense<0.000000e+00> : vector<4x256xf32>
    %8 = tpu.matmul %5, %7, %cst_8 {dimension_numbers = #tpu.dot_dimension_numbers<[1], [0], [0], [1], [0, 0, 1, 1], [], []>} : vector<4x256xbf16>, vector<256x256xbf16>, vector<4x256xf32> -> vector<4x256xf32>
    %9 = arith.addf %3, %8 : vector<4x256xf32>
    %c0_9 = arith.constant 0 : index
    %c1 = arith.constant 1 : index
    %c0_10 = arith.constant 0 : index
    %c0_11 = arith.constant 0 : index
    %10 = vector.load %arg3[%c0_9, %c1, %c0_10, %c0_11] : memref<1x3x8x256xbf16, #tpu.memory_space<vmem>>, vector<1x1x4x256xbf16>
    %11 = vector.shape_cast %10 : vector<1x1x4x256xbf16> to vector<4x256xbf16>
    %c0_12 = arith.constant 0 : index
    %c1_13 = arith.constant 1 : index
    %c0_14 = arith.constant 0 : index
    %c0_15 = arith.constant 0 : index
    %12 = vector.load %arg4[%c0_12, %c1_13, %c0_14, %c0_15] : memref<3x3x256x256xbf16, #tpu.memory_space<vmem>>, vector<1x1x256x256xbf16>
    %13 = vector.shape_cast %12 : vector<1x1x256x256xbf16> to vector<256x256xbf16>
    %cst_16 = arith.constant dense<0.000000e+00> : vector<4x256xf32>
    %14 = tpu.matmul %11, %13, %cst_16 {dimension_numbers = #tpu.dot_dimension_numbers<[1], [0], [0], [1], [0, 0, 1, 1], [], []>} : vector<4x256xbf16>, vector<256x256xbf16>, vector<4x256xf32> -> vector<4x256xf32>
    %15 = arith.addf %9, %14 : vector<4x256xf32>
    %c0_17 = arith.constant 0 : index
    %c2 = arith.constant 2 : index
    %c0_18 = arith.constant 0 : index
    %c0_19 = arith.constant 0 : index
    %16 = vector.load %arg3[%c0_17, %c2, %c0_18, %c0_19] : memref<1x3x8x256xbf16, #tpu.memory_space<vmem>>, vector<1x1x4x256xbf16>
    %17 = vector.shape_cast %16 : vector<1x1x4x256xbf16> to vector<4x256xbf16>
    %c0_20 = arith.constant 0 : index
    %c2_21 = arith.constant 2 : index
    %c0_22 = arith.constant 0 : index
    %c0_23 = arith.constant 0 : index
    %18 = vector.load %arg4[%c0_20, %c2_21, %c0_22, %c0_23] : memref<3x3x256x256xbf16, #tpu.memory_space<vmem>>, vector<1x1x256x256xbf16>
    %19 = vector.shape_cast %18 : vector<1x1x256x256xbf16> to vector<256x256xbf16>
    %cst_24 = arith.constant dense<0.000000e+00> : vector<4x256xf32>
    %20 = tpu.matmul %17, %19, %cst_24 {dimension_numbers = #tpu.dot_dimension_numbers<[1], [0], [0], [1], [0, 0, 1, 1], [], []>} : vector<4x256xbf16>, vector<256x256xbf16>, vector<4x256xf32> -> vector<4x256xf32>
    %21 = arith.addf %15, %20 : vector<4x256xf32>
    %c0_25 = arith.constant 0 : index
    %c0_26 = arith.constant 0 : index
    %c2_27 = arith.constant 2 : index
    %c0_28 = arith.constant 0 : index
    %22 = vector.load %arg3[%c0_25, %c0_26, %c2_27, %c0_28] : memref<1x3x8x256xbf16, #tpu.memory_space<vmem>>, vector<1x1x4x256xbf16>
    %23 = vector.shape_cast %22 : vector<1x1x4x256xbf16> to vector<4x256xbf16>
    %c1_29 = arith.constant 1 : index
    %c0_30 = arith.constant 0 : index
    %c0_31 = arith.constant 0 : index
    %c0_32 = arith.constant 0 : index
    %24 = vector.load %arg4[%c1_29, %c0_30, %c0_31, %c0_32] : memref<3x3x256x256xbf16, #tpu.memory_space<vmem>>, vector<1x1x256x256xbf16>
    %25 = vector.shape_cast %24 : vector<1x1x256x256xbf16> to vector<256x256xbf16>
    %cst_33 = arith.constant dense<0.000000e+00> : vector<4x256xf32>
    %26 = tpu.matmul %23, %25, %cst_33 {dimension_numbers = #tpu.dot_dimension_numbers<[1], [0], [0], [1], [0, 0, 1, 1], [], []>} : vector<4x256xbf16>, vector<256x256xbf16>, vector<4x256xf32> -> vector<4x256xf32>
    %27 = arith.addf %21, %26 : vector<4x256xf32>
    %c0_34 = arith.constant 0 : index
    %c1_35 = arith.constant 1 : index
    %c2_36 = arith.constant 2 : index
    %c0_37 = arith.constant 0 : index
    %28 = vector.load %arg3[%c0_34, %c1_35, %c2_36, %c0_37] : memref<1x3x8x256xbf16, #tpu.memory_space<vmem>>, vector<1x1x4x256xbf16>
    %29 = vector.shape_cast %28 : vector<1x1x4x256xbf16> to vector<4x256xbf16>
    %c1_38 = arith.constant 1 : index
    %c1_39 = arith.constant 1 : index
    %c0_40 = arith.constant 0 : index
    %c0_41 = arith.constant 0 : index
    %30 = vector.load %arg4[%c1_38, %c1_39, %c0_40, %c0_41] : memref<3x3x256x256xbf16, #tpu.memory_space<vmem>>, vector<1x1x256x256xbf16>
    %31 = vector.shape_cast %30 : vector<1x1x256x256xbf16> to vector<256x256xbf16>
    %cst_42 = arith.constant dense<0.000000e+00> : vector<4x256xf32>
    %32 = tpu.matmul %29, %31, %cst_42 {dimension_numbers = #tpu.dot_dimension_numbers<[1], [0], [0], [1], [0, 0, 1, 1], [], []>} : vector<4x256xbf16>, vector<256x256xbf16>, vector<4x256xf32> -> vector<4x256xf32>
    %33 = arith.addf %27, %32 : vector<4x256xf32>
    %c0_43 = arith.constant 0 : index
    %c2_44 = arith.constant 2 : index
    %c2_45 = arith.constant 2 : index
    %c0_46 = arith.constant 0 : index
    %34 = vector.load %arg3[%c0_43, %c2_44, %c2_45, %c0_46] : memref<1x3x8x256xbf16, #tpu.memory_space<vmem>>, vector<1x1x4x256xbf16>
    %35 = vector.shape_cast %34 : vector<1x1x4x256xbf16> to vector<4x256xbf16>
    %c1_47 = arith.constant 1 : index
    %c2_48 = arith.constant 2 : index
    %c0_49 = arith.constant 0 : index
    %c0_50 = arith.constant 0 : index
    %36 = vector.load %arg4[%c1_47, %c2_48, %c0_49, %c0_50] : memref<3x3x256x256xbf16, #tpu.memory_space<vmem>>, vector<1x1x256x256xbf16>
    %37 = vector.shape_cast %36 : vector<1x1x256x256xbf16> to vector<256x256xbf16>
    %cst_51 = arith.constant dense<0.000000e+00> : vector<4x256xf32>
    %38 = tpu.matmul %35, %37, %cst_51 {dimension_numbers = #tpu.dot_dimension_numbers<[1], [0], [0], [1], [0, 0, 1, 1], [], []>} : vector<4x256xbf16>, vector<256x256xbf16>, vector<4x256xf32> -> vector<4x256xf32>
    %39 = arith.addf %33, %38 : vector<4x256xf32>
    %c0_52 = arith.constant 0 : index
    %c0_53 = arith.constant 0 : index
    %c4 = arith.constant 4 : index
    %c0_54 = arith.constant 0 : index
    %40 = vector.load %arg3[%c0_52, %c0_53, %c4, %c0_54] : memref<1x3x8x256xbf16, #tpu.memory_space<vmem>>, vector<1x1x4x256xbf16>
    %41 = vector.shape_cast %40 : vector<1x1x4x256xbf16> to vector<4x256xbf16>
    %c2_55 = arith.constant 2 : index
    %c0_56 = arith.constant 0 : index
    %c0_57 = arith.constant 0 : index
    %c0_58 = arith.constant 0 : index
    %42 = vector.load %arg4[%c2_55, %c0_56, %c0_57, %c0_58] : memref<3x3x256x256xbf16, #tpu.memory_space<vmem>>, vector<1x1x256x256xbf16>
    %43 = vector.shape_cast %42 : vector<1x1x256x256xbf16> to vector<256x256xbf16>
    %cst_59 = arith.constant dense<0.000000e+00> : vector<4x256xf32>
    %44 = tpu.matmul %41, %43, %cst_59 {dimension_numbers = #tpu.dot_dimension_numbers<[1], [0], [0], [1], [0, 0, 1, 1], [], []>} : vector<4x256xbf16>, vector<256x256xbf16>, vector<4x256xf32> -> vector<4x256xf32>
    %45 = arith.addf %39, %44 : vector<4x256xf32>
    %c0_60 = arith.constant 0 : index
    %c1_61 = arith.constant 1 : index
    %c4_62 = arith.constant 4 : index
    %c0_63 = arith.constant 0 : index
    %46 = vector.load %arg3[%c0_60, %c1_61, %c4_62, %c0_63] : memref<1x3x8x256xbf16, #tpu.memory_space<vmem>>, vector<1x1x4x256xbf16>
    %47 = vector.shape_cast %46 : vector<1x1x4x256xbf16> to vector<4x256xbf16>
    %c2_64 = arith.constant 2 : index
    %c1_65 = arith.constant 1 : index
    %c0_66 = arith.constant 0 : index
    %c0_67 = arith.constant 0 : index
    %48 = vector.load %arg4[%c2_64, %c1_65, %c0_66, %c0_67] : memref<3x3x256x256xbf16, #tpu.memory_space<vmem>>, vector<1x1x256x256xbf16>
    %49 = vector.shape_cast %48 : vector<1x1x256x256xbf16> to vector<256x256xbf16>
    %cst_68 = arith.constant dense<0.000000e+00> : vector<4x256xf32>
    %50 = tpu.matmul %47, %49, %cst_68 {dimension_numbers = #tpu.dot_dimension_numbers<[1], [0], [0], [1], [0, 0, 1, 1], [], []>} : vector<4x256xbf16>, vector<256x256xbf16>, vector<4x256xf32> -> vector<4x256xf32>
    %51 = arith.addf %45, %50 : vector<4x256xf32>
    %c0_69 = arith.constant 0 : index
    %c2_70 = arith.constant 2 : index
    %c4_71 = arith.constant 4 : index
    %c0_72 = arith.constant 0 : index
    %52 = vector.load %arg3[%c0_69, %c2_70, %c4_71, %c0_72] : memref<1x3x8x256xbf16, #tpu.memory_space<vmem>>, vector<1x1x4x256xbf16>
    %53 = vector.shape_cast %52 : vector<1x1x4x256xbf16> to vector<4x256xbf16>
    %c2_73 = arith.constant 2 : index
    %c2_74 = arith.constant 2 : index
    %c0_75 = arith.constant 0 : index
    %c0_76 = arith.constant 0 : index
    %54 = vector.load %arg4[%c2_73, %c2_74, %c0_75, %c0_76] : memref<3x3x256x256xbf16, #tpu.memory_space<vmem>>, vector<1x1x256x256xbf16>
    %55 = vector.shape_cast %54 : vector<1x1x256x256xbf16> to vector<256x256xbf16>
    %cst_77 = arith.constant dense<0.000000e+00> : vector<4x256xf32>
    %56 = tpu.matmul %53, %55, %cst_77 {dimension_numbers = #tpu.dot_dimension_numbers<[1], [0], [0], [1], [0, 0, 1, 1], [], []>} : vector<4x256xbf16>, vector<256x256xbf16>, vector<4x256xf32> -> vector<4x256xf32>
    %57 = arith.addf %51, %56 : vector<4x256xf32>
    %c0_78 = arith.constant 0 : index
    %c0_79 = arith.constant 0 : index
    %c0_80 = arith.constant 0 : index
    %58 = vector.load %arg6[%c0_78, %c0_79, %c0_80] : memref<1x4x256xf32, #tpu.memory_space<vmem>>, vector<1x4x256xf32>
    %59 = vector.shape_cast %58 : vector<1x4x256xf32> to vector<4x256xf32>
    %60 = arith.addf %59, %57 : vector<4x256xf32>
    %c0_81 = arith.constant 0 : index
    %c0_82 = arith.constant 0 : index
    %c0_83 = arith.constant 0 : index
    %61 = vector.load %arg6[%c0_81, %c0_82, %c0_83] : memref<1x4x256xf32, #tpu.memory_space<vmem>>, vector<1x4x256xf32>
    %62 = vector.shape_cast %61 : vector<1x4x256xf32> to vector<4x256xf32>
    %63 = vector.shape_cast %60 : vector<4x256xf32> to vector<1x4x256xf32>
    tpu.vector_store %arg6[%c0_81, %c0_82, %c0_83], %63 {strides = array<i32>} : memref<1x4x256xf32, #tpu.memory_space<vmem>>, vector<1x4x256xf32>,
    %c5_i32 = arith.constant 5 : i32
    %64 = arith.cmpi eq, %arg2, %c5_i32 : i32
    %65 = arith.extui %64 : i1 to i32
    %c0_i32_84 = arith.constant 0 : i32
    %66 = arith.cmpi ne, %65, %c0_i32_84 : i32
    scf.if %66 {
      %c0_85 = arith.constant 0 : index
      %c0_86 = arith.constant 0 : index
      %c0_87 = arith.constant 0 : index
      %67 = vector.load %arg6[%c0_85, %c0_86, %c0_87] : memref<1x4x256xf32, #tpu.memory_space<vmem>>, vector<1x4x256xf32>
      %68 = vector.shape_cast %67 : vector<1x4x256xf32> to vector<4x256xf32>
      %c0_88 = arith.constant 0 : index
      %c0_89 = arith.constant 0 : index
      %69 = vector.load %arg5[%c0_88, %c0_89] : memref<1x256xf32, #tpu.memory_space<vmem>>, vector<1x256xf32>
      %70 = vector.broadcast %69 : vector<1x256xf32> to vector<4x256xf32>
      %71 = arith.addf %68, %70 : vector<4x256xf32>
      %c0_90 = arith.constant 0 : index
      %c0_91 = arith.constant 0 : index
      %c0_92 = arith.constant 0 : index
      %72 = vector.load %arg6[%c0_90, %c0_91, %c0_92] : memref<1x4x256xf32, #tpu.memory_space<vmem>>, vector<1x4x256xf32>
      %73 = vector.shape_cast %72 : vector<1x4x256xf32> to vector<4x256xf32>
      %74 = vector.shape_cast %71 : vector<4x256xf32> to vector<1x4x256xf32>
      tpu.vector_store %arg6[%c0_90, %c0_91, %c0_92], %74 {strides = array<i32>} : memref<1x4x256xf32, #tpu.memory_space<vmem>>, vector<1x4x256xf32>,
    } else {
    }
    return
  }
  func.func @transform_0(%arg0: i32, %arg1: i32, %arg2: i32) -> (i32, i32, i32, i32) {
    %c0_i32 = arith.constant 0 : i32
    %c0_i32_0 = arith.constant 0 : i32
    %c0_i32_1 = arith.constant 0 : i32
    return %arg0, %c0_i32, %c0_i32_0, %arg2 : i32, i32, i32, i32
  }
  func.func @transform_1(%arg0: i32, %arg1: i32, %arg2: i32) -> (i32, i32, i32, i32) {
    %c0_i32 = arith.constant 0 : i32
    %c0_i32_0 = arith.constant 0 : i32
    %c0_i32_1 = arith.constant 0 : i32
    return %c0_i32, %c0_i32_0, %arg2, %arg1 : i32, i32, i32, i32
  }
  func.func @transform_2(%arg0: i32, %arg1: i32, %arg2: i32) -> (i32, i32) {
    %c0_i32 = arith.constant 0 : i32
    %c0_i32_0 = arith.constant 0 : i32
    return %c0_i32, %arg1 : i32, i32
  }
  func.func @transform_3(%arg0: i32, %arg1: i32, %arg2: i32) -> (i32, i32, i32) {
    %c0_i32 = arith.constant 0 : i32
    %c0_i32_0 = arith.constant 0 : i32
    return %arg0, %c0_i32, %arg1 : i32, i32, i32
  }
}

module attributes {stable_mosaic.version = 11 : i64} {
  func.func @_matmul_kernel(%arg0: i32, %arg1: i32, %arg2: i32, %arg3: memref<32x256xbf16, #tpu.memory_space<vmem>>, %arg4: memref<256x256xbf16, #tpu.memory_space<vmem>>, %arg5: memref<1x256xf32, #tpu.memory_space<vmem>>, %arg6: memref<32x256xf32, #tpu.memory_space<vmem>>) attributes {dimension_semantics = [#tpu.dimension_semantics<parallel>, #tpu.dimension_semantics<parallel>, #tpu.dimension_semantics<arbitrary>], iteration_bounds = array<i64: 1, 1, 3>, scalar_prefetch = 0 : i64, scratch_operands = 0 : i64, tpu.core_type = #tpu.core_type<tc>, window_params = [{transform_indices = @transform_0, window_bounds = array<i64: 32, 256>}, {transform_indices = @transform_1, window_bounds = array<i64: 256, 256>}, {transform_indices = @transform_2, window_bounds = array<i64: 1, 256>}, {transform_indices = @transform_3, window_bounds = array<i64: 32, 256>}]} {
    %c0_i32 = arith.constant 0 : i32
    %0 = arith.cmpi eq, %arg2, %c0_i32 : i32
    %1 = arith.extui %0 : i1 to i32
    %c0_i32_0 = arith.constant 0 : i32
    %2 = arith.cmpi ne, %1, %c0_i32_0 : i32
    scf.if %2 {
      %cst_9 = arith.constant 0.000000e+00 : f32
      %12 = vector.broadcast %cst_9 : f32 to vector<32x256xf32>
      %c0_10 = arith.constant 0 : index
      %c0_11 = arith.constant 0 : index
      %13 = vector.load %arg6[%c0_10, %c0_11] : memref<32x256xf32, #tpu.memory_space<vmem>>, vector<32x256xf32>
      tpu.vector_store %arg6[%c0_10, %c0_11], %12 {strides = array<i32>} : memref<32x256xf32, #tpu.memory_space<vmem>>, vector<32x256xf32>,
    } else {
    }
    %c0 = arith.constant 0 : index
    %c0_1 = arith.constant 0 : index
    %3 = vector.load %arg6[%c0, %c0_1] : memref<32x256xf32, #tpu.memory_space<vmem>>, vector<32x256xf32>
    %c0_2 = arith.constant 0 : index
    %c0_3 = arith.constant 0 : index
    %4 = vector.load %arg3[%c0_2, %c0_3] : memref<32x256xbf16, #tpu.memory_space<vmem>>, vector<32x256xbf16>
    %c0_4 = arith.constant 0 : index
    %c0_5 = arith.constant 0 : index
    %5 = vector.load %arg4[%c0_4, %c0_5] : memref<256x256xbf16, #tpu.memory_space<vmem>>, vector<256x256xbf16>
    %cst = arith.constant dense<0.000000e+00> : vector<32x256xf32>
    %6 = tpu.matmul %4, %5, %cst {dimension_numbers = #tpu.dot_dimension_numbers<[1], [0], [0], [1], [0, 0, 1, 1], [], []>} : vector<32x256xbf16>, vector<256x256xbf16>, vector<32x256xf32> -> vector<32x256xf32>
    %7 = arith.addf %3, %6 : vector<32x256xf32>
    %c0_6 = arith.constant 0 : index
    %c0_7 = arith.constant 0 : index
    %8 = vector.load %arg6[%c0_6, %c0_7] : memref<32x256xf32, #tpu.memory_space<vmem>>, vector<32x256xf32>
    tpu.vector_store %arg6[%c0_6, %c0_7], %7 {strides = array<i32>} : memref<32x256xf32, #tpu.memory_space<vmem>>, vector<32x256xf32>,
    %c2_i32 = arith.constant 2 : i32
    %9 = arith.cmpi eq, %arg2, %c2_i32 : i32
    %10 = arith.extui %9 : i1 to i32
    %c0_i32_8 = arith.constant 0 : i32
    %11 = arith.cmpi ne, %10, %c0_i32_8 : i32
    scf.if %11 {
      %c0_9 = arith.constant 0 : index
      %c0_10 = arith.constant 0 : index
      %12 = vector.load %arg6[%c0_9, %c0_10] : memref<32x256xf32, #tpu.memory_space<vmem>>, vector<32x256xf32>
      %c0_11 = arith.constant 0 : index
      %c0_12 = arith.constant 0 : index
      %13 = vector.load %arg5[%c0_11, %c0_12] : memref<1x256xf32, #tpu.memory_space<vmem>>, vector<1x256xf32>
      %14 = vector.broadcast %13 : vector<1x256xf32> to vector<32x256xf32>
      %15 = arith.addf %12, %14 : vector<32x256xf32>
      %c0_13 = arith.constant 0 : index
      %c0_14 = arith.constant 0 : index
      %16 = vector.load %arg6[%c0_13, %c0_14] : memref<32x256xf32, #tpu.memory_space<vmem>>, vector<32x256xf32>
      tpu.vector_store %arg6[%c0_13, %c0_14], %15 {strides = array<i32>} : memref<32x256xf32, #tpu.memory_space<vmem>>, vector<32x256xf32>,
    } else {
    }
    return
  }
  func.func @transform_0(%arg0: i32, %arg1: i32, %arg2: i32) -> (i32, i32) {
    %c0_i32 = arith.constant 0 : i32
    return %arg0, %arg2 : i32, i32
  }
  func.func @transform_1(%arg0: i32, %arg1: i32, %arg2: i32) -> (i32, i32) {
    %c0_i32 = arith.constant 0 : i32
    return %arg2, %arg1 : i32, i32
  }
  func.func @transform_2(%arg0: i32, %arg1: i32, %arg2: i32) -> (i32, i32) {
    %c0_i32 = arith.constant 0 : i32
    %c0_i32_0 = arith.constant 0 : i32
    return %c0_i32, %arg1 : i32, i32
  }
  func.func @transform_3(%arg0: i32, %arg1: i32, %arg2: i32) -> (i32, i32) {
    %c0_i32 = arith.constant 0 : i32
    return %arg0, %arg1 : i32, i32
  }
}

module attributes {stable_mosaic.version = 11 : i64} {
  func.func @_conv3x3_kernel(%arg0: i32, %arg1: i32, %arg2: i32, %arg3: memref<1x3x24x256xbf16, #tpu.memory_space<vmem>>, %arg4: memref<3x3x256x256xbf16, #tpu.memory_space<vmem>>, %arg5: memref<1x256xf32, #tpu.memory_space<vmem>>, %arg6: memref<1x16x256xf32, #tpu.memory_space<vmem>>) attributes {dimension_semantics = [#tpu.dimension_semantics<parallel>, #tpu.dimension_semantics<parallel>, #tpu.dimension_semantics<arbitrary>], iteration_bounds = array<i64: 2, 1, 3>, scalar_prefetch = 0 : i64, scratch_operands = 0 : i64, tpu.core_type = #tpu.core_type<tc>, window_params = [{transform_indices = @transform_0, window_bounds = array<i64: 1, 3, 24, 256>}, {transform_indices = @transform_1, window_bounds = array<i64: 3, 3, 256, 256>}, {transform_indices = @transform_2, window_bounds = array<i64: 1, 256>}, {transform_indices = @transform_3, window_bounds = array<i64: 1, 16, 256>}]} {
    %c0_i32 = arith.constant 0 : i32
    %0 = arith.cmpi eq, %arg2, %c0_i32 : i32
    %1 = arith.extui %0 : i1 to i32
    %c0_i32_0 = arith.constant 0 : i32
    %2 = arith.cmpi ne, %1, %c0_i32_0 : i32
    scf.if %2 {
      %cst_84 = arith.constant 0.000000e+00 : f32
      %67 = vector.broadcast %cst_84 : f32 to vector<1x16x256xf32>
      %c0_85 = arith.constant 0 : index
      %c0_86 = arith.constant 0 : index
      %c0_87 = arith.constant 0 : index
      %68 = vector.load %arg6[%c0_85, %c0_86, %c0_87] : memref<1x16x256xf32, #tpu.memory_space<vmem>>, vector<1x16x256xf32>
      tpu.vector_store %arg6[%c0_85, %c0_86, %c0_87], %67 {strides = array<i32>} : memref<1x16x256xf32, #tpu.memory_space<vmem>>, vector<1x16x256xf32>,
    } else {
    }
    %cst = arith.constant 0.000000e+00 : f32
    %3 = vector.broadcast %cst : f32 to vector<16x256xf32>
    %c0 = arith.constant 0 : index
    %c0_1 = arith.constant 0 : index
    %c0_2 = arith.constant 0 : index
    %c0_3 = arith.constant 0 : index
    %4 = vector.load %arg3[%c0, %c0_1, %c0_2, %c0_3] : memref<1x3x24x256xbf16, #tpu.memory_space<vmem>>, vector<1x1x16x256xbf16>
    %5 = vector.shape_cast %4 : vector<1x1x16x256xbf16> to vector<16x256xbf16>
    %c0_4 = arith.constant 0 : index
    %c0_5 = arith.constant 0 : index
    %c0_6 = arith.constant 0 : index
    %c0_7 = arith.constant 0 : index
    %6 = vector.load %arg4[%c0_4, %c0_5, %c0_6, %c0_7] : memref<3x3x256x256xbf16, #tpu.memory_space<vmem>>, vector<1x1x256x256xbf16>
    %7 = vector.shape_cast %6 : vector<1x1x256x256xbf16> to vector<256x256xbf16>
    %cst_8 = arith.constant dense<0.000000e+00> : vector<16x256xf32>
    %8 = tpu.matmul %5, %7, %cst_8 {dimension_numbers = #tpu.dot_dimension_numbers<[1], [0], [0], [1], [0, 0, 1, 1], [], []>} : vector<16x256xbf16>, vector<256x256xbf16>, vector<16x256xf32> -> vector<16x256xf32>
    %9 = arith.addf %3, %8 : vector<16x256xf32>
    %c0_9 = arith.constant 0 : index
    %c1 = arith.constant 1 : index
    %c0_10 = arith.constant 0 : index
    %c0_11 = arith.constant 0 : index
    %10 = vector.load %arg3[%c0_9, %c1, %c0_10, %c0_11] : memref<1x3x24x256xbf16, #tpu.memory_space<vmem>>, vector<1x1x16x256xbf16>
    %11 = vector.shape_cast %10 : vector<1x1x16x256xbf16> to vector<16x256xbf16>
    %c0_12 = arith.constant 0 : index
    %c1_13 = arith.constant 1 : index
    %c0_14 = arith.constant 0 : index
    %c0_15 = arith.constant 0 : index
    %12 = vector.load %arg4[%c0_12, %c1_13, %c0_14, %c0_15] : memref<3x3x256x256xbf16, #tpu.memory_space<vmem>>, vector<1x1x256x256xbf16>
    %13 = vector.shape_cast %12 : vector<1x1x256x256xbf16> to vector<256x256xbf16>
    %cst_16 = arith.constant dense<0.000000e+00> : vector<16x256xf32>
    %14 = tpu.matmul %11, %13, %cst_16 {dimension_numbers = #tpu.dot_dimension_numbers<[1], [0], [0], [1], [0, 0, 1, 1], [], []>} : vector<16x256xbf16>, vector<256x256xbf16>, vector<16x256xf32> -> vector<16x256xf32>
    %15 = arith.addf %9, %14 : vector<16x256xf32>
    %c0_17 = arith.constant 0 : index
    %c2 = arith.constant 2 : index
    %c0_18 = arith.constant 0 : index
    %c0_19 = arith.constant 0 : index
    %16 = vector.load %arg3[%c0_17, %c2, %c0_18, %c0_19] : memref<1x3x24x256xbf16, #tpu.memory_space<vmem>>, vector<1x1x16x256xbf16>
    %17 = vector.shape_cast %16 : vector<1x1x16x256xbf16> to vector<16x256xbf16>
    %c0_20 = arith.constant 0 : index
    %c2_21 = arith.constant 2 : index
    %c0_22 = arith.constant 0 : index
    %c0_23 = arith.constant 0 : index
    %18 = vector.load %arg4[%c0_20, %c2_21, %c0_22, %c0_23] : memref<3x3x256x256xbf16, #tpu.memory_space<vmem>>, vector<1x1x256x256xbf16>
    %19 = vector.shape_cast %18 : vector<1x1x256x256xbf16> to vector<256x256xbf16>
    %cst_24 = arith.constant dense<0.000000e+00> : vector<16x256xf32>
    %20 = tpu.matmul %17, %19, %cst_24 {dimension_numbers = #tpu.dot_dimension_numbers<[1], [0], [0], [1], [0, 0, 1, 1], [], []>} : vector<16x256xbf16>, vector<256x256xbf16>, vector<16x256xf32> -> vector<16x256xf32>
    %21 = arith.addf %15, %20 : vector<16x256xf32>
    %c0_25 = arith.constant 0 : index
    %c0_26 = arith.constant 0 : index
    %c4 = arith.constant 4 : index
    %c0_27 = arith.constant 0 : index
    %22 = vector.load %arg3[%c0_25, %c0_26, %c4, %c0_27] : memref<1x3x24x256xbf16, #tpu.memory_space<vmem>>, vector<1x1x16x256xbf16>
    %23 = vector.shape_cast %22 : vector<1x1x16x256xbf16> to vector<16x256xbf16>
    %c1_28 = arith.constant 1 : index
    %c0_29 = arith.constant 0 : index
    %c0_30 = arith.constant 0 : index
    %c0_31 = arith.constant 0 : index
    %24 = vector.load %arg4[%c1_28, %c0_29, %c0_30, %c0_31] : memref<3x3x256x256xbf16, #tpu.memory_space<vmem>>, vector<1x1x256x256xbf16>
    %25 = vector.shape_cast %24 : vector<1x1x256x256xbf16> to vector<256x256xbf16>
    %cst_32 = arith.constant dense<0.000000e+00> : vector<16x256xf32>
    %26 = tpu.matmul %23, %25, %cst_32 {dimension_numbers = #tpu.dot_dimension_numbers<[1], [0], [0], [1], [0, 0, 1, 1], [], []>} : vector<16x256xbf16>, vector<256x256xbf16>, vector<16x256xf32> -> vector<16x256xf32>
    %27 = arith.addf %21, %26 : vector<16x256xf32>
    %c0_33 = arith.constant 0 : index
    %c1_34 = arith.constant 1 : index
    %c4_35 = arith.constant 4 : index
    %c0_36 = arith.constant 0 : index
    %28 = vector.load %arg3[%c0_33, %c1_34, %c4_35, %c0_36] : memref<1x3x24x256xbf16, #tpu.memory_space<vmem>>, vector<1x1x16x256xbf16>
    %29 = vector.shape_cast %28 : vector<1x1x16x256xbf16> to vector<16x256xbf16>
    %c1_37 = arith.constant 1 : index
    %c1_38 = arith.constant 1 : index
    %c0_39 = arith.constant 0 : index
    %c0_40 = arith.constant 0 : index
    %30 = vector.load %arg4[%c1_37, %c1_38, %c0_39, %c0_40] : memref<3x3x256x256xbf16, #tpu.memory_space<vmem>>, vector<1x1x256x256xbf16>
    %31 = vector.shape_cast %30 : vector<1x1x256x256xbf16> to vector<256x256xbf16>
    %cst_41 = arith.constant dense<0.000000e+00> : vector<16x256xf32>
    %32 = tpu.matmul %29, %31, %cst_41 {dimension_numbers = #tpu.dot_dimension_numbers<[1], [0], [0], [1], [0, 0, 1, 1], [], []>} : vector<16x256xbf16>, vector<256x256xbf16>, vector<16x256xf32> -> vector<16x256xf32>
    %33 = arith.addf %27, %32 : vector<16x256xf32>
    %c0_42 = arith.constant 0 : index
    %c2_43 = arith.constant 2 : index
    %c4_44 = arith.constant 4 : index
    %c0_45 = arith.constant 0 : index
    %34 = vector.load %arg3[%c0_42, %c2_43, %c4_44, %c0_45] : memref<1x3x24x256xbf16, #tpu.memory_space<vmem>>, vector<1x1x16x256xbf16>
    %35 = vector.shape_cast %34 : vector<1x1x16x256xbf16> to vector<16x256xbf16>
    %c1_46 = arith.constant 1 : index
    %c2_47 = arith.constant 2 : index
    %c0_48 = arith.constant 0 : index
    %c0_49 = arith.constant 0 : index
    %36 = vector.load %arg4[%c1_46, %c2_47, %c0_48, %c0_49] : memref<3x3x256x256xbf16, #tpu.memory_space<vmem>>, vector<1x1x256x256xbf16>
    %37 = vector.shape_cast %36 : vector<1x1x256x256xbf16> to vector<256x256xbf16>
    %cst_50 = arith.constant dense<0.000000e+00> : vector<16x256xf32>
    %38 = tpu.matmul %35, %37, %cst_50 {dimension_numbers = #tpu.dot_dimension_numbers<[1], [0], [0], [1], [0, 0, 1, 1], [], []>} : vector<16x256xbf16>, vector<256x256xbf16>, vector<16x256xf32> -> vector<16x256xf32>
    %39 = arith.addf %33, %38 : vector<16x256xf32>
    %c0_51 = arith.constant 0 : index
    %c0_52 = arith.constant 0 : index
    %c8 = arith.constant 8 : index
    %c0_53 = arith.constant 0 : index
    %40 = vector.load %arg3[%c0_51, %c0_52, %c8, %c0_53] : memref<1x3x24x256xbf16, #tpu.memory_space<vmem>>, vector<1x1x16x256xbf16>
    %41 = vector.shape_cast %40 : vector<1x1x16x256xbf16> to vector<16x256xbf16>
    %c2_54 = arith.constant 2 : index
    %c0_55 = arith.constant 0 : index
    %c0_56 = arith.constant 0 : index
    %c0_57 = arith.constant 0 : index
    %42 = vector.load %arg4[%c2_54, %c0_55, %c0_56, %c0_57] : memref<3x3x256x256xbf16, #tpu.memory_space<vmem>>, vector<1x1x256x256xbf16>
    %43 = vector.shape_cast %42 : vector<1x1x256x256xbf16> to vector<256x256xbf16>
    %cst_58 = arith.constant dense<0.000000e+00> : vector<16x256xf32>
    %44 = tpu.matmul %41, %43, %cst_58 {dimension_numbers = #tpu.dot_dimension_numbers<[1], [0], [0], [1], [0, 0, 1, 1], [], []>} : vector<16x256xbf16>, vector<256x256xbf16>, vector<16x256xf32> -> vector<16x256xf32>
    %45 = arith.addf %39, %44 : vector<16x256xf32>
    %c0_59 = arith.constant 0 : index
    %c1_60 = arith.constant 1 : index
    %c8_61 = arith.constant 8 : index
    %c0_62 = arith.constant 0 : index
    %46 = vector.load %arg3[%c0_59, %c1_60, %c8_61, %c0_62] : memref<1x3x24x256xbf16, #tpu.memory_space<vmem>>, vector<1x1x16x256xbf16>
    %47 = vector.shape_cast %46 : vector<1x1x16x256xbf16> to vector<16x256xbf16>
    %c2_63 = arith.constant 2 : index
    %c1_64 = arith.constant 1 : index
    %c0_65 = arith.constant 0 : index
    %c0_66 = arith.constant 0 : index
    %48 = vector.load %arg4[%c2_63, %c1_64, %c0_65, %c0_66] : memref<3x3x256x256xbf16, #tpu.memory_space<vmem>>, vector<1x1x256x256xbf16>
    %49 = vector.shape_cast %48 : vector<1x1x256x256xbf16> to vector<256x256xbf16>
    %cst_67 = arith.constant dense<0.000000e+00> : vector<16x256xf32>
    %50 = tpu.matmul %47, %49, %cst_67 {dimension_numbers = #tpu.dot_dimension_numbers<[1], [0], [0], [1], [0, 0, 1, 1], [], []>} : vector<16x256xbf16>, vector<256x256xbf16>, vector<16x256xf32> -> vector<16x256xf32>
    %51 = arith.addf %45, %50 : vector<16x256xf32>
    %c0_68 = arith.constant 0 : index
    %c2_69 = arith.constant 2 : index
    %c8_70 = arith.constant 8 : index
    %c0_71 = arith.constant 0 : index
    %52 = vector.load %arg3[%c0_68, %c2_69, %c8_70, %c0_71] : memref<1x3x24x256xbf16, #tpu.memory_space<vmem>>, vector<1x1x16x256xbf16>
    %53 = vector.shape_cast %52 : vector<1x1x16x256xbf16> to vector<16x256xbf16>
    %c2_72 = arith.constant 2 : index
    %c2_73 = arith.constant 2 : index
    %c0_74 = arith.constant 0 : index
    %c0_75 = arith.constant 0 : index
    %54 = vector.load %arg4[%c2_72, %c2_73, %c0_74, %c0_75] : memref<3x3x256x256xbf16, #tpu.memory_space<vmem>>, vector<1x1x256x256xbf16>
    %55 = vector.shape_cast %54 : vector<1x1x256x256xbf16> to vector<256x256xbf16>
    %cst_76 = arith.constant dense<0.000000e+00> : vector<16x256xf32>
    %56 = tpu.matmul %53, %55, %cst_76 {dimension_numbers = #tpu.dot_dimension_numbers<[1], [0], [0], [1], [0, 0, 1, 1], [], []>} : vector<16x256xbf16>, vector<256x256xbf16>, vector<16x256xf32> -> vector<16x256xf32>
    %57 = arith.addf %51, %56 : vector<16x256xf32>
    %c0_77 = arith.constant 0 : index
    %c0_78 = arith.constant 0 : index
    %c0_79 = arith.constant 0 : index
    %58 = vector.load %arg6[%c0_77, %c0_78, %c0_79] : memref<1x16x256xf32, #tpu.memory_space<vmem>>, vector<1x16x256xf32>
    %59 = vector.shape_cast %58 : vector<1x16x256xf32> to vector<16x256xf32>
    %60 = arith.addf %59, %57 : vector<16x256xf32>
    %c0_80 = arith.constant 0 : index
    %c0_81 = arith.constant 0 : index
    %c0_82 = arith.constant 0 : index
    %61 = vector.load %arg6[%c0_80, %c0_81, %c0_82] : memref<1x16x256xf32, #tpu.memory_space<vmem>>, vector<1x16x256xf32>
    %62 = vector.shape_cast %61 : vector<1x16x256xf32> to vector<16x256xf32>
    %63 = vector.shape_cast %60 : vector<16x256xf32> to vector<1x16x256xf32>
    tpu.vector_store %arg6[%c0_80, %c0_81, %c0_82], %63 {strides = array<i32>} : memref<1x16x256xf32, #tpu.memory_space<vmem>>, vector<1x16x256xf32>,
    %c2_i32 = arith.constant 2 : i32
    %64 = arith.cmpi eq, %arg2, %c2_i32 : i32
    %65 = arith.extui %64 : i1 to i32
    %c0_i32_83 = arith.constant 0 : i32
    %66 = arith.cmpi ne, %65, %c0_i32_83 : i32
    scf.if %66 {
      %c0_84 = arith.constant 0 : index
      %c0_85 = arith.constant 0 : index
      %c0_86 = arith.constant 0 : index
      %67 = vector.load %arg6[%c0_84, %c0_85, %c0_86] : memref<1x16x256xf32, #tpu.memory_space<vmem>>, vector<1x16x256xf32>
      %68 = vector.shape_cast %67 : vector<1x16x256xf32> to vector<16x256xf32>
      %c0_87 = arith.constant 0 : index
      %c0_88 = arith.constant 0 : index
      %69 = vector.load %arg5[%c0_87, %c0_88] : memref<1x256xf32, #tpu.memory_space<vmem>>, vector<1x256xf32>
      %70 = vector.broadcast %69 : vector<1x256xf32> to vector<16x256xf32>
      %71 = arith.addf %68, %70 : vector<16x256xf32>
      %c0_89 = arith.constant 0 : index
      %c0_90 = arith.constant 0 : index
      %c0_91 = arith.constant 0 : index
      %72 = vector.load %arg6[%c0_89, %c0_90, %c0_91] : memref<1x16x256xf32, #tpu.memory_space<vmem>>, vector<1x16x256xf32>
      %73 = vector.shape_cast %72 : vector<1x16x256xf32> to vector<16x256xf32>
      %74 = vector.shape_cast %71 : vector<16x256xf32> to vector<1x16x256xf32>
      tpu.vector_store %arg6[%c0_89, %c0_90, %c0_91], %74 {strides = array<i32>} : memref<1x16x256xf32, #tpu.memory_space<vmem>>, vector<1x16x256xf32>,
    } else {
    }
    return
  }
  func.func @transform_0(%arg0: i32, %arg1: i32, %arg2: i32) -> (i32, i32, i32, i32) {
    %c0_i32 = arith.constant 0 : i32
    %c0_i32_0 = arith.constant 0 : i32
    %c0_i32_1 = arith.constant 0 : i32
    return %arg0, %c0_i32, %c0_i32_0, %arg2 : i32, i32, i32, i32
  }
  func.func @transform_1(%arg0: i32, %arg1: i32, %arg2: i32) -> (i32, i32, i32, i32) {
    %c0_i32 = arith.constant 0 : i32
    %c0_i32_0 = arith.constant 0 : i32
    %c0_i32_1 = arith.constant 0 : i32
    return %c0_i32, %c0_i32_0, %arg2, %arg1 : i32, i32, i32, i32
  }
  func.func @transform_2(%arg0: i32, %arg1: i32, %arg2: i32) -> (i32, i32) {
    %c0_i32 = arith.constant 0 : i32
    %c0_i32_0 = arith.constant 0 : i32
    return %c0_i32, %arg1 : i32, i32
  }
  func.func @transform_3(%arg0: i32, %arg1: i32, %arg2: i32) -> (i32, i32, i32) {
    %c0_i32 = arith.constant 0 : i32
    %c0_i32_0 = arith.constant 0 : i32
    return %arg0, %c0_i32, %arg1 : i32, i32, i32
  }
}

module attributes {stable_mosaic.version = 11 : i64} {
  func.func @_matmul_kernel(%arg0: i32, %arg1: i32, %arg2: i32, %arg3: memref<128x128xbf16, #tpu.memory_space<vmem>>, %arg4: memref<128x128xbf16, #tpu.memory_space<vmem>>, %arg5: memref<1x128xf32, #tpu.memory_space<vmem>>, %arg6: memref<128x128xf32, #tpu.memory_space<vmem>>) attributes {dimension_semantics = [#tpu.dimension_semantics<parallel>, #tpu.dimension_semantics<parallel>, #tpu.dimension_semantics<arbitrary>], iteration_bounds = array<i64: 1, 1, 3>, scalar_prefetch = 0 : i64, scratch_operands = 0 : i64, tpu.core_type = #tpu.core_type<tc>, window_params = [{transform_indices = @transform_0, window_bounds = array<i64: 128, 128>}, {transform_indices = @transform_1, window_bounds = array<i64: 128, 128>}, {transform_indices = @transform_2, window_bounds = array<i64: 1, 128>}, {transform_indices = @transform_3, window_bounds = array<i64: 128, 128>}]} {
    %c0_i32 = arith.constant 0 : i32
    %0 = arith.cmpi eq, %arg2, %c0_i32 : i32
    %1 = arith.extui %0 : i1 to i32
    %c0_i32_0 = arith.constant 0 : i32
    %2 = arith.cmpi ne, %1, %c0_i32_0 : i32
    scf.if %2 {
      %cst_9 = arith.constant 0.000000e+00 : f32
      %12 = vector.broadcast %cst_9 : f32 to vector<128x128xf32>
      %c0_10 = arith.constant 0 : index
      %c0_11 = arith.constant 0 : index
      %13 = vector.load %arg6[%c0_10, %c0_11] : memref<128x128xf32, #tpu.memory_space<vmem>>, vector<128x128xf32>
      tpu.vector_store %arg6[%c0_10, %c0_11], %12 {strides = array<i32>} : memref<128x128xf32, #tpu.memory_space<vmem>>, vector<128x128xf32>,
    } else {
    }
    %c0 = arith.constant 0 : index
    %c0_1 = arith.constant 0 : index
    %3 = vector.load %arg6[%c0, %c0_1] : memref<128x128xf32, #tpu.memory_space<vmem>>, vector<128x128xf32>
    %c0_2 = arith.constant 0 : index
    %c0_3 = arith.constant 0 : index
    %4 = vector.load %arg3[%c0_2, %c0_3] : memref<128x128xbf16, #tpu.memory_space<vmem>>, vector<128x128xbf16>
    %c0_4 = arith.constant 0 : index
    %c0_5 = arith.constant 0 : index
    %5 = vector.load %arg4[%c0_4, %c0_5] : memref<128x128xbf16, #tpu.memory_space<vmem>>, vector<128x128xbf16>
    %cst = arith.constant dense<0.000000e+00> : vector<128x128xf32>
    %6 = tpu.matmul %4, %5, %cst {dimension_numbers = #tpu.dot_dimension_numbers<[1], [0], [0], [1], [0, 0, 1, 1], [], []>} : vector<128x128xbf16>, vector<128x128xbf16>, vector<128x128xf32> -> vector<128x128xf32>
    %7 = arith.addf %3, %6 : vector<128x128xf32>
    %c0_6 = arith.constant 0 : index
    %c0_7 = arith.constant 0 : index
    %8 = vector.load %arg6[%c0_6, %c0_7] : memref<128x128xf32, #tpu.memory_space<vmem>>, vector<128x128xf32>
    tpu.vector_store %arg6[%c0_6, %c0_7], %7 {strides = array<i32>} : memref<128x128xf32, #tpu.memory_space<vmem>>, vector<128x128xf32>,
    %c2_i32 = arith.constant 2 : i32
    %9 = arith.cmpi eq, %arg2, %c2_i32 : i32
    %10 = arith.extui %9 : i1 to i32
    %c0_i32_8 = arith.constant 0 : i32
    %11 = arith.cmpi ne, %10, %c0_i32_8 : i32
    scf.if %11 {
      %c0_9 = arith.constant 0 : index
      %c0_10 = arith.constant 0 : index
      %12 = vector.load %arg6[%c0_9, %c0_10] : memref<128x128xf32, #tpu.memory_space<vmem>>, vector<128x128xf32>
      %c0_11 = arith.constant 0 : index
      %c0_12 = arith.constant 0 : index
      %13 = vector.load %arg5[%c0_11, %c0_12] : memref<1x128xf32, #tpu.memory_space<vmem>>, vector<1x128xf32>
      %14 = vector.broadcast %13 : vector<1x128xf32> to vector<128x128xf32>
      %15 = arith.addf %12, %14 : vector<128x128xf32>
      %c0_13 = arith.constant 0 : index
      %c0_14 = arith.constant 0 : index
      %16 = vector.load %arg6[%c0_13, %c0_14] : memref<128x128xf32, #tpu.memory_space<vmem>>, vector<128x128xf32>
      tpu.vector_store %arg6[%c0_13, %c0_14], %15 {strides = array<i32>} : memref<128x128xf32, #tpu.memory_space<vmem>>, vector<128x128xf32>,
    } else {
    }
    return
  }
  func.func @transform_0(%arg0: i32, %arg1: i32, %arg2: i32) -> (i32, i32) {
    %c0_i32 = arith.constant 0 : i32
    return %arg0, %arg2 : i32, i32
  }
  func.func @transform_1(%arg0: i32, %arg1: i32, %arg2: i32) -> (i32, i32) {
    %c0_i32 = arith.constant 0 : i32
    return %arg2, %arg1 : i32, i32
  }
  func.func @transform_2(%arg0: i32, %arg1: i32, %arg2: i32) -> (i32, i32) {
    %c0_i32 = arith.constant 0 : i32
    %c0_i32_0 = arith.constant 0 : i32
    return %c0_i32, %arg1 : i32, i32
  }
  func.func @transform_3(%arg0: i32, %arg1: i32, %arg2: i32) -> (i32, i32) {
    %c0_i32 = arith.constant 0 : i32
    return %arg0, %arg1 : i32, i32
  }
}

module attributes {stable_mosaic.version = 11 : i64} {
  func.func @_conv3x3_kernel(%arg0: i32, %arg1: i32, %arg2: i32, %arg3: memref<1x3x80x128xbf16, #tpu.memory_space<vmem>>, %arg4: memref<3x3x128x128xbf16, #tpu.memory_space<vmem>>, %arg5: memref<1x128xf32, #tpu.memory_space<vmem>>, %arg6: memref<1x64x128xf32, #tpu.memory_space<vmem>>) attributes {dimension_semantics = [#tpu.dimension_semantics<parallel>, #tpu.dimension_semantics<parallel>, #tpu.dimension_semantics<arbitrary>], iteration_bounds = array<i64: 2, 1, 3>, scalar_prefetch = 0 : i64, scratch_operands = 0 : i64, tpu.core_type = #tpu.core_type<tc>, window_params = [{transform_indices = @transform_0, window_bounds = array<i64: 1, 3, 80, 128>}, {transform_indices = @transform_1, window_bounds = array<i64: 3, 3, 128, 128>}, {transform_indices = @transform_2, window_bounds = array<i64: 1, 128>}, {transform_indices = @transform_3, window_bounds = array<i64: 1, 64, 128>}]} {
    %c0_i32 = arith.constant 0 : i32
    %0 = arith.cmpi eq, %arg2, %c0_i32 : i32
    %1 = arith.extui %0 : i1 to i32
    %c0_i32_0 = arith.constant 0 : i32
    %2 = arith.cmpi ne, %1, %c0_i32_0 : i32
    scf.if %2 {
      %cst_84 = arith.constant 0.000000e+00 : f32
      %67 = vector.broadcast %cst_84 : f32 to vector<1x64x128xf32>
      %c0_85 = arith.constant 0 : index
      %c0_86 = arith.constant 0 : index
      %c0_87 = arith.constant 0 : index
      %68 = vector.load %arg6[%c0_85, %c0_86, %c0_87] : memref<1x64x128xf32, #tpu.memory_space<vmem>>, vector<1x64x128xf32>
      tpu.vector_store %arg6[%c0_85, %c0_86, %c0_87], %67 {strides = array<i32>} : memref<1x64x128xf32, #tpu.memory_space<vmem>>, vector<1x64x128xf32>,
    } else {
    }
    %cst = arith.constant 0.000000e+00 : f32
    %3 = vector.broadcast %cst : f32 to vector<64x128xf32>
    %c0 = arith.constant 0 : index
    %c0_1 = arith.constant 0 : index
    %c0_2 = arith.constant 0 : index
    %c0_3 = arith.constant 0 : index
    %4 = vector.load %arg3[%c0, %c0_1, %c0_2, %c0_3] : memref<1x3x80x128xbf16, #tpu.memory_space<vmem>>, vector<1x1x64x128xbf16>
    %5 = vector.shape_cast %4 : vector<1x1x64x128xbf16> to vector<64x128xbf16>
    %c0_4 = arith.constant 0 : index
    %c0_5 = arith.constant 0 : index
    %c0_6 = arith.constant 0 : index
    %c0_7 = arith.constant 0 : index
    %6 = vector.load %arg4[%c0_4, %c0_5, %c0_6, %c0_7] : memref<3x3x128x128xbf16, #tpu.memory_space<vmem>>, vector<1x1x128x128xbf16>
    %7 = vector.shape_cast %6 : vector<1x1x128x128xbf16> to vector<128x128xbf16>
    %cst_8 = arith.constant dense<0.000000e+00> : vector<64x128xf32>
    %8 = tpu.matmul %5, %7, %cst_8 {dimension_numbers = #tpu.dot_dimension_numbers<[1], [0], [0], [1], [0, 0, 1, 1], [], []>} : vector<64x128xbf16>, vector<128x128xbf16>, vector<64x128xf32> -> vector<64x128xf32>
    %9 = arith.addf %3, %8 : vector<64x128xf32>
    %c0_9 = arith.constant 0 : index
    %c1 = arith.constant 1 : index
    %c0_10 = arith.constant 0 : index
    %c0_11 = arith.constant 0 : index
    %10 = vector.load %arg3[%c0_9, %c1, %c0_10, %c0_11] : memref<1x3x80x128xbf16, #tpu.memory_space<vmem>>, vector<1x1x64x128xbf16>
    %11 = vector.shape_cast %10 : vector<1x1x64x128xbf16> to vector<64x128xbf16>
    %c0_12 = arith.constant 0 : index
    %c1_13 = arith.constant 1 : index
    %c0_14 = arith.constant 0 : index
    %c0_15 = arith.constant 0 : index
    %12 = vector.load %arg4[%c0_12, %c1_13, %c0_14, %c0_15] : memref<3x3x128x128xbf16, #tpu.memory_space<vmem>>, vector<1x1x128x128xbf16>
    %13 = vector.shape_cast %12 : vector<1x1x128x128xbf16> to vector<128x128xbf16>
    %cst_16 = arith.constant dense<0.000000e+00> : vector<64x128xf32>
    %14 = tpu.matmul %11, %13, %cst_16 {dimension_numbers = #tpu.dot_dimension_numbers<[1], [0], [0], [1], [0, 0, 1, 1], [], []>} : vector<64x128xbf16>, vector<128x128xbf16>, vector<64x128xf32> -> vector<64x128xf32>
    %15 = arith.addf %9, %14 : vector<64x128xf32>
    %c0_17 = arith.constant 0 : index
    %c2 = arith.constant 2 : index
    %c0_18 = arith.constant 0 : index
    %c0_19 = arith.constant 0 : index
    %16 = vector.load %arg3[%c0_17, %c2, %c0_18, %c0_19] : memref<1x3x80x128xbf16, #tpu.memory_space<vmem>>, vector<1x1x64x128xbf16>
    %17 = vector.shape_cast %16 : vector<1x1x64x128xbf16> to vector<64x128xbf16>
    %c0_20 = arith.constant 0 : index
    %c2_21 = arith.constant 2 : index
    %c0_22 = arith.constant 0 : index
    %c0_23 = arith.constant 0 : index
    %18 = vector.load %arg4[%c0_20, %c2_21, %c0_22, %c0_23] : memref<3x3x128x128xbf16, #tpu.memory_space<vmem>>, vector<1x1x128x128xbf16>
    %19 = vector.shape_cast %18 : vector<1x1x128x128xbf16> to vector<128x128xbf16>
    %cst_24 = arith.constant dense<0.000000e+00> : vector<64x128xf32>
    %20 = tpu.matmul %17, %19, %cst_24 {dimension_numbers = #tpu.dot_dimension_numbers<[1], [0], [0], [1], [0, 0, 1, 1], [], []>} : vector<64x128xbf16>, vector<128x128xbf16>, vector<64x128xf32> -> vector<64x128xf32>
    %21 = arith.addf %15, %20 : vector<64x128xf32>
    %c0_25 = arith.constant 0 : index
    %c0_26 = arith.constant 0 : index
    %c8 = arith.constant 8 : index
    %c0_27 = arith.constant 0 : index
    %22 = vector.load %arg3[%c0_25, %c0_26, %c8, %c0_27] : memref<1x3x80x128xbf16, #tpu.memory_space<vmem>>, vector<1x1x64x128xbf16>
    %23 = vector.shape_cast %22 : vector<1x1x64x128xbf16> to vector<64x128xbf16>
    %c1_28 = arith.constant 1 : index
    %c0_29 = arith.constant 0 : index
    %c0_30 = arith.constant 0 : index
    %c0_31 = arith.constant 0 : index
    %24 = vector.load %arg4[%c1_28, %c0_29, %c0_30, %c0_31] : memref<3x3x128x128xbf16, #tpu.memory_space<vmem>>, vector<1x1x128x128xbf16>
    %25 = vector.shape_cast %24 : vector<1x1x128x128xbf16> to vector<128x128xbf16>
    %cst_32 = arith.constant dense<0.000000e+00> : vector<64x128xf32>
    %26 = tpu.matmul %23, %25, %cst_32 {dimension_numbers = #tpu.dot_dimension_numbers<[1], [0], [0], [1], [0, 0, 1, 1], [], []>} : vector<64x128xbf16>, vector<128x128xbf16>, vector<64x128xf32> -> vector<64x128xf32>
    %27 = arith.addf %21, %26 : vector<64x128xf32>
    %c0_33 = arith.constant 0 : index
    %c1_34 = arith.constant 1 : index
    %c8_35 = arith.constant 8 : index
    %c0_36 = arith.constant 0 : index
    %28 = vector.load %arg3[%c0_33, %c1_34, %c8_35, %c0_36] : memref<1x3x80x128xbf16, #tpu.memory_space<vmem>>, vector<1x1x64x128xbf16>
    %29 = vector.shape_cast %28 : vector<1x1x64x128xbf16> to vector<64x128xbf16>
    %c1_37 = arith.constant 1 : index
    %c1_38 = arith.constant 1 : index
    %c0_39 = arith.constant 0 : index
    %c0_40 = arith.constant 0 : index
    %30 = vector.load %arg4[%c1_37, %c1_38, %c0_39, %c0_40] : memref<3x3x128x128xbf16, #tpu.memory_space<vmem>>, vector<1x1x128x128xbf16>
    %31 = vector.shape_cast %30 : vector<1x1x128x128xbf16> to vector<128x128xbf16>
    %cst_41 = arith.constant dense<0.000000e+00> : vector<64x128xf32>
    %32 = tpu.matmul %29, %31, %cst_41 {dimension_numbers = #tpu.dot_dimension_numbers<[1], [0], [0], [1], [0, 0, 1, 1], [], []>} : vector<64x128xbf16>, vector<128x128xbf16>, vector<64x128xf32> -> vector<64x128xf32>
    %33 = arith.addf %27, %32 : vector<64x128xf32>
    %c0_42 = arith.constant 0 : index
    %c2_43 = arith.constant 2 : index
    %c8_44 = arith.constant 8 : index
    %c0_45 = arith.constant 0 : index
    %34 = vector.load %arg3[%c0_42, %c2_43, %c8_44, %c0_45] : memref<1x3x80x128xbf16, #tpu.memory_space<vmem>>, vector<1x1x64x128xbf16>
    %35 = vector.shape_cast %34 : vector<1x1x64x128xbf16> to vector<64x128xbf16>
    %c1_46 = arith.constant 1 : index
    %c2_47 = arith.constant 2 : index
    %c0_48 = arith.constant 0 : index
    %c0_49 = arith.constant 0 : index
    %36 = vector.load %arg4[%c1_46, %c2_47, %c0_48, %c0_49] : memref<3x3x128x128xbf16, #tpu.memory_space<vmem>>, vector<1x1x128x128xbf16>
    %37 = vector.shape_cast %36 : vector<1x1x128x128xbf16> to vector<128x128xbf16>
    %cst_50 = arith.constant dense<0.000000e+00> : vector<64x128xf32>
    %38 = tpu.matmul %35, %37, %cst_50 {dimension_numbers = #tpu.dot_dimension_numbers<[1], [0], [0], [1], [0, 0, 1, 1], [], []>} : vector<64x128xbf16>, vector<128x128xbf16>, vector<64x128xf32> -> vector<64x128xf32>
    %39 = arith.addf %33, %38 : vector<64x128xf32>
    %c0_51 = arith.constant 0 : index
    %c0_52 = arith.constant 0 : index
    %c16 = arith.constant 16 : index
    %c0_53 = arith.constant 0 : index
    %40 = vector.load %arg3[%c0_51, %c0_52, %c16, %c0_53] : memref<1x3x80x128xbf16, #tpu.memory_space<vmem>>, vector<1x1x64x128xbf16>
    %41 = vector.shape_cast %40 : vector<1x1x64x128xbf16> to vector<64x128xbf16>
    %c2_54 = arith.constant 2 : index
    %c0_55 = arith.constant 0 : index
    %c0_56 = arith.constant 0 : index
    %c0_57 = arith.constant 0 : index
    %42 = vector.load %arg4[%c2_54, %c0_55, %c0_56, %c0_57] : memref<3x3x128x128xbf16, #tpu.memory_space<vmem>>, vector<1x1x128x128xbf16>
    %43 = vector.shape_cast %42 : vector<1x1x128x128xbf16> to vector<128x128xbf16>
    %cst_58 = arith.constant dense<0.000000e+00> : vector<64x128xf32>
    %44 = tpu.matmul %41, %43, %cst_58 {dimension_numbers = #tpu.dot_dimension_numbers<[1], [0], [0], [1], [0, 0, 1, 1], [], []>} : vector<64x128xbf16>, vector<128x128xbf16>, vector<64x128xf32> -> vector<64x128xf32>
    %45 = arith.addf %39, %44 : vector<64x128xf32>
    %c0_59 = arith.constant 0 : index
    %c1_60 = arith.constant 1 : index
    %c16_61 = arith.constant 16 : index
    %c0_62 = arith.constant 0 : index
    %46 = vector.load %arg3[%c0_59, %c1_60, %c16_61, %c0_62] : memref<1x3x80x128xbf16, #tpu.memory_space<vmem>>, vector<1x1x64x128xbf16>
    %47 = vector.shape_cast %46 : vector<1x1x64x128xbf16> to vector<64x128xbf16>
    %c2_63 = arith.constant 2 : index
    %c1_64 = arith.constant 1 : index
    %c0_65 = arith.constant 0 : index
    %c0_66 = arith.constant 0 : index
    %48 = vector.load %arg4[%c2_63, %c1_64, %c0_65, %c0_66] : memref<3x3x128x128xbf16, #tpu.memory_space<vmem>>, vector<1x1x128x128xbf16>
    %49 = vector.shape_cast %48 : vector<1x1x128x128xbf16> to vector<128x128xbf16>
    %cst_67 = arith.constant dense<0.000000e+00> : vector<64x128xf32>
    %50 = tpu.matmul %47, %49, %cst_67 {dimension_numbers = #tpu.dot_dimension_numbers<[1], [0], [0], [1], [0, 0, 1, 1], [], []>} : vector<64x128xbf16>, vector<128x128xbf16>, vector<64x128xf32> -> vector<64x128xf32>
    %51 = arith.addf %45, %50 : vector<64x128xf32>
    %c0_68 = arith.constant 0 : index
    %c2_69 = arith.constant 2 : index
    %c16_70 = arith.constant 16 : index
    %c0_71 = arith.constant 0 : index
    %52 = vector.load %arg3[%c0_68, %c2_69, %c16_70, %c0_71] : memref<1x3x80x128xbf16, #tpu.memory_space<vmem>>, vector<1x1x64x128xbf16>
    %53 = vector.shape_cast %52 : vector<1x1x64x128xbf16> to vector<64x128xbf16>
    %c2_72 = arith.constant 2 : index
    %c2_73 = arith.constant 2 : index
    %c0_74 = arith.constant 0 : index
    %c0_75 = arith.constant 0 : index
    %54 = vector.load %arg4[%c2_72, %c2_73, %c0_74, %c0_75] : memref<3x3x128x128xbf16, #tpu.memory_space<vmem>>, vector<1x1x128x128xbf16>
    %55 = vector.shape_cast %54 : vector<1x1x128x128xbf16> to vector<128x128xbf16>
    %cst_76 = arith.constant dense<0.000000e+00> : vector<64x128xf32>
    %56 = tpu.matmul %53, %55, %cst_76 {dimension_numbers = #tpu.dot_dimension_numbers<[1], [0], [0], [1], [0, 0, 1, 1], [], []>} : vector<64x128xbf16>, vector<128x128xbf16>, vector<64x128xf32> -> vector<64x128xf32>
    %57 = arith.addf %51, %56 : vector<64x128xf32>
    %c0_77 = arith.constant 0 : index
    %c0_78 = arith.constant 0 : index
    %c0_79 = arith.constant 0 : index
    %58 = vector.load %arg6[%c0_77, %c0_78, %c0_79] : memref<1x64x128xf32, #tpu.memory_space<vmem>>, vector<1x64x128xf32>
    %59 = vector.shape_cast %58 : vector<1x64x128xf32> to vector<64x128xf32>
    %60 = arith.addf %59, %57 : vector<64x128xf32>
    %c0_80 = arith.constant 0 : index
    %c0_81 = arith.constant 0 : index
    %c0_82 = arith.constant 0 : index
    %61 = vector.load %arg6[%c0_80, %c0_81, %c0_82] : memref<1x64x128xf32, #tpu.memory_space<vmem>>, vector<1x64x128xf32>
    %62 = vector.shape_cast %61 : vector<1x64x128xf32> to vector<64x128xf32>
    %63 = vector.shape_cast %60 : vector<64x128xf32> to vector<1x64x128xf32>
    tpu.vector_store %arg6[%c0_80, %c0_81, %c0_82], %63 {strides = array<i32>} : memref<1x64x128xf32, #tpu.memory_space<vmem>>, vector<1x64x128xf32>,
    %c2_i32 = arith.constant 2 : i32
    %64 = arith.cmpi eq, %arg2, %c2_i32 : i32
    %65 = arith.extui %64 : i1 to i32
    %c0_i32_83 = arith.constant 0 : i32
    %66 = arith.cmpi ne, %65, %c0_i32_83 : i32
    scf.if %66 {
      %c0_84 = arith.constant 0 : index
      %c0_85 = arith.constant 0 : index
      %c0_86 = arith.constant 0 : index
      %67 = vector.load %arg6[%c0_84, %c0_85, %c0_86] : memref<1x64x128xf32, #tpu.memory_space<vmem>>, vector<1x64x128xf32>
      %68 = vector.shape_cast %67 : vector<1x64x128xf32> to vector<64x128xf32>
      %c0_87 = arith.constant 0 : index
      %c0_88 = arith.constant 0 : index
      %69 = vector.load %arg5[%c0_87, %c0_88] : memref<1x128xf32, #tpu.memory_space<vmem>>, vector<1x128xf32>
      %70 = vector.broadcast %69 : vector<1x128xf32> to vector<64x128xf32>
      %71 = arith.addf %68, %70 : vector<64x128xf32>
      %c0_89 = arith.constant 0 : index
      %c0_90 = arith.constant 0 : index
      %c0_91 = arith.constant 0 : index
      %72 = vector.load %arg6[%c0_89, %c0_90, %c0_91] : memref<1x64x128xf32, #tpu.memory_space<vmem>>, vector<1x64x128xf32>
      %73 = vector.shape_cast %72 : vector<1x64x128xf32> to vector<64x128xf32>
      %74 = vector.shape_cast %71 : vector<64x128xf32> to vector<1x64x128xf32>
      tpu.vector_store %arg6[%c0_89, %c0_90, %c0_91], %74 {strides = array<i32>} : memref<1x64x128xf32, #tpu.memory_space<vmem>>, vector<1x64x128xf32>,
    } else {
    }
    return
  }
  func.func @transform_0(%arg0: i32, %arg1: i32, %arg2: i32) -> (i32, i32, i32, i32) {
    %c0_i32 = arith.constant 0 : i32
    %c0_i32_0 = arith.constant 0 : i32
    %c0_i32_1 = arith.constant 0 : i32
    return %arg0, %c0_i32, %c0_i32_0, %arg2 : i32, i32, i32, i32
  }
  func.func @transform_1(%arg0: i32, %arg1: i32, %arg2: i32) -> (i32, i32, i32, i32) {
    %c0_i32 = arith.constant 0 : i32
    %c0_i32_0 = arith.constant 0 : i32
    %c0_i32_1 = arith.constant 0 : i32
    return %c0_i32, %c0_i32_0, %arg2, %arg1 : i32, i32, i32, i32
  }
  func.func @transform_2(%arg0: i32, %arg1: i32, %arg2: i32) -> (i32, i32) {
    %c0_i32 = arith.constant 0 : i32
    %c0_i32_0 = arith.constant 0 : i32
    return %c0_i32, %arg1 : i32, i32
  }
  func.func @transform_3(%arg0: i32, %arg1: i32, %arg2: i32) -> (i32, i32, i32) {
    %c0_i32 = arith.constant 0 : i32
    %c0_i32_0 = arith.constant 0 : i32
    return %arg0, %c0_i32, %arg1 : i32, i32, i32
  }
}

module attributes {stable_mosaic.version = 11 : i64} {
  func.func @_matmul_kernel(%arg0: i32, %arg1: i32, %arg2: i32, %arg3: memref<512x256xbf16, #tpu.memory_space<vmem>>, %arg4: memref<256x64xbf16, #tpu.memory_space<vmem>>, %arg5: memref<1x64xf32, #tpu.memory_space<vmem>>, %arg6: memref<512x64xf32, #tpu.memory_space<vmem>>) attributes {dimension_semantics = [#tpu.dimension_semantics<parallel>, #tpu.dimension_semantics<parallel>, #tpu.dimension_semantics<arbitrary>], iteration_bounds = array<i64: 1, 1, 1>, scalar_prefetch = 0 : i64, scratch_operands = 0 : i64, tpu.core_type = #tpu.core_type<tc>, window_params = [{transform_indices = @transform_0, window_bounds = array<i64: 512, 256>}, {transform_indices = @transform_1, window_bounds = array<i64: 256, 64>}, {transform_indices = @transform_2, window_bounds = array<i64: 1, 64>}, {transform_indices = @transform_3, window_bounds = array<i64: 512, 64>}]} {
    %c0_i32 = arith.constant 0 : i32
    %0 = arith.cmpi eq, %arg2, %c0_i32 : i32
    %1 = arith.extui %0 : i1 to i32
    %c0_i32_0 = arith.constant 0 : i32
    %2 = arith.cmpi ne, %1, %c0_i32_0 : i32
    scf.if %2 {
      %cst_10 = arith.constant 0.000000e+00 : f32
      %12 = vector.broadcast %cst_10 : f32 to vector<512x64xf32>
      %c0_11 = arith.constant 0 : index
      %c0_12 = arith.constant 0 : index
      %13 = vector.load %arg6[%c0_11, %c0_12] : memref<512x64xf32, #tpu.memory_space<vmem>>, vector<512x64xf32>
      tpu.vector_store %arg6[%c0_11, %c0_12], %12 {strides = array<i32>} : memref<512x64xf32, #tpu.memory_space<vmem>>, vector<512x64xf32>,
    } else {
    }
    %c0 = arith.constant 0 : index
    %c0_1 = arith.constant 0 : index
    %3 = vector.load %arg6[%c0, %c0_1] : memref<512x64xf32, #tpu.memory_space<vmem>>, vector<512x64xf32>
    %c0_2 = arith.constant 0 : index
    %c0_3 = arith.constant 0 : index
    %4 = vector.load %arg3[%c0_2, %c0_3] : memref<512x256xbf16, #tpu.memory_space<vmem>>, vector<512x256xbf16>
    %c0_4 = arith.constant 0 : index
    %c0_5 = arith.constant 0 : index
    %5 = vector.load %arg4[%c0_4, %c0_5] : memref<256x64xbf16, #tpu.memory_space<vmem>>, vector<256x64xbf16>
    %cst = arith.constant dense<0.000000e+00> : vector<512x64xf32>
    %6 = tpu.matmul %4, %5, %cst {dimension_numbers = #tpu.dot_dimension_numbers<[1], [0], [0], [1], [0, 0, 1, 1], [], []>} : vector<512x256xbf16>, vector<256x64xbf16>, vector<512x64xf32> -> vector<512x64xf32>
    %7 = arith.addf %3, %6 : vector<512x64xf32>
    %c0_6 = arith.constant 0 : index
    %c0_7 = arith.constant 0 : index
    %8 = vector.load %arg6[%c0_6, %c0_7] : memref<512x64xf32, #tpu.memory_space<vmem>>, vector<512x64xf32>
    tpu.vector_store %arg6[%c0_6, %c0_7], %7 {strides = array<i32>} : memref<512x64xf32, #tpu.memory_space<vmem>>, vector<512x64xf32>,
    %c0_i32_8 = arith.constant 0 : i32
    %9 = arith.cmpi eq, %arg2, %c0_i32_8 : i32
    %10 = arith.extui %9 : i1 to i32
    %c0_i32_9 = arith.constant 0 : i32
    %11 = arith.cmpi ne, %10, %c0_i32_9 : i32
    scf.if %11 {
      %c0_10 = arith.constant 0 : index
      %c0_11 = arith.constant 0 : index
      %12 = vector.load %arg6[%c0_10, %c0_11] : memref<512x64xf32, #tpu.memory_space<vmem>>, vector<512x64xf32>
      %c0_12 = arith.constant 0 : index
      %c0_13 = arith.constant 0 : index
      %13 = vector.load %arg5[%c0_12, %c0_13] : memref<1x64xf32, #tpu.memory_space<vmem>>, vector<1x64xf32>
      %14 = vector.broadcast %13 : vector<1x64xf32> to vector<512x64xf32>
      %15 = arith.addf %12, %14 : vector<512x64xf32>
      %c0_14 = arith.constant 0 : index
      %c0_15 = arith.constant 0 : index
      %16 = vector.load %arg6[%c0_14, %c0_15] : memref<512x64xf32, #tpu.memory_space<vmem>>, vector<512x64xf32>
      tpu.vector_store %arg6[%c0_14, %c0_15], %15 {strides = array<i32>} : memref<512x64xf32, #tpu.memory_space<vmem>>, vector<512x64xf32>,
    } else {
    }
    return
  }
  func.func @transform_0(%arg0: i32, %arg1: i32, %arg2: i32) -> (i32, i32) {
    %c0_i32 = arith.constant 0 : i32
    return %arg0, %arg2 : i32, i32
  }
  func.func @transform_1(%arg0: i32, %arg1: i32, %arg2: i32) -> (i32, i32) {
    %c0_i32 = arith.constant 0 : i32
    return %arg2, %arg1 : i32, i32
  }
  func.func @transform_2(%arg0: i32, %arg1: i32, %arg2: i32) -> (i32, i32) {
    %c0_i32 = arith.constant 0 : i32
    %c0_i32_0 = arith.constant 0 : i32
    return %c0_i32, %arg1 : i32, i32
  }
  func.func @transform_3(%arg0: i32, %arg1: i32, %arg2: i32) -> (i32, i32) {
    %c0_i32 = arith.constant 0 : i32
    return %arg0, %arg1 : i32, i32
  }
}

module attributes {stable_mosaic.version = 11 : i64} {
  func.func @_conv3x3_kernel(%arg0: i32, %arg1: i32, %arg2: i32, %arg3: memref<1x3x288x256xbf16, #tpu.memory_space<vmem>>, %arg4: memref<3x3x256x64xbf16, #tpu.memory_space<vmem>>, %arg5: memref<1x64xf32, #tpu.memory_space<vmem>>, %arg6: memref<1x256x64xf32, #tpu.memory_space<vmem>>) attributes {dimension_semantics = [#tpu.dimension_semantics<parallel>, #tpu.dimension_semantics<parallel>, #tpu.dimension_semantics<arbitrary>], iteration_bounds = array<i64: 2, 1, 1>, scalar_prefetch = 0 : i64, scratch_operands = 0 : i64, tpu.core_type = #tpu.core_type<tc>, window_params = [{transform_indices = @transform_0, window_bounds = array<i64: 1, 3, 288, 256>}, {transform_indices = @transform_1, window_bounds = array<i64: 3, 3, 256, 64>}, {transform_indices = @transform_2, window_bounds = array<i64: 1, 64>}, {transform_indices = @transform_3, window_bounds = array<i64: 1, 256, 64>}]} {
    %c0_i32 = arith.constant 0 : i32
    %0 = arith.cmpi eq, %arg2, %c0_i32 : i32
    %1 = arith.extui %0 : i1 to i32
    %c0_i32_0 = arith.constant 0 : i32
    %2 = arith.cmpi ne, %1, %c0_i32_0 : i32
    scf.if %2 {
      %cst_85 = arith.constant 0.000000e+00 : f32
      %67 = vector.broadcast %cst_85 : f32 to vector<1x256x64xf32>
      %c0_86 = arith.constant 0 : index
      %c0_87 = arith.constant 0 : index
      %c0_88 = arith.constant 0 : index
      %68 = vector.load %arg6[%c0_86, %c0_87, %c0_88] : memref<1x256x64xf32, #tpu.memory_space<vmem>>, vector<1x256x64xf32>
      tpu.vector_store %arg6[%c0_86, %c0_87, %c0_88], %67 {strides = array<i32>} : memref<1x256x64xf32, #tpu.memory_space<vmem>>, vector<1x256x64xf32>,
    } else {
    }
    %cst = arith.constant 0.000000e+00 : f32
    %3 = vector.broadcast %cst : f32 to vector<256x64xf32>
    %c0 = arith.constant 0 : index
    %c0_1 = arith.constant 0 : index
    %c0_2 = arith.constant 0 : index
    %c0_3 = arith.constant 0 : index
    %4 = vector.load %arg3[%c0, %c0_1, %c0_2, %c0_3] : memref<1x3x288x256xbf16, #tpu.memory_space<vmem>>, vector<1x1x256x256xbf16>
    %5 = vector.shape_cast %4 : vector<1x1x256x256xbf16> to vector<256x256xbf16>
    %c0_4 = arith.constant 0 : index
    %c0_5 = arith.constant 0 : index
    %c0_6 = arith.constant 0 : index
    %c0_7 = arith.constant 0 : index
    %6 = vector.load %arg4[%c0_4, %c0_5, %c0_6, %c0_7] : memref<3x3x256x64xbf16, #tpu.memory_space<vmem>>, vector<1x1x256x64xbf16>
    %7 = vector.shape_cast %6 : vector<1x1x256x64xbf16> to vector<256x64xbf16>
    %cst_8 = arith.constant dense<0.000000e+00> : vector<256x64xf32>
    %8 = tpu.matmul %5, %7, %cst_8 {dimension_numbers = #tpu.dot_dimension_numbers<[1], [0], [0], [1], [0, 0, 1, 1], [], []>} : vector<256x256xbf16>, vector<256x64xbf16>, vector<256x64xf32> -> vector<256x64xf32>
    %9 = arith.addf %3, %8 : vector<256x64xf32>
    %c0_9 = arith.constant 0 : index
    %c1 = arith.constant 1 : index
    %c0_10 = arith.constant 0 : index
    %c0_11 = arith.constant 0 : index
    %10 = vector.load %arg3[%c0_9, %c1, %c0_10, %c0_11] : memref<1x3x288x256xbf16, #tpu.memory_space<vmem>>, vector<1x1x256x256xbf16>
    %11 = vector.shape_cast %10 : vector<1x1x256x256xbf16> to vector<256x256xbf16>
    %c0_12 = arith.constant 0 : index
    %c1_13 = arith.constant 1 : index
    %c0_14 = arith.constant 0 : index
    %c0_15 = arith.constant 0 : index
    %12 = vector.load %arg4[%c0_12, %c1_13, %c0_14, %c0_15] : memref<3x3x256x64xbf16, #tpu.memory_space<vmem>>, vector<1x1x256x64xbf16>
    %13 = vector.shape_cast %12 : vector<1x1x256x64xbf16> to vector<256x64xbf16>
    %cst_16 = arith.constant dense<0.000000e+00> : vector<256x64xf32>
    %14 = tpu.matmul %11, %13, %cst_16 {dimension_numbers = #tpu.dot_dimension_numbers<[1], [0], [0], [1], [0, 0, 1, 1], [], []>} : vector<256x256xbf16>, vector<256x64xbf16>, vector<256x64xf32> -> vector<256x64xf32>
    %15 = arith.addf %9, %14 : vector<256x64xf32>
    %c0_17 = arith.constant 0 : index
    %c2 = arith.constant 2 : index
    %c0_18 = arith.constant 0 : index
    %c0_19 = arith.constant 0 : index
    %16 = vector.load %arg3[%c0_17, %c2, %c0_18, %c0_19] : memref<1x3x288x256xbf16, #tpu.memory_space<vmem>>, vector<1x1x256x256xbf16>
    %17 = vector.shape_cast %16 : vector<1x1x256x256xbf16> to vector<256x256xbf16>
    %c0_20 = arith.constant 0 : index
    %c2_21 = arith.constant 2 : index
    %c0_22 = arith.constant 0 : index
    %c0_23 = arith.constant 0 : index
    %18 = vector.load %arg4[%c0_20, %c2_21, %c0_22, %c0_23] : memref<3x3x256x64xbf16, #tpu.memory_space<vmem>>, vector<1x1x256x64xbf16>
    %19 = vector.shape_cast %18 : vector<1x1x256x64xbf16> to vector<256x64xbf16>
    %cst_24 = arith.constant dense<0.000000e+00> : vector<256x64xf32>
    %20 = tpu.matmul %17, %19, %cst_24 {dimension_numbers = #tpu.dot_dimension_numbers<[1], [0], [0], [1], [0, 0, 1, 1], [], []>} : vector<256x256xbf16>, vector<256x64xbf16>, vector<256x64xf32> -> vector<256x64xf32>
    %21 = arith.addf %15, %20 : vector<256x64xf32>
    %c0_25 = arith.constant 0 : index
    %c0_26 = arith.constant 0 : index
    %c16 = arith.constant 16 : index
    %c0_27 = arith.constant 0 : index
    %22 = vector.load %arg3[%c0_25, %c0_26, %c16, %c0_27] : memref<1x3x288x256xbf16, #tpu.memory_space<vmem>>, vector<1x1x256x256xbf16>
    %23 = vector.shape_cast %22 : vector<1x1x256x256xbf16> to vector<256x256xbf16>
    %c1_28 = arith.constant 1 : index
    %c0_29 = arith.constant 0 : index
    %c0_30 = arith.constant 0 : index
    %c0_31 = arith.constant 0 : index
    %24 = vector.load %arg4[%c1_28, %c0_29, %c0_30, %c0_31] : memref<3x3x256x64xbf16, #tpu.memory_space<vmem>>, vector<1x1x256x64xbf16>
    %25 = vector.shape_cast %24 : vector<1x1x256x64xbf16> to vector<256x64xbf16>
    %cst_32 = arith.constant dense<0.000000e+00> : vector<256x64xf32>
    %26 = tpu.matmul %23, %25, %cst_32 {dimension_numbers = #tpu.dot_dimension_numbers<[1], [0], [0], [1], [0, 0, 1, 1], [], []>} : vector<256x256xbf16>, vector<256x64xbf16>, vector<256x64xf32> -> vector<256x64xf32>
    %27 = arith.addf %21, %26 : vector<256x64xf32>
    %c0_33 = arith.constant 0 : index
    %c1_34 = arith.constant 1 : index
    %c16_35 = arith.constant 16 : index
    %c0_36 = arith.constant 0 : index
    %28 = vector.load %arg3[%c0_33, %c1_34, %c16_35, %c0_36] : memref<1x3x288x256xbf16, #tpu.memory_space<vmem>>, vector<1x1x256x256xbf16>
    %29 = vector.shape_cast %28 : vector<1x1x256x256xbf16> to vector<256x256xbf16>
    %c1_37 = arith.constant 1 : index
    %c1_38 = arith.constant 1 : index
    %c0_39 = arith.constant 0 : index
    %c0_40 = arith.constant 0 : index
    %30 = vector.load %arg4[%c1_37, %c1_38, %c0_39, %c0_40] : memref<3x3x256x64xbf16, #tpu.memory_space<vmem>>, vector<1x1x256x64xbf16>
    %31 = vector.shape_cast %30 : vector<1x1x256x64xbf16> to vector<256x64xbf16>
    %cst_41 = arith.constant dense<0.000000e+00> : vector<256x64xf32>
    %32 = tpu.matmul %29, %31, %cst_41 {dimension_numbers = #tpu.dot_dimension_numbers<[1], [0], [0], [1], [0, 0, 1, 1], [], []>} : vector<256x256xbf16>, vector<256x64xbf16>, vector<256x64xf32> -> vector<256x64xf32>
    %33 = arith.addf %27, %32 : vector<256x64xf32>
    %c0_42 = arith.constant 0 : index
    %c2_43 = arith.constant 2 : index
    %c16_44 = arith.constant 16 : index
    %c0_45 = arith.constant 0 : index
    %34 = vector.load %arg3[%c0_42, %c2_43, %c16_44, %c0_45] : memref<1x3x288x256xbf16, #tpu.memory_space<vmem>>, vector<1x1x256x256xbf16>
    %35 = vector.shape_cast %34 : vector<1x1x256x256xbf16> to vector<256x256xbf16>
    %c1_46 = arith.constant 1 : index
    %c2_47 = arith.constant 2 : index
    %c0_48 = arith.constant 0 : index
    %c0_49 = arith.constant 0 : index
    %36 = vector.load %arg4[%c1_46, %c2_47, %c0_48, %c0_49] : memref<3x3x256x64xbf16, #tpu.memory_space<vmem>>, vector<1x1x256x64xbf16>
    %37 = vector.shape_cast %36 : vector<1x1x256x64xbf16> to vector<256x64xbf16>
    %cst_50 = arith.constant dense<0.000000e+00> : vector<256x64xf32>
    %38 = tpu.matmul %35, %37, %cst_50 {dimension_numbers = #tpu.dot_dimension_numbers<[1], [0], [0], [1], [0, 0, 1, 1], [], []>} : vector<256x256xbf16>, vector<256x64xbf16>, vector<256x64xf32> -> vector<256x64xf32>
    %39 = arith.addf %33, %38 : vector<256x64xf32>
    %c0_51 = arith.constant 0 : index
    %c0_52 = arith.constant 0 : index
    %c32 = arith.constant 32 : index
    %c0_53 = arith.constant 0 : index
    %40 = vector.load %arg3[%c0_51, %c0_52, %c32, %c0_53] : memref<1x3x288x256xbf16, #tpu.memory_space<vmem>>, vector<1x1x256x256xbf16>
    %41 = vector.shape_cast %40 : vector<1x1x256x256xbf16> to vector<256x256xbf16>
    %c2_54 = arith.constant 2 : index
    %c0_55 = arith.constant 0 : index
    %c0_56 = arith.constant 0 : index
    %c0_57 = arith.constant 0 : index
    %42 = vector.load %arg4[%c2_54, %c0_55, %c0_56, %c0_57] : memref<3x3x256x64xbf16, #tpu.memory_space<vmem>>, vector<1x1x256x64xbf16>
    %43 = vector.shape_cast %42 : vector<1x1x256x64xbf16> to vector<256x64xbf16>
    %cst_58 = arith.constant dense<0.000000e+00> : vector<256x64xf32>
    %44 = tpu.matmul %41, %43, %cst_58 {dimension_numbers = #tpu.dot_dimension_numbers<[1], [0], [0], [1], [0, 0, 1, 1], [], []>} : vector<256x256xbf16>, vector<256x64xbf16>, vector<256x64xf32> -> vector<256x64xf32>
    %45 = arith.addf %39, %44 : vector<256x64xf32>
    %c0_59 = arith.constant 0 : index
    %c1_60 = arith.constant 1 : index
    %c32_61 = arith.constant 32 : index
    %c0_62 = arith.constant 0 : index
    %46 = vector.load %arg3[%c0_59, %c1_60, %c32_61, %c0_62] : memref<1x3x288x256xbf16, #tpu.memory_space<vmem>>, vector<1x1x256x256xbf16>
    %47 = vector.shape_cast %46 : vector<1x1x256x256xbf16> to vector<256x256xbf16>
    %c2_63 = arith.constant 2 : index
    %c1_64 = arith.constant 1 : index
    %c0_65 = arith.constant 0 : index
    %c0_66 = arith.constant 0 : index
    %48 = vector.load %arg4[%c2_63, %c1_64, %c0_65, %c0_66] : memref<3x3x256x64xbf16, #tpu.memory_space<vmem>>, vector<1x1x256x64xbf16>
    %49 = vector.shape_cast %48 : vector<1x1x256x64xbf16> to vector<256x64xbf16>
    %cst_67 = arith.constant dense<0.000000e+00> : vector<256x64xf32>
    %50 = tpu.matmul %47, %49, %cst_67 {dimension_numbers = #tpu.dot_dimension_numbers<[1], [0], [0], [1], [0, 0, 1, 1], [], []>} : vector<256x256xbf16>, vector<256x64xbf16>, vector<256x64xf32> -> vector<256x64xf32>
    %51 = arith.addf %45, %50 : vector<256x64xf32>
    %c0_68 = arith.constant 0 : index
    %c2_69 = arith.constant 2 : index
    %c32_70 = arith.constant 32 : index
    %c0_71 = arith.constant 0 : index
    %52 = vector.load %arg3[%c0_68, %c2_69, %c32_70, %c0_71] : memref<1x3x288x256xbf16, #tpu.memory_space<vmem>>, vector<1x1x256x256xbf16>
    %53 = vector.shape_cast %52 : vector<1x1x256x256xbf16> to vector<256x256xbf16>
    %c2_72 = arith.constant 2 : index
    %c2_73 = arith.constant 2 : index
    %c0_74 = arith.constant 0 : index
    %c0_75 = arith.constant 0 : index
    %54 = vector.load %arg4[%c2_72, %c2_73, %c0_74, %c0_75] : memref<3x3x256x64xbf16, #tpu.memory_space<vmem>>, vector<1x1x256x64xbf16>
    %55 = vector.shape_cast %54 : vector<1x1x256x64xbf16> to vector<256x64xbf16>
    %cst_76 = arith.constant dense<0.000000e+00> : vector<256x64xf32>
    %56 = tpu.matmul %53, %55, %cst_76 {dimension_numbers = #tpu.dot_dimension_numbers<[1], [0], [0], [1], [0, 0, 1, 1], [], []>} : vector<256x256xbf16>, vector<256x64xbf16>, vector<256x64xf32> -> vector<256x64xf32>
    %57 = arith.addf %51, %56 : vector<256x64xf32>
    %c0_77 = arith.constant 0 : index
    %c0_78 = arith.constant 0 : index
    %c0_79 = arith.constant 0 : index
    %58 = vector.load %arg6[%c0_77, %c0_78, %c0_79] : memref<1x256x64xf32, #tpu.memory_space<vmem>>, vector<1x256x64xf32>
    %59 = vector.shape_cast %58 : vector<1x256x64xf32> to vector<256x64xf32>
    %60 = arith.addf %59, %57 : vector<256x64xf32>
    %c0_80 = arith.constant 0 : index
    %c0_81 = arith.constant 0 : index
    %c0_82 = arith.constant 0 : index
    %61 = vector.load %arg6[%c0_80, %c0_81, %c0_82] : memref<1x256x64xf32, #tpu.memory_space<vmem>>, vector<1x256x64xf32>
    %62 = vector.shape_cast %61 : vector<1x256x64xf32> to vector<256x64xf32>
    %63 = vector.shape_cast %60 : vector<256x64xf32> to vector<1x256x64xf32>
    tpu.vector_store %arg6[%c0_80, %c0_81, %c0_82], %63 {strides = array<i32>} : memref<1x256x64xf32, #tpu.memory_space<vmem>>, vector<1x256x64xf32>,
    %c0_i32_83 = arith.constant 0 : i32
    %64 = arith.cmpi eq, %arg2, %c0_i32_83 : i32
    %65 = arith.extui %64 : i1 to i32
    %c0_i32_84 = arith.constant 0 : i32
    %66 = arith.cmpi ne, %65, %c0_i32_84 : i32
    scf.if %66 {
      %c0_85 = arith.constant 0 : index
      %c0_86 = arith.constant 0 : index
      %c0_87 = arith.constant 0 : index
      %67 = vector.load %arg6[%c0_85, %c0_86, %c0_87] : memref<1x256x64xf32, #tpu.memory_space<vmem>>, vector<1x256x64xf32>
      %68 = vector.shape_cast %67 : vector<1x256x64xf32> to vector<256x64xf32>
      %c0_88 = arith.constant 0 : index
      %c0_89 = arith.constant 0 : index
      %69 = vector.load %arg5[%c0_88, %c0_89] : memref<1x64xf32, #tpu.memory_space<vmem>>, vector<1x64xf32>
      %70 = vector.broadcast %69 : vector<1x64xf32> to vector<256x64xf32>
      %71 = arith.addf %68, %70 : vector<256x64xf32>
      %c0_90 = arith.constant 0 : index
      %c0_91 = arith.constant 0 : index
      %c0_92 = arith.constant 0 : index
      %72 = vector.load %arg6[%c0_90, %c0_91, %c0_92] : memref<1x256x64xf32, #tpu.memory_space<vmem>>, vector<1x256x64xf32>
      %73 = vector.shape_cast %72 : vector<1x256x64xf32> to vector<256x64xf32>
      %74 = vector.shape_cast %71 : vector<256x64xf32> to vector<1x256x64xf32>
      tpu.vector_store %arg6[%c0_90, %c0_91, %c0_92], %74 {strides = array<i32>} : memref<1x256x64xf32, #tpu.memory_space<vmem>>, vector<1x256x64xf32>,
    } else {
    }
    return
  }
  func.func @transform_0(%arg0: i32, %arg1: i32, %arg2: i32) -> (i32, i32, i32, i32) {
    %c0_i32 = arith.constant 0 : i32
    %c0_i32_0 = arith.constant 0 : i32
    %c0_i32_1 = arith.constant 0 : i32
    return %arg0, %c0_i32, %c0_i32_0, %arg2 : i32, i32, i32, i32
  }
  func.func @transform_1(%arg0: i32, %arg1: i32, %arg2: i32) -> (i32, i32, i32, i32) {
    %c0_i32 = arith.constant 0 : i32
    %c0_i32_0 = arith.constant 0 : i32
    %c0_i32_1 = arith.constant 0 : i32
    return %c0_i32, %c0_i32_0, %arg2, %arg1 : i32, i32, i32, i32
  }
  func.func @transform_2(%arg0: i32, %arg1: i32, %arg2: i32) -> (i32, i32) {
    %c0_i32 = arith.constant 0 : i32
    %c0_i32_0 = arith.constant 0 : i32
    return %c0_i32, %arg1 : i32, i32
  }
  func.func @transform_3(%arg0: i32, %arg1: i32, %arg2: i32) -> (i32, i32, i32) {
    %c0_i32 = arith.constant 0 : i32
    %c0_i32_0 = arith.constant 0 : i32
    return %arg0, %c0_i32, %arg1 : i32, i32, i32
  }
}

module attributes {stable_mosaic.version = 11 : i64} {
  func.func @_conv3x3_kernel(%arg0: i32, %arg1: i32, %arg2: i32, %arg3: memref<1x3x288x64xbf16, #tpu.memory_space<vmem>>, %arg4: memref<3x3x64x64xbf16, #tpu.memory_space<vmem>>, %arg5: memref<1x64xf32, #tpu.memory_space<vmem>>, %arg6: memref<1x256x64xf32, #tpu.memory_space<vmem>>) attributes {dimension_semantics = [#tpu.dimension_semantics<parallel>, #tpu.dimension_semantics<parallel>, #tpu.dimension_semantics<arbitrary>], iteration_bounds = array<i64: 2, 1, 1>, scalar_prefetch = 0 : i64, scratch_operands = 0 : i64, tpu.core_type = #tpu.core_type<tc>, window_params = [{transform_indices = @transform_0, window_bounds = array<i64: 1, 3, 288, 64>}, {transform_indices = @transform_1, window_bounds = array<i64: 3, 3, 64, 64>}, {transform_indices = @transform_2, window_bounds = array<i64: 1, 64>}, {transform_indices = @transform_3, window_bounds = array<i64: 1, 256, 64>}]} {
    %c0_i32 = arith.constant 0 : i32
    %0 = arith.cmpi eq, %arg2, %c0_i32 : i32
    %1 = arith.extui %0 : i1 to i32
    %c0_i32_0 = arith.constant 0 : i32
    %2 = arith.cmpi ne, %1, %c0_i32_0 : i32
    scf.if %2 {
      %cst_85 = arith.constant 0.000000e+00 : f32
      %67 = vector.broadcast %cst_85 : f32 to vector<1x256x64xf32>
      %c0_86 = arith.constant 0 : index
      %c0_87 = arith.constant 0 : index
      %c0_88 = arith.constant 0 : index
      %68 = vector.load %arg6[%c0_86, %c0_87, %c0_88] : memref<1x256x64xf32, #tpu.memory_space<vmem>>, vector<1x256x64xf32>
      tpu.vector_store %arg6[%c0_86, %c0_87, %c0_88], %67 {strides = array<i32>} : memref<1x256x64xf32, #tpu.memory_space<vmem>>, vector<1x256x64xf32>,
    } else {
    }
    %cst = arith.constant 0.000000e+00 : f32
    %3 = vector.broadcast %cst : f32 to vector<256x64xf32>
    %c0 = arith.constant 0 : index
    %c0_1 = arith.constant 0 : index
    %c0_2 = arith.constant 0 : index
    %c0_3 = arith.constant 0 : index
    %4 = vector.load %arg3[%c0, %c0_1, %c0_2, %c0_3] : memref<1x3x288x64xbf16, #tpu.memory_space<vmem>>, vector<1x1x256x64xbf16>
    %5 = vector.shape_cast %4 : vector<1x1x256x64xbf16> to vector<256x64xbf16>
    %c0_4 = arith.constant 0 : index
    %c0_5 = arith.constant 0 : index
    %c0_6 = arith.constant 0 : index
    %c0_7 = arith.constant 0 : index
    %6 = vector.load %arg4[%c0_4, %c0_5, %c0_6, %c0_7] : memref<3x3x64x64xbf16, #tpu.memory_space<vmem>>, vector<1x1x64x64xbf16>
    %7 = vector.shape_cast %6 : vector<1x1x64x64xbf16> to vector<64x64xbf16>
    %cst_8 = arith.constant dense<0.000000e+00> : vector<256x64xf32>
    %8 = tpu.matmul %5, %7, %cst_8 {dimension_numbers = #tpu.dot_dimension_numbers<[1], [0], [0], [1], [0, 0, 1, 1], [], []>} : vector<256x64xbf16>, vector<64x64xbf16>, vector<256x64xf32> -> vector<256x64xf32>
    %9 = arith.addf %3, %8 : vector<256x64xf32>
    %c0_9 = arith.constant 0 : index
    %c1 = arith.constant 1 : index
    %c0_10 = arith.constant 0 : index
    %c0_11 = arith.constant 0 : index
    %10 = vector.load %arg3[%c0_9, %c1, %c0_10, %c0_11] : memref<1x3x288x64xbf16, #tpu.memory_space<vmem>>, vector<1x1x256x64xbf16>
    %11 = vector.shape_cast %10 : vector<1x1x256x64xbf16> to vector<256x64xbf16>
    %c0_12 = arith.constant 0 : index
    %c1_13 = arith.constant 1 : index
    %c0_14 = arith.constant 0 : index
    %c0_15 = arith.constant 0 : index
    %12 = vector.load %arg4[%c0_12, %c1_13, %c0_14, %c0_15] : memref<3x3x64x64xbf16, #tpu.memory_space<vmem>>, vector<1x1x64x64xbf16>
    %13 = vector.shape_cast %12 : vector<1x1x64x64xbf16> to vector<64x64xbf16>
    %cst_16 = arith.constant dense<0.000000e+00> : vector<256x64xf32>
    %14 = tpu.matmul %11, %13, %cst_16 {dimension_numbers = #tpu.dot_dimension_numbers<[1], [0], [0], [1], [0, 0, 1, 1], [], []>} : vector<256x64xbf16>, vector<64x64xbf16>, vector<256x64xf32> -> vector<256x64xf32>
    %15 = arith.addf %9, %14 : vector<256x64xf32>
    %c0_17 = arith.constant 0 : index
    %c2 = arith.constant 2 : index
    %c0_18 = arith.constant 0 : index
    %c0_19 = arith.constant 0 : index
    %16 = vector.load %arg3[%c0_17, %c2, %c0_18, %c0_19] : memref<1x3x288x64xbf16, #tpu.memory_space<vmem>>, vector<1x1x256x64xbf16>
    %17 = vector.shape_cast %16 : vector<1x1x256x64xbf16> to vector<256x64xbf16>
    %c0_20 = arith.constant 0 : index
    %c2_21 = arith.constant 2 : index
    %c0_22 = arith.constant 0 : index
    %c0_23 = arith.constant 0 : index
    %18 = vector.load %arg4[%c0_20, %c2_21, %c0_22, %c0_23] : memref<3x3x64x64xbf16, #tpu.memory_space<vmem>>, vector<1x1x64x64xbf16>
    %19 = vector.shape_cast %18 : vector<1x1x64x64xbf16> to vector<64x64xbf16>
    %cst_24 = arith.constant dense<0.000000e+00> : vector<256x64xf32>
    %20 = tpu.matmul %17, %19, %cst_24 {dimension_numbers = #tpu.dot_dimension_numbers<[1], [0], [0], [1], [0, 0, 1, 1], [], []>} : vector<256x64xbf16>, vector<64x64xbf16>, vector<256x64xf32> -> vector<256x64xf32>
    %21 = arith.addf %15, %20 : vector<256x64xf32>
    %c0_25 = arith.constant 0 : index
    %c0_26 = arith.constant 0 : index
    %c16 = arith.constant 16 : index
    %c0_27 = arith.constant 0 : index
    %22 = vector.load %arg3[%c0_25, %c0_26, %c16, %c0_27] : memref<1x3x288x64xbf16, #tpu.memory_space<vmem>>, vector<1x1x256x64xbf16>
    %23 = vector.shape_cast %22 : vector<1x1x256x64xbf16> to vector<256x64xbf16>
    %c1_28 = arith.constant 1 : index
    %c0_29 = arith.constant 0 : index
    %c0_30 = arith.constant 0 : index
    %c0_31 = arith.constant 0 : index
    %24 = vector.load %arg4[%c1_28, %c0_29, %c0_30, %c0_31] : memref<3x3x64x64xbf16, #tpu.memory_space<vmem>>, vector<1x1x64x64xbf16>
    %25 = vector.shape_cast %24 : vector<1x1x64x64xbf16> to vector<64x64xbf16>
    %cst_32 = arith.constant dense<0.000000e+00> : vector<256x64xf32>
    %26 = tpu.matmul %23, %25, %cst_32 {dimension_numbers = #tpu.dot_dimension_numbers<[1], [0], [0], [1], [0, 0, 1, 1], [], []>} : vector<256x64xbf16>, vector<64x64xbf16>, vector<256x64xf32> -> vector<256x64xf32>
    %27 = arith.addf %21, %26 : vector<256x64xf32>
    %c0_33 = arith.constant 0 : index
    %c1_34 = arith.constant 1 : index
    %c16_35 = arith.constant 16 : index
    %c0_36 = arith.constant 0 : index
    %28 = vector.load %arg3[%c0_33, %c1_34, %c16_35, %c0_36] : memref<1x3x288x64xbf16, #tpu.memory_space<vmem>>, vector<1x1x256x64xbf16>
    %29 = vector.shape_cast %28 : vector<1x1x256x64xbf16> to vector<256x64xbf16>
    %c1_37 = arith.constant 1 : index
    %c1_38 = arith.constant 1 : index
    %c0_39 = arith.constant 0 : index
    %c0_40 = arith.constant 0 : index
    %30 = vector.load %arg4[%c1_37, %c1_38, %c0_39, %c0_40] : memref<3x3x64x64xbf16, #tpu.memory_space<vmem>>, vector<1x1x64x64xbf16>
    %31 = vector.shape_cast %30 : vector<1x1x64x64xbf16> to vector<64x64xbf16>
    %cst_41 = arith.constant dense<0.000000e+00> : vector<256x64xf32>
    %32 = tpu.matmul %29, %31, %cst_41 {dimension_numbers = #tpu.dot_dimension_numbers<[1], [0], [0], [1], [0, 0, 1, 1], [], []>} : vector<256x64xbf16>, vector<64x64xbf16>, vector<256x64xf32> -> vector<256x64xf32>
    %33 = arith.addf %27, %32 : vector<256x64xf32>
    %c0_42 = arith.constant 0 : index
    %c2_43 = arith.constant 2 : index
    %c16_44 = arith.constant 16 : index
    %c0_45 = arith.constant 0 : index
    %34 = vector.load %arg3[%c0_42, %c2_43, %c16_44, %c0_45] : memref<1x3x288x64xbf16, #tpu.memory_space<vmem>>, vector<1x1x256x64xbf16>
    %35 = vector.shape_cast %34 : vector<1x1x256x64xbf16> to vector<256x64xbf16>
    %c1_46 = arith.constant 1 : index
    %c2_47 = arith.constant 2 : index
    %c0_48 = arith.constant 0 : index
    %c0_49 = arith.constant 0 : index
    %36 = vector.load %arg4[%c1_46, %c2_47, %c0_48, %c0_49] : memref<3x3x64x64xbf16, #tpu.memory_space<vmem>>, vector<1x1x64x64xbf16>
    %37 = vector.shape_cast %36 : vector<1x1x64x64xbf16> to vector<64x64xbf16>
    %cst_50 = arith.constant dense<0.000000e+00> : vector<256x64xf32>
    %38 = tpu.matmul %35, %37, %cst_50 {dimension_numbers = #tpu.dot_dimension_numbers<[1], [0], [0], [1], [0, 0, 1, 1], [], []>} : vector<256x64xbf16>, vector<64x64xbf16>, vector<256x64xf32> -> vector<256x64xf32>
    %39 = arith.addf %33, %38 : vector<256x64xf32>
    %c0_51 = arith.constant 0 : index
    %c0_52 = arith.constant 0 : index
    %c32 = arith.constant 32 : index
    %c0_53 = arith.constant 0 : index
    %40 = vector.load %arg3[%c0_51, %c0_52, %c32, %c0_53] : memref<1x3x288x64xbf16, #tpu.memory_space<vmem>>, vector<1x1x256x64xbf16>
    %41 = vector.shape_cast %40 : vector<1x1x256x64xbf16> to vector<256x64xbf16>
    %c2_54 = arith.constant 2 : index
    %c0_55 = arith.constant 0 : index
    %c0_56 = arith.constant 0 : index
    %c0_57 = arith.constant 0 : index
    %42 = vector.load %arg4[%c2_54, %c0_55, %c0_56, %c0_57] : memref<3x3x64x64xbf16, #tpu.memory_space<vmem>>, vector<1x1x64x64xbf16>
    %43 = vector.shape_cast %42 : vector<1x1x64x64xbf16> to vector<64x64xbf16>
    %cst_58 = arith.constant dense<0.000000e+00> : vector<256x64xf32>
    %44 = tpu.matmul %41, %43, %cst_58 {dimension_numbers = #tpu.dot_dimension_numbers<[1], [0], [0], [1], [0, 0, 1, 1], [], []>} : vector<256x64xbf16>, vector<64x64xbf16>, vector<256x64xf32> -> vector<256x64xf32>
    %45 = arith.addf %39, %44 : vector<256x64xf32>
    %c0_59 = arith.constant 0 : index
    %c1_60 = arith.constant 1 : index
    %c32_61 = arith.constant 32 : index
    %c0_62 = arith.constant 0 : index
    %46 = vector.load %arg3[%c0_59, %c1_60, %c32_61, %c0_62] : memref<1x3x288x64xbf16, #tpu.memory_space<vmem>>, vector<1x1x256x64xbf16>
    %47 = vector.shape_cast %46 : vector<1x1x256x64xbf16> to vector<256x64xbf16>
    %c2_63 = arith.constant 2 : index
    %c1_64 = arith.constant 1 : index
    %c0_65 = arith.constant 0 : index
    %c0_66 = arith.constant 0 : index
    %48 = vector.load %arg4[%c2_63, %c1_64, %c0_65, %c0_66] : memref<3x3x64x64xbf16, #tpu.memory_space<vmem>>, vector<1x1x64x64xbf16>
    %49 = vector.shape_cast %48 : vector<1x1x64x64xbf16> to vector<64x64xbf16>
    %cst_67 = arith.constant dense<0.000000e+00> : vector<256x64xf32>
    %50 = tpu.matmul %47, %49, %cst_67 {dimension_numbers = #tpu.dot_dimension_numbers<[1], [0], [0], [1], [0, 0, 1, 1], [], []>} : vector<256x64xbf16>, vector<64x64xbf16>, vector<256x64xf32> -> vector<256x64xf32>
    %51 = arith.addf %45, %50 : vector<256x64xf32>
    %c0_68 = arith.constant 0 : index
    %c2_69 = arith.constant 2 : index
    %c32_70 = arith.constant 32 : index
    %c0_71 = arith.constant 0 : index
    %52 = vector.load %arg3[%c0_68, %c2_69, %c32_70, %c0_71] : memref<1x3x288x64xbf16, #tpu.memory_space<vmem>>, vector<1x1x256x64xbf16>
    %53 = vector.shape_cast %52 : vector<1x1x256x64xbf16> to vector<256x64xbf16>
    %c2_72 = arith.constant 2 : index
    %c2_73 = arith.constant 2 : index
    %c0_74 = arith.constant 0 : index
    %c0_75 = arith.constant 0 : index
    %54 = vector.load %arg4[%c2_72, %c2_73, %c0_74, %c0_75] : memref<3x3x64x64xbf16, #tpu.memory_space<vmem>>, vector<1x1x64x64xbf16>
    %55 = vector.shape_cast %54 : vector<1x1x64x64xbf16> to vector<64x64xbf16>
    %cst_76 = arith.constant dense<0.000000e+00> : vector<256x64xf32>
    %56 = tpu.matmul %53, %55, %cst_76 {dimension_numbers = #tpu.dot_dimension_numbers<[1], [0], [0], [1], [0, 0, 1, 1], [], []>} : vector<256x64xbf16>, vector<64x64xbf16>, vector<256x64xf32> -> vector<256x64xf32>
    %57 = arith.addf %51, %56 : vector<256x64xf32>
    %c0_77 = arith.constant 0 : index
    %c0_78 = arith.constant 0 : index
    %c0_79 = arith.constant 0 : index
    %58 = vector.load %arg6[%c0_77, %c0_78, %c0_79] : memref<1x256x64xf32, #tpu.memory_space<vmem>>, vector<1x256x64xf32>
    %59 = vector.shape_cast %58 : vector<1x256x64xf32> to vector<256x64xf32>
    %60 = arith.addf %59, %57 : vector<256x64xf32>
    %c0_80 = arith.constant 0 : index
    %c0_81 = arith.constant 0 : index
    %c0_82 = arith.constant 0 : index
    %61 = vector.load %arg6[%c0_80, %c0_81, %c0_82] : memref<1x256x64xf32, #tpu.memory_space<vmem>>, vector<1x256x64xf32>
    %62 = vector.shape_cast %61 : vector<1x256x64xf32> to vector<256x64xf32>
    %63 = vector.shape_cast %60 : vector<256x64xf32> to vector<1x256x64xf32>
    tpu.vector_store %arg6[%c0_80, %c0_81, %c0_82], %63 {strides = array<i32>} : memref<1x256x64xf32, #tpu.memory_space<vmem>>, vector<1x256x64xf32>,
    %c0_i32_83 = arith.constant 0 : i32
    %64 = arith.cmpi eq, %arg2, %c0_i32_83 : i32
    %65 = arith.extui %64 : i1 to i32
    %c0_i32_84 = arith.constant 0 : i32
    %66 = arith.cmpi ne, %65, %c0_i32_84 : i32
    scf.if %66 {
      %c0_85 = arith.constant 0 : index
      %c0_86 = arith.constant 0 : index
      %c0_87 = arith.constant 0 : index
      %67 = vector.load %arg6[%c0_85, %c0_86, %c0_87] : memref<1x256x64xf32, #tpu.memory_space<vmem>>, vector<1x256x64xf32>
      %68 = vector.shape_cast %67 : vector<1x256x64xf32> to vector<256x64xf32>
      %c0_88 = arith.constant 0 : index
      %c0_89 = arith.constant 0 : index
      %69 = vector.load %arg5[%c0_88, %c0_89] : memref<1x64xf32, #tpu.memory_space<vmem>>, vector<1x64xf32>
      %70 = vector.broadcast %69 : vector<1x64xf32> to vector<256x64xf32>
      %71 = arith.addf %68, %70 : vector<256x64xf32>
      %cst_90 = arith.constant 0.000000e+00 : f32
      %72 = vector.broadcast %cst_90 : f32 to vector<256x64xf32>
      %73 = arith.maximumf %71, %72 : vector<256x64xf32>
      %c0_91 = arith.constant 0 : index
      %c0_92 = arith.constant 0 : index
      %c0_93 = arith.constant 0 : index
      %74 = vector.load %arg6[%c0_91, %c0_92, %c0_93] : memref<1x256x64xf32, #tpu.memory_space<vmem>>, vector<1x256x64xf32>
      %75 = vector.shape_cast %74 : vector<1x256x64xf32> to vector<256x64xf32>
      %76 = vector.shape_cast %73 : vector<256x64xf32> to vector<1x256x64xf32>
      tpu.vector_store %arg6[%c0_91, %c0_92, %c0_93], %76 {strides = array<i32>} : memref<1x256x64xf32, #tpu.memory_space<vmem>>, vector<1x256x64xf32>,
    } else {
    }
    return
  }
  func.func @transform_0(%arg0: i32, %arg1: i32, %arg2: i32) -> (i32, i32, i32, i32) {
    %c0_i32 = arith.constant 0 : i32
    %c0_i32_0 = arith.constant 0 : i32
    %c0_i32_1 = arith.constant 0 : i32
    return %arg0, %c0_i32, %c0_i32_0, %arg2 : i32, i32, i32, i32
  }
  func.func @transform_1(%arg0: i32, %arg1: i32, %arg2: i32) -> (i32, i32, i32, i32) {
    %c0_i32 = arith.constant 0 : i32
    %c0_i32_0 = arith.constant 0 : i32
    %c0_i32_1 = arith.constant 0 : i32
    return %c0_i32, %c0_i32_0, %arg2, %arg1 : i32, i32, i32, i32
  }
  func.func @transform_2(%arg0: i32, %arg1: i32, %arg2: i32) -> (i32, i32) {
    %c0_i32 = arith.constant 0 : i32
    %c0_i32_0 = arith.constant 0 : i32
    return %c0_i32, %arg1 : i32, i32
  }
  func.func @transform_3(%arg0: i32, %arg1: i32, %arg2: i32) -> (i32, i32, i32) {
    %c0_i32 = arith.constant 0 : i32
    %c0_i32_0 = arith.constant 0 : i32
    return %arg0, %c0_i32, %arg1 : i32, i32, i32
  }
}

</mosaic_0001>

<llo_original>
// kernel: mul.146
$region0: #{mul.146}
  #allocation0 [shape = 's32[1]{0}', space=sflag, size = 0x4, scoped, tag = 'scoped memory for mul.146']
  %s0 = inlined_call_operand.vmem [shape: f32[1,256], index: 0, kind: input, shape index: {}]
  %s1 = inlined_call_operand.vmem [shape: f32[1,256], index: 1, kind: input, shape index: {}]
  %s2 = inlined_call_operand.vmem [shape: f32[1,256], index: 2, kind: output, shape index: {}]
  %v3 = vld [vmem:[%s0] sm:$0x1]
  %v4 = vld [vmem:[%s1] sm:$0x1]
  %5 = xla_tuple %v3, %v4
  %6 = xla_tuple %5
  %v7 = vmul.f32 %v3, %v4
  %8 = xla_tuple %v7
  %9 = vst [vmem:[%s2] sm:$0x1] %v7
  %s10 = scalar_lea.vmem %s0, 1
  %v11 = vld [vmem:[%s10] sm:$0x1]
  %s12 = scalar_lea.vmem %s1, 1
  %v13 = vld [vmem:[%s12] sm:$0x1]
  %14 = xla_tuple %v11, %v13
  %15 = xla_tuple %14
  %v16 = vmul.f32 %v11, %v13
  %17 = xla_tuple %v16
  %s18 = scalar_lea.vmem %s2, 1
  %19 = vst [vmem:[%s18] sm:$0x1] %v16

// kernel: mul.147
$region0: #{mul.147}
  #allocation0 [shape = 's32[1]{0}', space=sflag, size = 0x4, scoped, tag = 'scoped memory for mul.147']
  %s0 = inlined_call_operand.vmem [shape: f32[1,512], index: 0, kind: input, shape index: {}]
  %s1 = inlined_call_operand.vmem [shape: f32[1,512], index: 1, kind: input, shape index: {}]
  %s2 = inlined_call_operand.vmem [shape: f32[1,512], index: 2, kind: output, shape index: {}]
  %v3 = vld [vmem:[%s0] sm:$0x1]
  %v4 = vld [vmem:[%s1] sm:$0x1]
  %5 = xla_tuple %v3, %v4
  %6 = xla_tuple %5
  %v7 = vmul.f32 %v3, %v4
  %8 = xla_tuple %v7
  %9 = vst [vmem:[%s2] sm:$0x1] %v7
  %s10 = scalar_lea.vmem %s0, 1
  %v11 = vld [vmem:[%s10] sm:$0x1]
  %s12 = scalar_lea.vmem %s1, 1
  %v13 = vld [vmem:[%s12] sm:$0x1]
  %14 = xla_tuple %v11, %v13
  %15 = xla_tuple %14
  %v16 = vmul.f32 %v11, %v13
  %17 = xla_tuple %v16
  %s18 = scalar_lea.vmem %s2, 1
  %19 = vst [vmem:[%s18] sm:$0x1] %v16
  %s20 = scalar_lea.vmem %s0, 2
  %v21 = vld [vmem:[%s20] sm:$0x1]
  %s22 = scalar_lea.vmem %s1, 2
  %v23 = vld [vmem:[%s22] sm:$0x1]
  %24 = xla_tuple %v21, %v23
  %25 = xla_tuple %24
  %v26 = vmul.f32 %v21, %v23
  %27 = xla_tuple %v26
  %s28 = scalar_lea.vmem %s2, 2
  %29 = vst [vmem:[%s28] sm:$0x1] %v26
  %s30 = scalar_lea.vmem %s0, 3
  %v31 = vld [vmem:[%s30] sm:$0x1]
  %s32 = scalar_lea.vmem %s1, 3
  %v33 = vld [vmem:[%s32] sm:$0x1]
  %34 = xla_tuple %v31, %v33
  %35 = xla_tuple %34
  %v36 = vmul.f32 %v31, %v33
  %37 = xla_tuple %v36
  %s38 = scalar_lea.vmem %s2, 3
  %39 = vst [vmem:[%s38] sm:$0x1] %v36

</llo_original>
